<compile_context>
chip_gen: v6e
topology: v6e:2x2x1
jax: 0.10.0
libtpu: 0.0.40
codegen_flags: <defaults>
</compile_context>

<pallas_src>
import functools
import math

import jax
import jax.numpy as jnp
from jax.experimental import pallas as pl
from jax.experimental.pallas import tpu as pltpu

_BN_EPS = 1e-5
_LANES = 128
_MM_DTYPE = jnp.bfloat16          # MXU operand / staged-activation dtype


def _round_up(x, m):
    return ((x + m - 1) // m) * m


def _vmem_limit_bytes():
    """Scoped-VMEM request sized to the actual device (v7x has only 64 MiB)."""
    try:
        cap = int(pltpu.get_tpu_info().vmem_capacity_bytes)
        return min(int(cap * 0.70), 100 * 1024 * 1024)
    except Exception:             # older jax / query unavailable -> default limit
        return None


def _pick_batch_tile(n, per_image_bytes, budget_bytes):
    """Largest batch tile that divides N and fits the per-step VMEM budget."""
    best = 1
    for d in range(1, n + 1):
        if n % d == 0 and d * per_image_bytes <= budget_bytes:
            best = d
    return best


# ----------------------------- Pallas kernels -------------------------------

def _make_conv1_kernel(stride, nb, ho, wo, cp, odd_h):
    """conv1 (3x3, stride s) + per-tile BN1 partial stats [+ avg-pool shortcut]."""
    m = nb * ho * wo

    def write_stats(st_ref, acc):
        # one-pass stats: per-channel sum and sum-of-squares of the f32 preact
        st_ref[:, 0:1, :] = jnp.sum(acc, axis=0, keepdims=True).reshape(1, 1, cp)
        st_ref[:, 1:2, :] = jnp.sum(acc * acc, axis=0, keepdims=True).reshape(1, 1, cp)

    if stride == 1:
        def kernel(x_ref, w_ref, y_ref, st_ref):
            acc = jnp.zeros((m, cp), jnp.float32)
            for dj in range(3):
                # hoist the (sublane-misaligned) column shift out of the row loop
                col = x_ref[:, :, dj:dj + wo, :]
                for di in range(3):
                    tap = col[:, di:di + ho].reshape(m, cp)
                    acc = acc + jnp.dot(tap, w_ref[3 * di + dj],
                                        preferred_element_type=jnp.float32)
            y_ref[...] = acc.reshape(nb, ho, wo, cp).astype(y_ref.dtype)
            write_stats(st_ref, acc)

        return kernel

    def kernel(x0_ref, x1_ref, x2_ref, x3_ref, w_ref, y_ref, st_ref, sc_ref):
        # x{p}_ref are row/col-parity planes of the zero-padded input
        # (p = 2*row_parity + col_parity), so every stride-2 tap is a
        # contiguous slice (no strided loads inside the kernel).
        planes = (x0_ref, x1_ref, x2_ref, x3_ref)
        acc = jnp.zeros((m, cp), jnp.float32)
        for dj in range(3):
            pc, oj = dj % 2, dj // 2
            cols = (planes[0 + pc][:, :, oj:oj + wo, :],   # row-parity 0
                    planes[2 + pc][:, :, oj:oj + wo, :])   # row-parity 1
            for di in range(3):
                pr, oi = di % 2, di // 2
                tap = cols[pr][:, oi:oi + ho].reshape(m, cp)
                acc = acc + jnp.dot(tap, w_ref[3 * di + dj],
                                    preferred_element_type=jnp.float32)
        y_ref[...] = acc.reshape(nb, ho, wo, cp).astype(y_ref.dtype)
        write_stats(st_ref, acc)

        # AvgPoolShortCut rebuilt from the already-resident planes (f32 math).
        if odd_h:     # F.avg_pool2d(x, 1, stride): strided subsample
            sc = planes[3][:, 0:ho, 0:wo, :].astype(jnp.float32)
        else:         # F.avg_pool2d(x, stride, stride): 2x2 mean
            sc = 0.25 * (planes[3][:, 0:ho, 0:wo, :].astype(jnp.float32)
                         + planes[2][:, 0:ho, 1:wo + 1, :].astype(jnp.float32)
                         + planes[1][:, 1:ho + 1, 0:wo, :].astype(jnp.float32)
                         + planes[0][:, 1:ho + 1, 1:wo + 1, :].astype(jnp.float32))
        sc_ref[...] = sc.astype(sc_ref.dtype)

    return kernel


def _make_conv2_kernel(nb, ho, wo, cp):
    """BN1(scale/shift) + ReLU -> conv2 (3x3, stride 1) + per-tile BN2 stats."""
    m = nb * ho * wo

    def kernel(y1_ref, s1_ref, t1_ref, w_ref, y2_ref, st_ref, p_ref):
        # folded train-mode BN1 (scale/shift precomputed from full-batch stats)
        a1 = jnp.maximum(
            y1_ref[...].reshape(m, cp).astype(jnp.float32) * s1_ref[...] + t1_ref[...],
            0.0)

        # Zero only the 1-element halo ring (interior fully overwritten below).
        # Re-zeroing every step keeps the grid axis "parallel"-safe on 2-TC chips.
        zrow = jnp.zeros((nb, 1, wo + 2, cp), p_ref.dtype)
        p_ref[:, 0:1, :, :] = zrow
        p_ref[:, ho + 1:ho + 2, :, :] = zrow
        zcol = jnp.zeros((nb, ho + 2, 1, cp), p_ref.dtype)
        p_ref[:, :, 0:1, :] = zcol
        p_ref[:, :, wo + 1:wo + 2, :] = zcol
        p_ref[:, 1:ho + 1, 1:wo + 1, :] = (
            a1.reshape(nb, ho, wo, cp).astype(p_ref.dtype))

        acc = jnp.zeros((m, cp), jnp.float32)
        for dj in range(3):
            col = p_ref[:, :, dj:dj + wo, :]
            for di in range(3):
                tap = col[:, di:di + ho].reshape(m, cp)
                acc = acc + jnp.dot(tap, w_ref[3 * di + dj],
                                    preferred_element_type=jnp.float32)
        y2_ref[...] = acc.reshape(nb, ho, wo, cp).astype(y2_ref.dtype)
        st_ref[:, 0:1, :] = jnp.sum(acc, axis=0, keepdims=True).reshape(1, 1, cp)
        st_ref[:, 1:2, :] = jnp.sum(acc * acc, axis=0, keepdims=True).reshape(1, 1, cp)

    return kernel


def _make_epilogue_kernel(nb, ho, wo, cp):
    """BN2(scale/shift) + shortcut add + ReLU (memory-bound, lane-dense)."""
    m = nb * ho * wo

    def kernel(y2_ref, s2_ref, t2_ref, sc_ref, o_ref):
        y = y2_ref[...].reshape(m, cp).astype(jnp.float32) * s2_ref[...] + t2_ref[...]
        sc = sc_ref[...].reshape(m, cp).astype(jnp.float32)
        o_ref[...] = jnp.maximum(y + sc, 0.0).reshape(nb, ho, wo, cp)

    return kernel


# ------------------------------ JAX wrapper ----------------------------------

@functools.partial(jax.jit, static_argnames=("stride",))
def basic_block_forward(x_nchw, params, *, stride):
    """Pallas-backed BasicBlock.forward (train-mode BN). x_nchw: (N,Cin,H,W) f32."""
    w1, g1, b1 = params["w1"], params["g1"], params["b1"]
    w2, g2, b2 = params["w2"], params["g2"], params["b2"]
    n, cin, h, w = x_nchw.shape
    cout = w1.shape[0]
    assert stride in (1, 2), "BasicBlock only uses stride 1 or 2"
    assert cin <= cout

    ho = (h - 1) // stride + 1
    wo = (w - 1) // stride + 1
    cp = _round_up(cout, _LANES)          # lane-dense channel width
    m_total = n * ho * wo                 # BN sample count (full batch)

    # ---- layout plumbing (once, in the wrapper; single cast to bf16) ----
    x = jnp.transpose(x_nchw, (0, 2, 3, 1))                       # NHWC
    xp = jnp.pad(x, ((0, 0), (1, 1), (1, 1), (0, cp - cin))).astype(_MM_DTYPE)

    if stride == 1:
        conv1_in = [xp]                                           # (N, H+2, W+2, cp)
        # identity / avg_pool(1,1) shortcut == channel-zero-padded input
        sc_in = jnp.pad(x, ((0, 0), (0, 0), (0, 0), (0, cp - cin))).astype(_MM_DTYPE)
    else:
        conv1_in = []
        for pr in (0, 1):                                         # parity planes
            for pc in (0, 1):
                pln = xp[:, pr::2, pc::2, :]
                conv1_in.append(jnp.pad(
                    pln, ((0, 0), (0, ho + 1 - pln.shape[1]),
                          (0, wo + 1 - pln.shape[2]), (0, 0))))
        sc_in = None                                              # built by pass A

    # 3x3 weights as 9 per-tap (cp, cp) matrices (zero rows/cols are MXU-free).
    w1t = jnp.pad(jnp.transpose(w1, (2, 3, 1, 0)).reshape(9, cin, cout),
                  ((0, 0), (0, cp - cin), (0, cp - cout))).astype(_MM_DTYPE)
    w2t = jnp.pad(jnp.transpose(w2, (2, 3, 1, 0)).reshape(9, cout, cout),
                  ((0, 0), (0, cp - cout), (0, cp - cout))).astype(_MM_DTYPE)

    def pad_vec(v):   # gamma/beta zero-padded -> padded lanes get scale=shift=0
        return jnp.pad(v.reshape(1, -1).astype(jnp.float32), ((0, 0), (0, cp - cout)))

    g1p, b1p, g2p, b2p = pad_vec(g1), pad_vec(b1), pad_vec(g2), pad_vec(b2)

    # ---- batch ("M") grid: nb images (nb*ho*wo rows) per step, VMEM-budgeted ----
    vmem_limit = _vmem_limit_bytes()
    budget = (vmem_limit if vmem_limit is not None else (32 << 20)) // 2
    per_image = 40 * ho * wo * cp          # rough live bytes / image (bf16 blocks
                                           # double-buffered + f32 accum/temps)
    nb = _pick_batch_tile(n, per_image, budget)
    n_tiles = n // nb

    cparams = pltpu.CompilerParams(dimension_semantics=("parallel",),
                                   vmem_limit_bytes=vmem_limit)

    act_spec = pl.BlockSpec((nb, ho, wo, cp), lambda b: (b, 0, 0, 0))
    st_spec = pl.BlockSpec((1, 2, cp), lambda b: (b, 0, 0))
    w_spec = pl.BlockSpec((9, cp, cp), lambda b: (0, 0, 0))        # VMEM-resident
    vec_spec = pl.BlockSpec((1, cp), lambda b: (0, 0))             # VMEM-resident

    def fold_bn(partials, g, b):
        # two-phase BN: combine per-tile (sum, sumsq) partials into scale/shift
        s = jnp.sum(partials[:, 0, :], axis=0)
        q = jnp.sum(partials[:, 1, :], axis=0)
        mean = s / m_total
        var = jnp.maximum(q / m_total - mean * mean, 0.0)
        scale = g[0] * jax.lax.rsqrt(var + _BN_EPS)
        shift = b[0] - mean * scale
        return scale.reshape(1, cp), shift.reshape(1, cp)

    # ---- pass A: conv1 (+ avg-pool shortcut) + BN1 partial stats ----
    if stride == 1:
        in_specs_a = [pl.BlockSpec((nb, h + 2, w + 2, cp), lambda b: (b, 0, 0, 0)),
                      w_spec]
        out_shape_a = (jax.ShapeDtypeStruct((n, ho, wo, cp), _MM_DTYPE),
                       jax.ShapeDtypeStruct((n_tiles, 2, cp), jnp.float32))
        out_specs_a = (act_spec, st_spec)
    else:
        plane_spec = pl.BlockSpec((nb, ho + 1, wo + 1, cp), lambda b: (b, 0, 0, 0))
        in_specs_a = [plane_spec] * 4 + [w_spec]
        out_shape_a = (jax.ShapeDtypeStruct((n, ho, wo, cp), _MM_DTYPE),
                       jax.ShapeDtypeStruct((n_tiles, 2, cp), jnp.float32),
                       jax.ShapeDtypeStruct((n, ho, wo, cp), _MM_DTYPE))
        out_specs_a = (act_spec, st_spec, act_spec)

    outs_a = pl.pallas_call(
        _make_conv1_kernel(stride, nb, ho, wo, cp, odd_h=(h % 2 != 0)),
        grid=(n_tiles,), in_specs=in_specs_a, out_specs=out_specs_a,
        out_shape=out_shape_a, compiler_params=cparams,
    )(*conv1_in, w1t)
    if stride == 1:
        y1, st1 = outs_a
    else:
        y1, st1, sc_in = outs_a

    scale1, shift1 = fold_bn(st1, g1p, b1p)

    # ---- pass B: BN1 + ReLU -> conv2 + BN2 partial stats ----
    y2, st2 = pl.pallas_call(
        _make_conv2_kernel(nb, ho, wo, cp),
        grid=(n_tiles,),
        in_specs=[act_spec, vec_spec, vec_spec, w_spec],
        out_specs=(act_spec, st_spec),
        out_shape=(jax.ShapeDtypeStruct((n, ho, wo, cp), _MM_DTYPE),
                   jax.ShapeDtypeStruct((n_tiles, 2, cp), jnp.float32)),
        scratch_shapes=[pltpu.VMEM((nb, ho + 2, wo + 2, cp), _MM_DTYPE)],
        compiler_params=cparams,
    )(y1, scale1, shift1, w2t)

    scale2, shift2 = fold_bn(st2, g2p, b2p)

    # ---- pass C: BN2 + shortcut add + ReLU ----
    out = pl.pallas_call(
        _make_epilogue_kernel(nb, ho, wo, cp),
        grid=(n_tiles,),
        in_specs=[act_spec, vec_spec, vec_spec, act_spec],
        out_specs=pl.BlockSpec((nb, ho, wo, cp), lambda b: (b, 0, 0, 0)),
        out_shape=jax.ShapeDtypeStruct((n, ho, wo, cp), jnp.float32),
        compiler_params=cparams,
    )(y2, scale2, shift2, sc_in)

    # TODO(synk): v5e-specific tap packing into the MXU K dim
    # (K = round_up(9*cin, 128)) would cut push cycles further when cin << 128.
    # TODO(synk): if a single image ever exceeds the VMEM budget, add a spatial
    # row grid with +/-1-row halos on top of the batch grid.
    return jnp.transpose(out[:, :, :, :cout], (0, 3, 1, 2))


# --------------------------- pure-JAX reference ------------------------------

def _ref_bn(y, g, b):
    mean = y.mean(axis=(0, 2, 3), keepdims=True)
    var = jnp.square(y - mean).mean(axis=(0, 2, 3), keepdims=True)
    return ((y - mean) * jax.lax.rsqrt(var + _BN_EPS)
            * g.reshape(1, -1, 1, 1) + b.reshape(1, -1, 1, 1))


def ref_forward(x_nchw, params, *, stride):
    w1, g1, b1 = params["w1"], params["g1"], params["b1"]
    w2, g2, b2 = params["w2"], params["g2"], params["b2"]
    n, cin, h, w = x_nchw.shape
    cout = w1.shape[0]
    dn = ("NCHW", "OIHW", "NCHW")
    y = jax.lax.conv_general_dilated(x_nchw, w1, (stride, stride),
                                     ((1, 1), (1, 1)), dimension_numbers=dn)
    y = jnp.maximum(_ref_bn(y, g1, b1), 0.0)
    z = jax.lax.conv_general_dilated(y, w2, (1, 1),
                                     ((1, 1), (1, 1)), dimension_numbers=dn)
    z = _ref_bn(z, g2, b2)
    if stride != 1 or cin != cout:
        if h % 2 != 0:
            s = x_nchw[:, :, ::stride, ::stride]
        else:
            hs, ws = (h // stride) * stride, (w // stride) * stride
            s = x_nchw[:, :, :hs, :ws].reshape(
                n, cin, h // stride, stride, w // stride, stride).mean(axis=(3, 5))
        s = jnp.pad(s, ((0, 0), (0, cout - cin), (0, 0), (0, 0)))
    else:
        s = x_nchw
    return jnp.maximum(z + s, 0.0)


# ---------------------------------- main -------------------------------------

if __name__ == "__main__":
    key = jax.random.PRNGKey(0)
    k_x, k_w1, k_w2, k_g1, k_b1, k_g2, k_b2 = jax.random.split(key, 7)

    N, IN_PLANES, H, W = 2, 4, 16, 16
    PLANES = 8

    x = jax.random.normal(k_x, (N, IN_PLANES, H, W), jnp.float32)

    fan1 = IN_PLANES * 9
    fan2 = PLANES * 9
    params = {
        "w1": jax.random.normal(k_w1, (PLANES, IN_PLANES, 3, 3), jnp.float32)
              * (1.0 / math.sqrt(fan1)),
        "g1": 1.0 + 0.1 * jax.random.normal(k_g1, (PLANES,), jnp.float32),
        "b1": 0.1 * jax.random.normal(k_b1, (PLANES,), jnp.float32),
        "w2": jax.random.normal(k_w2, (PLANES, PLANES, 3, 3), jnp.float32)
              * (1.0 / math.sqrt(fan2)),
        "g2": 1.0 + 0.1 * jax.random.normal(k_g2, (PLANES,), jnp.float32),
        "b2": 0.1 * jax.random.normal(k_b2, (PLANES,), jnp.float32),
    }

    # stride=2 exercises the AvgPoolShortCut path; stride=1 the identity path.
    for stride in (2, 1):
        out = jax.block_until_ready(basic_block_forward(x, params, stride=stride))
        ref = jax.block_until_ready(ref_forward(x, params, stride=stride))
        assert out.shape == (N, PLANES, H // stride, W // stride), out.shape
        # Tolerance retuned for bf16 MXU operands vs. the pure-f32 XLA reference.
        if not jnp.allclose(out, ref, atol=1e-1, rtol=1e-1):
            max_err = float(jnp.max(jnp.abs(out - ref)))
            raise AssertionError(
                f"stride={stride}: mismatch vs reference, max_err={max_err}")

    print("KERNEL_OK")
</pallas_src>

<mosaic_0001>
module attributes {stable_mosaic.version = 11 : i64} {
  func.func @kernel(%arg0: i32, %arg1: memref<2x9x9x128xbf16, #tpu.memory_space<vmem>>, %arg2: memref<2x9x9x128xbf16, #tpu.memory_space<vmem>>, %arg3: memref<2x9x9x128xbf16, #tpu.memory_space<vmem>>, %arg4: memref<2x9x9x128xbf16, #tpu.memory_space<vmem>>, %arg5: memref<9x128x128xbf16, #tpu.memory_space<vmem>>, %arg6: memref<2x8x8x128xbf16, #tpu.memory_space<vmem>>, %arg7: memref<1x2x128xf32, #tpu.memory_space<vmem>>, %arg8: memref<2x8x8x128xbf16, #tpu.memory_space<vmem>>) attributes {dimension_semantics = [#tpu.dimension_semantics<parallel>], iteration_bounds = array<i64: 1>, scalar_prefetch = 0 : i64, scratch_operands = 0 : i64, tpu.core_type = #tpu.core_type<tc>, window_params = [{transform_indices = @transform_0, window_bounds = array<i64: 2, 9, 9, 128>}, {transform_indices = @transform_1, window_bounds = array<i64: 2, 9, 9, 128>}, {transform_indices = @transform_2, window_bounds = array<i64: 2, 9, 9, 128>}, {transform_indices = @transform_3, window_bounds = array<i64: 2, 9, 9, 128>}, {pipeline_mode = #tpu.pipeline_mode<synchronous>, transform_indices = @transform_4, window_bounds = array<i64: 9, 128, 128>}, {transform_indices = @transform_5, window_bounds = array<i64: 2, 8, 8, 128>}, {transform_indices = @transform_6, window_bounds = array<i64: 1, 2, 128>}, {transform_indices = @transform_7, window_bounds = array<i64: 2, 8, 8, 128>}]} {
    %cst = arith.constant 0.000000e+00 : f32
    %0 = vector.broadcast %cst : f32 to vector<128x128xf32>
    %c0 = arith.constant 0 : index
    %c0_0 = arith.constant 0 : index
    %c0_1 = arith.constant 0 : index
    %c0_2 = arith.constant 0 : index
    %1 = vector.load %arg1[%c0, %c0_0, %c0_1, %c0_2] : memref<2x9x9x128xbf16, #tpu.memory_space<vmem>>, vector<2x9x8x128xbf16>
    %c0_3 = arith.constant 0 : index
    %c0_4 = arith.constant 0 : index
    %c0_5 = arith.constant 0 : index
    %c0_6 = arith.constant 0 : index
    %2 = vector.load %arg3[%c0_3, %c0_4, %c0_5, %c0_6] : memref<2x9x9x128xbf16, #tpu.memory_space<vmem>>, vector<2x9x8x128xbf16>
    %3 = vector.extract_strided_slice %1 {offsets = [0, 0, 0, 0], sizes = [2, 8, 8, 128], strides = [1, 1, 1, 1]} : vector<2x9x8x128xbf16> to vector<2x8x8x128xbf16>
    %4 = vector.shape_cast %3 : vector<2x8x8x128xbf16> to vector<128x128xbf16>
    %c0_7 = arith.constant 0 : index
    %c0_8 = arith.constant 0 : index
    %c0_9 = arith.constant 0 : index
    %5 = vector.load %arg5[%c0_7, %c0_8, %c0_9] : memref<9x128x128xbf16, #tpu.memory_space<vmem>>, vector<1x128x128xbf16>
    %6 = vector.shape_cast %5 : vector<1x128x128xbf16> to vector<128x128xbf16>
    %cst_10 = arith.constant dense<0.000000e+00> : vector<128x128xf32>
    %7 = tpu.matmul %4, %6, %cst_10 {dimension_numbers = #tpu.dot_dimension_numbers<[1], [0], [0], [1], [0, 0, 1, 1], [], []>} : vector<128x128xbf16>, vector<128x128xbf16>, vector<128x128xf32> -> vector<128x128xf32>
    %8 = arith.addf %0, %7 : vector<128x128xf32>
    %9 = vector.extract_strided_slice %2 {offsets = [0, 0, 0, 0], sizes = [2, 8, 8, 128], strides = [1, 1, 1, 1]} : vector<2x9x8x128xbf16> to vector<2x8x8x128xbf16>
    %10 = vector.shape_cast %9 : vector<2x8x8x128xbf16> to vector<128x128xbf16>
    %c3 = arith.constant 3 : index
    %c0_11 = arith.constant 0 : index
    %c0_12 = arith.constant 0 : index
    %11 = vector.load %arg5[%c3, %c0_11, %c0_12] : memref<9x128x128xbf16, #tpu.memory_space<vmem>>, vector<1x128x128xbf16>
    %12 = vector.shape_cast %11 : vector<1x128x128xbf16> to vector<128x128xbf16>
    %cst_13 = arith.constant dense<0.000000e+00> : vector<128x128xf32>
    %13 = tpu.matmul %10, %12, %cst_13 {dimension_numbers = #tpu.dot_dimension_numbers<[1], [0], [0], [1], [0, 0, 1, 1], [], []>} : vector<128x128xbf16>, vector<128x128xbf16>, vector<128x128xf32> -> vector<128x128xf32>
    %14 = arith.addf %8, %13 : vector<128x128xf32>
    %15 = vector.extract_strided_slice %1 {offsets = [0, 1, 0, 0], sizes = [2, 8, 8, 128], strides = [1, 1, 1, 1]} : vector<2x9x8x128xbf16> to vector<2x8x8x128xbf16>
    %16 = vector.shape_cast %15 : vector<2x8x8x128xbf16> to vector<128x128xbf16>
    %c6 = arith.constant 6 : index
    %c0_14 = arith.constant 0 : index
    %c0_15 = arith.constant 0 : index
    %17 = vector.load %arg5[%c6, %c0_14, %c0_15] : memref<9x128x128xbf16, #tpu.memory_space<vmem>>, vector<1x128x128xbf16>
    %18 = vector.shape_cast %17 : vector<1x128x128xbf16> to vector<128x128xbf16>
    %cst_16 = arith.constant dense<0.000000e+00> : vector<128x128xf32>
    %19 = tpu.matmul %16, %18, %cst_16 {dimension_numbers = #tpu.dot_dimension_numbers<[1], [0], [0], [1], [0, 0, 1, 1], [], []>} : vector<128x128xbf16>, vector<128x128xbf16>, vector<128x128xf32> -> vector<128x128xf32>
    %20 = arith.addf %14, %19 : vector<128x128xf32>
    %c0_17 = arith.constant 0 : index
    %c0_18 = arith.constant 0 : index
    %c0_19 = arith.constant 0 : index
    %c0_20 = arith.constant 0 : index
    %21 = vector.load %arg2[%c0_17, %c0_18, %c0_19, %c0_20] : memref<2x9x9x128xbf16, #tpu.memory_space<vmem>>, vector<2x9x8x128xbf16>
    %c0_21 = arith.constant 0 : index
    %c0_22 = arith.constant 0 : index
    %c0_23 = arith.constant 0 : index
    %c0_24 = arith.constant 0 : index
    %22 = vector.load %arg4[%c0_21, %c0_22, %c0_23, %c0_24] : memref<2x9x9x128xbf16, #tpu.memory_space<vmem>>, vector<2x9x8x128xbf16>
    %23 = vector.extract_strided_slice %21 {offsets = [0, 0, 0, 0], sizes = [2, 8, 8, 128], strides = [1, 1, 1, 1]} : vector<2x9x8x128xbf16> to vector<2x8x8x128xbf16>
    %24 = vector.shape_cast %23 : vector<2x8x8x128xbf16> to vector<128x128xbf16>
    %c1 = arith.constant 1 : index
    %c0_25 = arith.constant 0 : index
    %c0_26 = arith.constant 0 : index
    %25 = vector.load %arg5[%c1, %c0_25, %c0_26] : memref<9x128x128xbf16, #tpu.memory_space<vmem>>, vector<1x128x128xbf16>
    %26 = vector.shape_cast %25 : vector<1x128x128xbf16> to vector<128x128xbf16>
    %cst_27 = arith.constant dense<0.000000e+00> : vector<128x128xf32>
    %27 = tpu.matmul %24, %26, %cst_27 {dimension_numbers = #tpu.dot_dimension_numbers<[1], [0], [0], [1], [0, 0, 1, 1], [], []>} : vector<128x128xbf16>, vector<128x128xbf16>, vector<128x128xf32> -> vector<128x128xf32>
    %28 = arith.addf %20, %27 : vector<128x128xf32>
    %29 = vector.extract_strided_slice %22 {offsets = [0, 0, 0, 0], sizes = [2, 8, 8, 128], strides = [1, 1, 1, 1]} : vector<2x9x8x128xbf16> to vector<2x8x8x128xbf16>
    %30 = vector.shape_cast %29 : vector<2x8x8x128xbf16> to vector<128x128xbf16>
    %c4 = arith.constant 4 : index
    %c0_28 = arith.constant 0 : index
    %c0_29 = arith.constant 0 : index
    %31 = vector.load %arg5[%c4, %c0_28, %c0_29] : memref<9x128x128xbf16, #tpu.memory_space<vmem>>, vector<1x128x128xbf16>
    %32 = vector.shape_cast %31 : vector<1x128x128xbf16> to vector<128x128xbf16>
    %cst_30 = arith.constant dense<0.000000e+00> : vector<128x128xf32>
    %33 = tpu.matmul %30, %32, %cst_30 {dimension_numbers = #tpu.dot_dimension_numbers<[1], [0], [0], [1], [0, 0, 1, 1], [], []>} : vector<128x128xbf16>, vector<128x128xbf16>, vector<128x128xf32> -> vector<128x128xf32>
    %34 = arith.addf %28, %33 : vector<128x128xf32>
    %35 = vector.extract_strided_slice %21 {offsets = [0, 1, 0, 0], sizes = [2, 8, 8, 128], strides = [1, 1, 1, 1]} : vector<2x9x8x128xbf16> to vector<2x8x8x128xbf16>
    %36 = vector.shape_cast %35 : vector<2x8x8x128xbf16> to vector<128x128xbf16>
    %c7 = arith.constant 7 : index
    %c0_31 = arith.constant 0 : index
    %c0_32 = arith.constant 0 : index
    %37 = vector.load %arg5[%c7, %c0_31, %c0_32] : memref<9x128x128xbf16, #tpu.memory_space<vmem>>, vector<1x128x128xbf16>
    %38 = vector.shape_cast %37 : vector<1x128x128xbf16> to vector<128x128xbf16>
    %cst_33 = arith.constant dense<0.000000e+00> : vector<128x128xf32>
    %39 = tpu.matmul %36, %38, %cst_33 {dimension_numbers = #tpu.dot_dimension_numbers<[1], [0], [0], [1], [0, 0, 1, 1], [], []>} : vector<128x128xbf16>, vector<128x128xbf16>, vector<128x128xf32> -> vector<128x128xf32>
    %40 = arith.addf %34, %39 : vector<128x128xf32>
    %c0_34 = arith.constant 0 : index
    %c0_35 = arith.constant 0 : index
    %c1_36 = arith.constant 1 : index
    %c0_37 = arith.constant 0 : index
    %41 = vector.load %arg1[%c0_34, %c0_35, %c1_36, %c0_37] : memref<2x9x9x128xbf16, #tpu.memory_space<vmem>>, vector<2x9x8x128xbf16>
    %c0_38 = arith.constant 0 : index
    %c0_39 = arith.constant 0 : index
    %c1_40 = arith.constant 1 : index
    %c0_41 = arith.constant 0 : index
    %42 = vector.load %arg3[%c0_38, %c0_39, %c1_40, %c0_41] : memref<2x9x9x128xbf16, #tpu.memory_space<vmem>>, vector<2x9x8x128xbf16>
    %43 = vector.extract_strided_slice %41 {offsets = [0, 0, 0, 0], sizes = [2, 8, 8, 128], strides = [1, 1, 1, 1]} : vector<2x9x8x128xbf16> to vector<2x8x8x128xbf16>
    %44 = vector.shape_cast %43 : vector<2x8x8x128xbf16> to vector<128x128xbf16>
    %c2 = arith.constant 2 : index
    %c0_42 = arith.constant 0 : index
    %c0_43 = arith.constant 0 : index
    %45 = vector.load %arg5[%c2, %c0_42, %c0_43] : memref<9x128x128xbf16, #tpu.memory_space<vmem>>, vector<1x128x128xbf16>
    %46 = vector.shape_cast %45 : vector<1x128x128xbf16> to vector<128x128xbf16>
    %cst_44 = arith.constant dense<0.000000e+00> : vector<128x128xf32>
    %47 = tpu.matmul %44, %46, %cst_44 {dimension_numbers = #tpu.dot_dimension_numbers<[1], [0], [0], [1], [0, 0, 1, 1], [], []>} : vector<128x128xbf16>, vector<128x128xbf16>, vector<128x128xf32> -> vector<128x128xf32>
    %48 = arith.addf %40, %47 : vector<128x128xf32>
    %49 = vector.extract_strided_slice %42 {offsets = [0, 0, 0, 0], sizes = [2, 8, 8, 128], strides = [1, 1, 1, 1]} : vector<2x9x8x128xbf16> to vector<2x8x8x128xbf16>
    %50 = vector.shape_cast %49 : vector<2x8x8x128xbf16> to vector<128x128xbf16>
    %c5 = arith.constant 5 : index
    %c0_45 = arith.constant 0 : index
    %c0_46 = arith.constant 0 : index
    %51 = vector.load %arg5[%c5, %c0_45, %c0_46] : memref<9x128x128xbf16, #tpu.memory_space<vmem>>, vector<1x128x128xbf16>
    %52 = vector.shape_cast %51 : vector<1x128x128xbf16> to vector<128x128xbf16>
    %cst_47 = arith.constant dense<0.000000e+00> : vector<128x128xf32>
    %53 = tpu.matmul %50, %52, %cst_47 {dimension_numbers = #tpu.dot_dimension_numbers<[1], [0], [0], [1], [0, 0, 1, 1], [], []>} : vector<128x128xbf16>, vector<128x128xbf16>, vector<128x128xf32> -> vector<128x128xf32>
    %54 = arith.addf %48, %53 : vector<128x128xf32>
    %55 = vector.extract_strided_slice %41 {offsets = [0, 1, 0, 0], sizes = [2, 8, 8, 128], strides = [1, 1, 1, 1]} : vector<2x9x8x128xbf16> to vector<2x8x8x128xbf16>
    %56 = vector.shape_cast %55 : vector<2x8x8x128xbf16> to vector<128x128xbf16>
    %c8 = arith.constant 8 : index
    %c0_48 = arith.constant 0 : index
    %c0_49 = arith.constant 0 : index
    %57 = vector.load %arg5[%c8, %c0_48, %c0_49] : memref<9x128x128xbf16, #tpu.memory_space<vmem>>, vector<1x128x128xbf16>
    %58 = vector.shape_cast %57 : vector<1x128x128xbf16> to vector<128x128xbf16>
    %cst_50 = arith.constant dense<0.000000e+00> : vector<128x128xf32>
    %59 = tpu.matmul %56, %58, %cst_50 {dimension_numbers = #tpu.dot_dimension_numbers<[1], [0], [0], [1], [0, 0, 1, 1], [], []>} : vector<128x128xbf16>, vector<128x128xbf16>, vector<128x128xf32> -> vector<128x128xf32>
    %60 = arith.addf %54, %59 : vector<128x128xf32>
    %61 = vector.shape_cast %60 : vector<128x128xf32> to vector<2x8x8x128xf32>
    %62 = arith.truncf %61 : vector<2x8x8x128xf32> to vector<2x8x8x128xbf16>
    %c0_51 = arith.constant 0 : index
    %c0_52 = arith.constant 0 : index
    %c0_53 = arith.constant 0 : index
    %c0_54 = arith.constant 0 : index
    %63 = vector.load %arg6[%c0_51, %c0_52, %c0_53, %c0_54] : memref<2x8x8x128xbf16, #tpu.memory_space<vmem>>, vector<2x8x8x128xbf16>
    tpu.vector_store %arg6[%c0_51, %c0_52, %c0_53, %c0_54], %62 {strides = array<i32>} : memref<2x8x8x128xbf16, #tpu.memory_space<vmem>>, vector<2x8x8x128xbf16>,
    %cst_55 = arith.constant dense<0.000000e+00> : vector<128xf32>
    %64 = vector.multi_reduction <add>, %60, %cst_55 [0] : vector<128x128xf32> to vector<128xf32>
    %65 = vector.shape_cast %64 : vector<128xf32> to vector<1x128xf32>
    %66 = vector.shape_cast %65 : vector<1x128xf32> to vector<1x1x128xf32>
    %c0_56 = arith.constant 0 : index
    %c0_57 = arith.constant 0 : index
    %c0_58 = arith.constant 0 : index
    %67 = vector.load %arg7[%c0_56, %c0_57, %c0_58] : memref<1x2x128xf32, #tpu.memory_space<vmem>>, vector<1x1x128xf32>
    tpu.vector_store %arg7[%c0_56, %c0_57, %c0_58], %66 {strides = array<i32>} : memref<1x2x128xf32, #tpu.memory_space<vmem>>, vector<1x1x128xf32>,
    %68 = arith.mulf %60, %60 : vector<128x128xf32>
    %cst_59 = arith.constant dense<0.000000e+00> : vector<128xf32>
    %69 = vector.multi_reduction <add>, %68, %cst_59 [0] : vector<128x128xf32> to vector<128xf32>
    %70 = vector.shape_cast %69 : vector<128xf32> to vector<1x128xf32>
    %71 = vector.shape_cast %70 : vector<1x128xf32> to vector<1x1x128xf32>
    %c0_60 = arith.constant 0 : index
    %c1_61 = arith.constant 1 : index
    %c0_62 = arith.constant 0 : index
    %72 = vector.load %arg7[%c0_60, %c1_61, %c0_62] : memref<1x2x128xf32, #tpu.memory_space<vmem>>, vector<1x1x128xf32>
    tpu.vector_store %arg7[%c0_60, %c1_61, %c0_62], %71 {strides = array<i32>} : memref<1x2x128xf32, #tpu.memory_space<vmem>>, vector<1x1x128xf32>,
    %c0_63 = arith.constant 0 : index
    %c0_64 = arith.constant 0 : index
    %c0_65 = arith.constant 0 : index
    %c0_66 = arith.constant 0 : index
    %73 = vector.load %arg4[%c0_63, %c0_64, %c0_65, %c0_66] : memref<2x9x9x128xbf16, #tpu.memory_space<vmem>>, vector<2x8x8x128xbf16>
    %74 = arith.extf %73 : vector<2x8x8x128xbf16> to vector<2x8x8x128xf32>
    %c0_67 = arith.constant 0 : index
    %c0_68 = arith.constant 0 : index
    %c1_69 = arith.constant 1 : index
    %c0_70 = arith.constant 0 : index
    %75 = vector.load %arg3[%c0_67, %c0_68, %c1_69, %c0_70] : memref<2x9x9x128xbf16, #tpu.memory_space<vmem>>, vector<2x8x8x128xbf16>
    %76 = arith.extf %75 : vector<2x8x8x128xbf16> to vector<2x8x8x128xf32>
    %77 = arith.addf %74, %76 : vector<2x8x8x128xf32>
    %c0_71 = arith.constant 0 : index
    %c1_72 = arith.constant 1 : index
    %c0_73 = arith.constant 0 : index
    %c0_74 = arith.constant 0 : index
    %78 = vector.load %arg2[%c0_71, %c1_72, %c0_73, %c0_74] : memref<2x9x9x128xbf16, #tpu.memory_space<vmem>>, vector<2x8x8x128xbf16>
    %79 = arith.extf %78 : vector<2x8x8x128xbf16> to vector<2x8x8x128xf32>
    %80 = arith.addf %77, %79 : vector<2x8x8x128xf32>
    %c0_75 = arith.constant 0 : index
    %c1_76 = arith.constant 1 : index
    %c1_77 = arith.constant 1 : index
    %c0_78 = arith.constant 0 : index
    %81 = vector.load %arg1[%c0_75, %c1_76, %c1_77, %c0_78] : memref<2x9x9x128xbf16, #tpu.memory_space<vmem>>, vector<2x8x8x128xbf16>
    %82 = arith.extf %81 : vector<2x8x8x128xbf16> to vector<2x8x8x128xf32>
    %83 = arith.addf %80, %82 : vector<2x8x8x128xf32>
    %cst_79 = arith.constant 2.500000e-01 : f32
    %84 = vector.broadcast %cst_79 : f32 to vector<2x8x8x128xf32>
    %85 = arith.mulf %84, %83 : vector<2x8x8x128xf32>
    %86 = arith.truncf %85 : vector<2x8x8x128xf32> to vector<2x8x8x128xbf16>
    %c0_80 = arith.constant 0 : index
    %c0_81 = arith.constant 0 : index
    %c0_82 = arith.constant 0 : index
    %c0_83 = arith.constant 0 : index
    %87 = vector.load %arg8[%c0_80, %c0_81, %c0_82, %c0_83] : memref<2x8x8x128xbf16, #tpu.memory_space<vmem>>, vector<2x8x8x128xbf16>
    tpu.vector_store %arg8[%c0_80, %c0_81, %c0_82, %c0_83], %86 {strides = array<i32>} : memref<2x8x8x128xbf16, #tpu.memory_space<vmem>>, vector<2x8x8x128xbf16>,
    return
  }
  func.func @transform_0(%arg0: i32) -> (i32, i32, i32, i32) {
    %c0_i32 = arith.constant 0 : i32
    %c0_i32_0 = arith.constant 0 : i32
    %c0_i32_1 = arith.constant 0 : i32
    %c0_i32_2 = arith.constant 0 : i32
    return %arg0, %c0_i32, %c0_i32_0, %c0_i32_1 : i32, i32, i32, i32
  }
  func.func @transform_1(%arg0: i32) -> (i32, i32, i32, i32) {
    %c0_i32 = arith.constant 0 : i32
    %c0_i32_0 = arith.constant 0 : i32
    %c0_i32_1 = arith.constant 0 : i32
    %c0_i32_2 = arith.constant 0 : i32
    return %arg0, %c0_i32, %c0_i32_0, %c0_i32_1 : i32, i32, i32, i32
  }
  func.func @transform_2(%arg0: i32) -> (i32, i32, i32, i32) {
    %c0_i32 = arith.constant 0 : i32
    %c0_i32_0 = arith.constant 0 : i32
    %c0_i32_1 = arith.constant 0 : i32
    %c0_i32_2 = arith.constant 0 : i32
    return %arg0, %c0_i32, %c0_i32_0, %c0_i32_1 : i32, i32, i32, i32
  }
  func.func @transform_3(%arg0: i32) -> (i32, i32, i32, i32) {
    %c0_i32 = arith.constant 0 : i32
    %c0_i32_0 = arith.constant 0 : i32
    %c0_i32_1 = arith.constant 0 : i32
    %c0_i32_2 = arith.constant 0 : i32
    return %arg0, %c0_i32, %c0_i32_0, %c0_i32_1 : i32, i32, i32, i32
  }
  func.func @transform_4(%arg0: i32) -> (i32, i32, i32) {
    %c0_i32 = arith.constant 0 : i32
    %c0_i32_0 = arith.constant 0 : i32
    %c0_i32_1 = arith.constant 0 : i32
    %c0_i32_2 = arith.constant 0 : i32
    return %c0_i32, %c0_i32_0, %c0_i32_1 : i32, i32, i32
  }
  func.func @transform_5(%arg0: i32) -> (i32, i32, i32, i32) {
    %c0_i32 = arith.constant 0 : i32
    %c0_i32_0 = arith.constant 0 : i32
    %c0_i32_1 = arith.constant 0 : i32
    %c0_i32_2 = arith.constant 0 : i32
    return %arg0, %c0_i32, %c0_i32_0, %c0_i32_1 : i32, i32, i32, i32
  }
  func.func @transform_6(%arg0: i32) -> (i32, i32, i32) {
    %c0_i32 = arith.constant 0 : i32
    %c0_i32_0 = arith.constant 0 : i32
    %c0_i32_1 = arith.constant 0 : i32
    return %arg0, %c0_i32, %c0_i32_0 : i32, i32, i32
  }
  func.func @transform_7(%arg0: i32) -> (i32, i32, i32, i32) {
    %c0_i32 = arith.constant 0 : i32
    %c0_i32_0 = arith.constant 0 : i32
    %c0_i32_1 = arith.constant 0 : i32
    %c0_i32_2 = arith.constant 0 : i32
    return %arg0, %c0_i32, %c0_i32_0, %c0_i32_1 : i32, i32, i32, i32
  }
}

module attributes {stable_mosaic.version = 11 : i64} {
  func.func @kernel(%arg0: i32, %arg1: memref<2x8x8x128xbf16, #tpu.memory_space<vmem>>, %arg2: memref<1x128xf32, #tpu.memory_space<vmem>>, %arg3: memref<1x128xf32, #tpu.memory_space<vmem>>, %arg4: memref<9x128x128xbf16, #tpu.memory_space<vmem>>, %arg5: memref<2x8x8x128xbf16, #tpu.memory_space<vmem>>, %arg6: memref<1x2x128xf32, #tpu.memory_space<vmem>>, %arg7: memref<2x10x10x128xbf16, #tpu.memory_space<vmem>>) attributes {dimension_semantics = [#tpu.dimension_semantics<parallel>], iteration_bounds = array<i64: 1>, scalar_prefetch = 0 : i64, scratch_operands = 1 : i64, tpu.core_type = #tpu.core_type<tc>, window_params = [{transform_indices = @transform_0, window_bounds = array<i64: 2, 8, 8, 128>}, {pipeline_mode = #tpu.pipeline_mode<synchronous>, transform_indices = @transform_1, window_bounds = array<i64: 1, 128>}, {pipeline_mode = #tpu.pipeline_mode<synchronous>, transform_indices = @transform_2, window_bounds = array<i64: 1, 128>}, {pipeline_mode = #tpu.pipeline_mode<synchronous>, transform_indices = @transform_3, window_bounds = array<i64: 9, 128, 128>}, {transform_indices = @transform_4, window_bounds = array<i64: 2, 8, 8, 128>}, {transform_indices = @transform_5, window_bounds = array<i64: 1, 2, 128>}]} {
    %c0 = arith.constant 0 : index
    %c0_0 = arith.constant 0 : index
    %c0_1 = arith.constant 0 : index
    %c0_2 = arith.constant 0 : index
    %0 = vector.load %arg1[%c0, %c0_0, %c0_1, %c0_2] : memref<2x8x8x128xbf16, #tpu.memory_space<vmem>>, vector<2x8x8x128xbf16>
    %1 = vector.shape_cast %0 : vector<2x8x8x128xbf16> to vector<128x128xbf16>
    %2 = arith.extf %1 : vector<128x128xbf16> to vector<128x128xf32>
    %c0_3 = arith.constant 0 : index
    %c0_4 = arith.constant 0 : index
    %3 = vector.load %arg2[%c0_3, %c0_4] : memref<1x128xf32, #tpu.memory_space<vmem>>, vector<1x128xf32>
    %4 = vector.broadcast %3 : vector<1x128xf32> to vector<128x128xf32>
    %5 = arith.mulf %2, %4 : vector<128x128xf32>
    %c0_5 = arith.constant 0 : index
    %c0_6 = arith.constant 0 : index
    %6 = vector.load %arg3[%c0_5, %c0_6] : memref<1x128xf32, #tpu.memory_space<vmem>>, vector<1x128xf32>
    %7 = vector.broadcast %6 : vector<1x128xf32> to vector<128x128xf32>
    %8 = arith.addf %5, %7 : vector<128x128xf32>
    %cst = arith.constant 0.000000e+00 : f32
    %9 = vector.broadcast %cst : f32 to vector<128x128xf32>
    %10 = arith.maximumf %8, %9 : vector<128x128xf32>
    %cst_7 = arith.constant 0.000000e+00 : bf16
    %11 = vector.broadcast %cst_7 : bf16 to vector<2x1x10x128xbf16>
    %c0_8 = arith.constant 0 : index
    %c0_9 = arith.constant 0 : index
    %c0_10 = arith.constant 0 : index
    %c0_11 = arith.constant 0 : index
    %12 = vector.load %arg7[%c0_8, %c0_9, %c0_10, %c0_11] : memref<2x10x10x128xbf16, #tpu.memory_space<vmem>>, vector<2x1x10x128xbf16>
    tpu.vector_store %arg7[%c0_8, %c0_9, %c0_10, %c0_11], %11 {strides = array<i32>} : memref<2x10x10x128xbf16, #tpu.memory_space<vmem>>, vector<2x1x10x128xbf16>,
    %c0_12 = arith.constant 0 : index
    %c9 = arith.constant 9 : index
    %c0_13 = arith.constant 0 : index
    %c0_14 = arith.constant 0 : index
    %13 = vector.load %arg7[%c0_12, %c9, %c0_13, %c0_14] : memref<2x10x10x128xbf16, #tpu.memory_space<vmem>>, vector<2x1x10x128xbf16>
    tpu.vector_store %arg7[%c0_12, %c9, %c0_13, %c0_14], %11 {strides = array<i32>} : memref<2x10x10x128xbf16, #tpu.memory_space<vmem>>, vector<2x1x10x128xbf16>,
    %cst_15 = arith.constant 0.000000e+00 : bf16
    %14 = vector.broadcast %cst_15 : bf16 to vector<2x10x1x128xbf16>
    %c0_16 = arith.constant 0 : index
    %c0_17 = arith.constant 0 : index
    %c0_18 = arith.constant 0 : index
    %c0_19 = arith.constant 0 : index
    %15 = vector.load %arg7[%c0_16, %c0_17, %c0_18, %c0_19] : memref<2x10x10x128xbf16, #tpu.memory_space<vmem>>, vector<2x10x1x128xbf16>
    tpu.vector_store %arg7[%c0_16, %c0_17, %c0_18, %c0_19], %14 {strides = array<i32>} : memref<2x10x10x128xbf16, #tpu.memory_space<vmem>>, vector<2x10x1x128xbf16>,
    %c0_20 = arith.constant 0 : index
    %c0_21 = arith.constant 0 : index
    %c9_22 = arith.constant 9 : index
    %c0_23 = arith.constant 0 : index
    %16 = vector.load %arg7[%c0_20, %c0_21, %c9_22, %c0_23] : memref<2x10x10x128xbf16, #tpu.memory_space<vmem>>, vector<2x10x1x128xbf16>
    tpu.vector_store %arg7[%c0_20, %c0_21, %c9_22, %c0_23], %14 {strides = array<i32>} : memref<2x10x10x128xbf16, #tpu.memory_space<vmem>>, vector<2x10x1x128xbf16>,
    %17 = vector.shape_cast %10 : vector<128x128xf32> to vector<2x8x8x128xf32>
    %18 = arith.truncf %17 : vector<2x8x8x128xf32> to vector<2x8x8x128xbf16>
    %c0_24 = arith.constant 0 : index
    %c1 = arith.constant 1 : index
    %c1_25 = arith.constant 1 : index
    %c0_26 = arith.constant 0 : index
    %19 = vector.load %arg7[%c0_24, %c1, %c1_25, %c0_26] : memref<2x10x10x128xbf16, #tpu.memory_space<vmem>>, vector<2x8x8x128xbf16>
    tpu.vector_store %arg7[%c0_24, %c1, %c1_25, %c0_26], %18 {strides = array<i32>} : memref<2x10x10x128xbf16, #tpu.memory_space<vmem>>, vector<2x8x8x128xbf16>,
    %cst_27 = arith.constant 0.000000e+00 : f32
    %20 = vector.broadcast %cst_27 : f32 to vector<128x128xf32>
    %c0_28 = arith.constant 0 : index
    %c0_29 = arith.constant 0 : index
    %c0_30 = arith.constant 0 : index
    %c0_31 = arith.constant 0 : index
    %21 = vector.load %arg7[%c0_28, %c0_29, %c0_30, %c0_31] : memref<2x10x10x128xbf16, #tpu.memory_space<vmem>>, vector<2x10x8x128xbf16>
    %22 = vector.extract_strided_slice %21 {offsets = [0, 0, 0, 0], sizes = [2, 8, 8, 128], strides = [1, 1, 1, 1]} : vector<2x10x8x128xbf16> to vector<2x8x8x128xbf16>
    %23 = vector.shape_cast %22 : vector<2x8x8x128xbf16> to vector<128x128xbf16>
    %c0_32 = arith.constant 0 : index
    %c0_33 = arith.constant 0 : index
    %c0_34 = arith.constant 0 : index
    %24 = vector.load %arg4[%c0_32, %c0_33, %c0_34] : memref<9x128x128xbf16, #tpu.memory_space<vmem>>, vector<1x128x128xbf16>
    %25 = vector.shape_cast %24 : vector<1x128x128xbf16> to vector<128x128xbf16>
    %cst_35 = arith.constant dense<0.000000e+00> : vector<128x128xf32>
    %26 = tpu.matmul %23, %25, %cst_35 {dimension_numbers = #tpu.dot_dimension_numbers<[1], [0], [0], [1], [0, 0, 1, 1], [], []>} : vector<128x128xbf16>, vector<128x128xbf16>, vector<128x128xf32> -> vector<128x128xf32>
    %27 = arith.addf %20, %26 : vector<128x128xf32>
    %28 = vector.extract_strided_slice %21 {offsets = [0, 1, 0, 0], sizes = [2, 8, 8, 128], strides = [1, 1, 1, 1]} : vector<2x10x8x128xbf16> to vector<2x8x8x128xbf16>
    %29 = vector.shape_cast %28 : vector<2x8x8x128xbf16> to vector<128x128xbf16>
    %c3 = arith.constant 3 : index
    %c0_36 = arith.constant 0 : index
    %c0_37 = arith.constant 0 : index
    %30 = vector.load %arg4[%c3, %c0_36, %c0_37] : memref<9x128x128xbf16, #tpu.memory_space<vmem>>, vector<1x128x128xbf16>
    %31 = vector.shape_cast %30 : vector<1x128x128xbf16> to vector<128x128xbf16>
    %cst_38 = arith.constant dense<0.000000e+00> : vector<128x128xf32>
    %32 = tpu.matmul %29, %31, %cst_38 {dimension_numbers = #tpu.dot_dimension_numbers<[1], [0], [0], [1], [0, 0, 1, 1], [], []>} : vector<128x128xbf16>, vector<128x128xbf16>, vector<128x128xf32> -> vector<128x128xf32>
    %33 = arith.addf %27, %32 : vector<128x128xf32>
    %34 = vector.extract_strided_slice %21 {offsets = [0, 2, 0, 0], sizes = [2, 8, 8, 128], strides = [1, 1, 1, 1]} : vector<2x10x8x128xbf16> to vector<2x8x8x128xbf16>
    %35 = vector.shape_cast %34 : vector<2x8x8x128xbf16> to vector<128x128xbf16>
    %c6 = arith.constant 6 : index
    %c0_39 = arith.constant 0 : index
    %c0_40 = arith.constant 0 : index
    %36 = vector.load %arg4[%c6, %c0_39, %c0_40] : memref<9x128x128xbf16, #tpu.memory_space<vmem>>, vector<1x128x128xbf16>
    %37 = vector.shape_cast %36 : vector<1x128x128xbf16> to vector<128x128xbf16>
    %cst_41 = arith.constant dense<0.000000e+00> : vector<128x128xf32>
    %38 = tpu.matmul %35, %37, %cst_41 {dimension_numbers = #tpu.dot_dimension_numbers<[1], [0], [0], [1], [0, 0, 1, 1], [], []>} : vector<128x128xbf16>, vector<128x128xbf16>, vector<128x128xf32> -> vector<128x128xf32>
    %39 = arith.addf %33, %38 : vector<128x128xf32>
    %c0_42 = arith.constant 0 : index
    %c0_43 = arith.constant 0 : index
    %c1_44 = arith.constant 1 : index
    %c0_45 = arith.constant 0 : index
    %40 = vector.load %arg7[%c0_42, %c0_43, %c1_44, %c0_45] : memref<2x10x10x128xbf16, #tpu.memory_space<vmem>>, vector<2x10x8x128xbf16>
    %41 = vector.extract_strided_slice %40 {offsets = [0, 0, 0, 0], sizes = [2, 8, 8, 128], strides = [1, 1, 1, 1]} : vector<2x10x8x128xbf16> to vector<2x8x8x128xbf16>
    %42 = vector.shape_cast %41 : vector<2x8x8x128xbf16> to vector<128x128xbf16>
    %c1_46 = arith.constant 1 : index
    %c0_47 = arith.constant 0 : index
    %c0_48 = arith.constant 0 : index
    %43 = vector.load %arg4[%c1_46, %c0_47, %c0_48] : memref<9x128x128xbf16, #tpu.memory_space<vmem>>, vector<1x128x128xbf16>
    %44 = vector.shape_cast %43 : vector<1x128x128xbf16> to vector<128x128xbf16>
    %cst_49 = arith.constant dense<0.000000e+00> : vector<128x128xf32>
    %45 = tpu.matmul %42, %44, %cst_49 {dimension_numbers = #tpu.dot_dimension_numbers<[1], [0], [0], [1], [0, 0, 1, 1], [], []>} : vector<128x128xbf16>, vector<128x128xbf16>, vector<128x128xf32> -> vector<128x128xf32>
    %46 = arith.addf %39, %45 : vector<128x128xf32>
    %47 = vector.extract_strided_slice %40 {offsets = [0, 1, 0, 0], sizes = [2, 8, 8, 128], strides = [1, 1, 1, 1]} : vector<2x10x8x128xbf16> to vector<2x8x8x128xbf16>
    %48 = vector.shape_cast %47 : vector<2x8x8x128xbf16> to vector<128x128xbf16>
    %c4 = arith.constant 4 : index
    %c0_50 = arith.constant 0 : index
    %c0_51 = arith.constant 0 : index
    %49 = vector.load %arg4[%c4, %c0_50, %c0_51] : memref<9x128x128xbf16, #tpu.memory_space<vmem>>, vector<1x128x128xbf16>
    %50 = vector.shape_cast %49 : vector<1x128x128xbf16> to vector<128x128xbf16>
    %cst_52 = arith.constant dense<0.000000e+00> : vector<128x128xf32>
    %51 = tpu.matmul %48, %50, %cst_52 {dimension_numbers = #tpu.dot_dimension_numbers<[1], [0], [0], [1], [0, 0, 1, 1], [], []>} : vector<128x128xbf16>, vector<128x128xbf16>, vector<128x128xf32> -> vector<128x128xf32>
    %52 = arith.addf %46, %51 : vector<128x128xf32>
    %53 = vector.extract_strided_slice %40 {offsets = [0, 2, 0, 0], sizes = [2, 8, 8, 128], strides = [1, 1, 1, 1]} : vector<2x10x8x128xbf16> to vector<2x8x8x128xbf16>
    %54 = vector.shape_cast %53 : vector<2x8x8x128xbf16> to vector<128x128xbf16>
    %c7 = arith.constant 7 : index
    %c0_53 = arith.constant 0 : index
    %c0_54 = arith.constant 0 : index
    %55 = vector.load %arg4[%c7, %c0_53, %c0_54] : memref<9x128x128xbf16, #tpu.memory_space<vmem>>, vector<1x128x128xbf16>
    %56 = vector.shape_cast %55 : vector<1x128x128xbf16> to vector<128x128xbf16>
    %cst_55 = arith.constant dense<0.000000e+00> : vector<128x128xf32>
    %57 = tpu.matmul %54, %56, %cst_55 {dimension_numbers = #tpu.dot_dimension_numbers<[1], [0], [0], [1], [0, 0, 1, 1], [], []>} : vector<128x128xbf16>, vector<128x128xbf16>, vector<128x128xf32> -> vector<128x128xf32>
    %58 = arith.addf %52, %57 : vector<128x128xf32>
    %c0_56 = arith.constant 0 : index
    %c0_57 = arith.constant 0 : index
    %c2 = arith.constant 2 : index
    %c0_58 = arith.constant 0 : index
    %59 = vector.load %arg7[%c0_56, %c0_57, %c2, %c0_58] : memref<2x10x10x128xbf16, #tpu.memory_space<vmem>>, vector<2x10x8x128xbf16>
    %60 = vector.extract_strided_slice %59 {offsets = [0, 0, 0, 0], sizes = [2, 8, 8, 128], strides = [1, 1, 1, 1]} : vector<2x10x8x128xbf16> to vector<2x8x8x128xbf16>
    %61 = vector.shape_cast %60 : vector<2x8x8x128xbf16> to vector<128x128xbf16>
    %c2_59 = arith.constant 2 : index
    %c0_60 = arith.constant 0 : index
    %c0_61 = arith.constant 0 : index
    %62 = vector.load %arg4[%c2_59, %c0_60, %c0_61] : memref<9x128x128xbf16, #tpu.memory_space<vmem>>, vector<1x128x128xbf16>
    %63 = vector.shape_cast %62 : vector<1x128x128xbf16> to vector<128x128xbf16>
    %cst_62 = arith.constant dense<0.000000e+00> : vector<128x128xf32>
    %64 = tpu.matmul %61, %63, %cst_62 {dimension_numbers = #tpu.dot_dimension_numbers<[1], [0], [0], [1], [0, 0, 1, 1], [], []>} : vector<128x128xbf16>, vector<128x128xbf16>, vector<128x128xf32> -> vector<128x128xf32>
    %65 = arith.addf %58, %64 : vector<128x128xf32>
    %66 = vector.extract_strided_slice %59 {offsets = [0, 1, 0, 0], sizes = [2, 8, 8, 128], strides = [1, 1, 1, 1]} : vector<2x10x8x128xbf16> to vector<2x8x8x128xbf16>
    %67 = vector.shape_cast %66 : vector<2x8x8x128xbf16> to vector<128x128xbf16>
    %c5 = arith.constant 5 : index
    %c0_63 = arith.constant 0 : index
    %c0_64 = arith.constant 0 : index
    %68 = vector.load %arg4[%c5, %c0_63, %c0_64] : memref<9x128x128xbf16, #tpu.memory_space<vmem>>, vector<1x128x128xbf16>
    %69 = vector.shape_cast %68 : vector<1x128x128xbf16> to vector<128x128xbf16>
    %cst_65 = arith.constant dense<0.000000e+00> : vector<128x128xf32>
    %70 = tpu.matmul %67, %69, %cst_65 {dimension_numbers = #tpu.dot_dimension_numbers<[1], [0], [0], [1], [0, 0, 1, 1], [], []>} : vector<128x128xbf16>, vector<128x128xbf16>, vector<128x128xf32> -> vector<128x128xf32>
    %71 = arith.addf %65, %70 : vector<128x128xf32>
    %72 = vector.extract_strided_slice %59 {offsets = [0, 2, 0, 0], sizes = [2, 8, 8, 128], strides = [1, 1, 1, 1]} : vector<2x10x8x128xbf16> to vector<2x8x8x128xbf16>
    %73 = vector.shape_cast %72 : vector<2x8x8x128xbf16> to vector<128x128xbf16>
    %c8 = arith.constant 8 : index
    %c0_66 = arith.constant 0 : index
    %c0_67 = arith.constant 0 : index
    %74 = vector.load %arg4[%c8, %c0_66, %c0_67] : memref<9x128x128xbf16, #tpu.memory_space<vmem>>, vector<1x128x128xbf16>
    %75 = vector.shape_cast %74 : vector<1x128x128xbf16> to vector<128x128xbf16>
    %cst_68 = arith.constant dense<0.000000e+00> : vector<128x128xf32>
    %76 = tpu.matmul %73, %75, %cst_68 {dimension_numbers = #tpu.dot_dimension_numbers<[1], [0], [0], [1], [0, 0, 1, 1], [], []>} : vector<128x128xbf16>, vector<128x128xbf16>, vector<128x128xf32> -> vector<128x128xf32>
    %77 = arith.addf %71, %76 : vector<128x128xf32>
    %78 = vector.shape_cast %77 : vector<128x128xf32> to vector<2x8x8x128xf32>
    %79 = arith.truncf %78 : vector<2x8x8x128xf32> to vector<2x8x8x128xbf16>
    %c0_69 = arith.constant 0 : index
    %c0_70 = arith.constant 0 : index
    %c0_71 = arith.constant 0 : index
    %c0_72 = arith.constant 0 : index
    %80 = vector.load %arg5[%c0_69, %c0_70, %c0_71, %c0_72] : memref<2x8x8x128xbf16, #tpu.memory_space<vmem>>, vector<2x8x8x128xbf16>
    tpu.vector_store %arg5[%c0_69, %c0_70, %c0_71, %c0_72], %79 {strides = array<i32>} : memref<2x8x8x128xbf16, #tpu.memory_space<vmem>>, vector<2x8x8x128xbf16>,
    %cst_73 = arith.constant dense<0.000000e+00> : vector<128xf32>
    %81 = vector.multi_reduction <add>, %77, %cst_73 [0] : vector<128x128xf32> to vector<128xf32>
    %82 = vector.shape_cast %81 : vector<128xf32> to vector<1x128xf32>
    %83 = vector.shape_cast %82 : vector<1x128xf32> to vector<1x1x128xf32>
    %c0_74 = arith.constant 0 : index
    %c0_75 = arith.constant 0 : index
    %c0_76 = arith.constant 0 : index
    %84 = vector.load %arg6[%c0_74, %c0_75, %c0_76] : memref<1x2x128xf32, #tpu.memory_space<vmem>>, vector<1x1x128xf32>
    tpu.vector_store %arg6[%c0_74, %c0_75, %c0_76], %83 {strides = array<i32>} : memref<1x2x128xf32, #tpu.memory_space<vmem>>, vector<1x1x128xf32>,
    %85 = arith.mulf %77, %77 : vector<128x128xf32>
    %cst_77 = arith.constant dense<0.000000e+00> : vector<128xf32>
    %86 = vector.multi_reduction <add>, %85, %cst_77 [0] : vector<128x128xf32> to vector<128xf32>
    %87 = vector.shape_cast %86 : vector<128xf32> to vector<1x128xf32>
    %88 = vector.shape_cast %87 : vector<1x128xf32> to vector<1x1x128xf32>
    %c0_78 = arith.constant 0 : index
    %c1_79 = arith.constant 1 : index
    %c0_80 = arith.constant 0 : index
    %89 = vector.load %arg6[%c0_78, %c1_79, %c0_80] : memref<1x2x128xf32, #tpu.memory_space<vmem>>, vector<1x1x128xf32>
    tpu.vector_store %arg6[%c0_78, %c1_79, %c0_80], %88 {strides = array<i32>} : memref<1x2x128xf32, #tpu.memory_space<vmem>>, vector<1x1x128xf32>,
    return
  }
  func.func @transform_0(%arg0: i32) -> (i32, i32, i32, i32) {
    %c0_i32 = arith.constant 0 : i32
    %c0_i32_0 = arith.constant 0 : i32
    %c0_i32_1 = arith.constant 0 : i32
    %c0_i32_2 = arith.constant 0 : i32
    return %arg0, %c0_i32, %c0_i32_0, %c0_i32_1 : i32, i32, i32, i32
  }
  func.func @transform_1(%arg0: i32) -> (i32, i32) {
    %c0_i32 = arith.constant 0 : i32
    %c0_i32_0 = arith.constant 0 : i32
    %c0_i32_1 = arith.constant 0 : i32
    return %c0_i32, %c0_i32_0 : i32, i32
  }
  func.func @transform_2(%arg0: i32) -> (i32, i32) {
    %c0_i32 = arith.constant 0 : i32
    %c0_i32_0 = arith.constant 0 : i32
    %c0_i32_1 = arith.constant 0 : i32
    return %c0_i32, %c0_i32_0 : i32, i32
  }
  func.func @transform_3(%arg0: i32) -> (i32, i32, i32) {
    %c0_i32 = arith.constant 0 : i32
    %c0_i32_0 = arith.constant 0 : i32
    %c0_i32_1 = arith.constant 0 : i32
    %c0_i32_2 = arith.constant 0 : i32
    return %c0_i32, %c0_i32_0, %c0_i32_1 : i32, i32, i32
  }
  func.func @transform_4(%arg0: i32) -> (i32, i32, i32, i32) {
    %c0_i32 = arith.constant 0 : i32
    %c0_i32_0 = arith.constant 0 : i32
    %c0_i32_1 = arith.constant 0 : i32
    %c0_i32_2 = arith.constant 0 : i32
    return %arg0, %c0_i32, %c0_i32_0, %c0_i32_1 : i32, i32, i32, i32
  }
  func.func @transform_5(%arg0: i32) -> (i32, i32, i32) {
    %c0_i32 = arith.constant 0 : i32
    %c0_i32_0 = arith.constant 0 : i32
    %c0_i32_1 = arith.constant 0 : i32
    return %arg0, %c0_i32, %c0_i32_0 : i32, i32, i32
  }
}

module attributes {stable_mosaic.version = 11 : i64} {
  func.func @kernel(%arg0: i32, %arg1: memref<2x8x8x128xbf16, #tpu.memory_space<vmem>>, %arg2: memref<1x128xf32, #tpu.memory_space<vmem>>, %arg3: memref<1x128xf32, #tpu.memory_space<vmem>>, %arg4: memref<2x8x8x128xbf16, #tpu.memory_space<vmem>>, %arg5: memref<2x8x8x128xf32, #tpu.memory_space<vmem>>) attributes {dimension_semantics = [#tpu.dimension_semantics<parallel>], iteration_bounds = array<i64: 1>, scalar_prefetch = 0 : i64, scratch_operands = 0 : i64, tpu.core_type = #tpu.core_type<tc>, window_params = [{transform_indices = @transform_0, window_bounds = array<i64: 2, 8, 8, 128>}, {pipeline_mode = #tpu.pipeline_mode<synchronous>, transform_indices = @transform_1, window_bounds = array<i64: 1, 128>}, {pipeline_mode = #tpu.pipeline_mode<synchronous>, transform_indices = @transform_2, window_bounds = array<i64: 1, 128>}, {transform_indices = @transform_3, window_bounds = array<i64: 2, 8, 8, 128>}, {transform_indices = @transform_4, window_bounds = array<i64: 2, 8, 8, 128>}]} {
    %c0 = arith.constant 0 : index
    %c0_0 = arith.constant 0 : index
    %c0_1 = arith.constant 0 : index
    %c0_2 = arith.constant 0 : index
    %0 = vector.load %arg1[%c0, %c0_0, %c0_1, %c0_2] : memref<2x8x8x128xbf16, #tpu.memory_space<vmem>>, vector<2x8x8x128xbf16>
    %1 = vector.shape_cast %0 : vector<2x8x8x128xbf16> to vector<128x128xbf16>
    %2 = arith.extf %1 : vector<128x128xbf16> to vector<128x128xf32>
    %c0_3 = arith.constant 0 : index
    %c0_4 = arith.constant 0 : index
    %3 = vector.load %arg2[%c0_3, %c0_4] : memref<1x128xf32, #tpu.memory_space<vmem>>, vector<1x128xf32>
    %4 = vector.broadcast %3 : vector<1x128xf32> to vector<128x128xf32>
    %5 = arith.mulf %2, %4 : vector<128x128xf32>
    %c0_5 = arith.constant 0 : index
    %c0_6 = arith.constant 0 : index
    %6 = vector.load %arg3[%c0_5, %c0_6] : memref<1x128xf32, #tpu.memory_space<vmem>>, vector<1x128xf32>
    %7 = vector.broadcast %6 : vector<1x128xf32> to vector<128x128xf32>
    %8 = arith.addf %5, %7 : vector<128x128xf32>
    %c0_7 = arith.constant 0 : index
    %c0_8 = arith.constant 0 : index
    %c0_9 = arith.constant 0 : index
    %c0_10 = arith.constant 0 : index
    %9 = vector.load %arg4[%c0_7, %c0_8, %c0_9, %c0_10] : memref<2x8x8x128xbf16, #tpu.memory_space<vmem>>, vector<2x8x8x128xbf16>
    %10 = vector.shape_cast %9 : vector<2x8x8x128xbf16> to vector<128x128xbf16>
    %11 = arith.extf %10 : vector<128x128xbf16> to vector<128x128xf32>
    %12 = arith.addf %8, %11 : vector<128x128xf32>
    %cst = arith.constant 0.000000e+00 : f32
    %13 = vector.broadcast %cst : f32 to vector<128x128xf32>
    %14 = arith.maximumf %12, %13 : vector<128x128xf32>
    %15 = vector.shape_cast %14 : vector<128x128xf32> to vector<2x8x8x128xf32>
    %c0_11 = arith.constant 0 : index
    %c0_12 = arith.constant 0 : index
    %c0_13 = arith.constant 0 : index
    %c0_14 = arith.constant 0 : index
    %16 = vector.load %arg5[%c0_11, %c0_12, %c0_13, %c0_14] : memref<2x8x8x128xf32, #tpu.memory_space<vmem>>, vector<2x8x8x128xf32>
    tpu.vector_store %arg5[%c0_11, %c0_12, %c0_13, %c0_14], %15 {strides = array<i32>} : memref<2x8x8x128xf32, #tpu.memory_space<vmem>>, vector<2x8x8x128xf32>,
    return
  }
  func.func @transform_0(%arg0: i32) -> (i32, i32, i32, i32) {
    %c0_i32 = arith.constant 0 : i32
    %c0_i32_0 = arith.constant 0 : i32
    %c0_i32_1 = arith.constant 0 : i32
    %c0_i32_2 = arith.constant 0 : i32
    return %arg0, %c0_i32, %c0_i32_0, %c0_i32_1 : i32, i32, i32, i32
  }
  func.func @transform_1(%arg0: i32) -> (i32, i32) {
    %c0_i32 = arith.constant 0 : i32
    %c0_i32_0 = arith.constant 0 : i32
    %c0_i32_1 = arith.constant 0 : i32
    return %c0_i32, %c0_i32_0 : i32, i32
  }
  func.func @transform_2(%arg0: i32) -> (i32, i32) {
    %c0_i32 = arith.constant 0 : i32
    %c0_i32_0 = arith.constant 0 : i32
    %c0_i32_1 = arith.constant 0 : i32
    return %c0_i32, %c0_i32_0 : i32, i32
  }
  func.func @transform_3(%arg0: i32) -> (i32, i32, i32, i32) {
    %c0_i32 = arith.constant 0 : i32
    %c0_i32_0 = arith.constant 0 : i32
    %c0_i32_1 = arith.constant 0 : i32
    %c0_i32_2 = arith.constant 0 : i32
    return %arg0, %c0_i32, %c0_i32_0, %c0_i32_1 : i32, i32, i32, i32
  }
  func.func @transform_4(%arg0: i32) -> (i32, i32, i32, i32) {
    %c0_i32 = arith.constant 0 : i32
    %c0_i32_0 = arith.constant 0 : i32
    %c0_i32_1 = arith.constant 0 : i32
    %c0_i32_2 = arith.constant 0 : i32
    return %arg0, %c0_i32, %c0_i32_0, %c0_i32_1 : i32, i32, i32, i32
  }
}

</mosaic_0001>

<llo_original>
// kernel: basic_block_forward.5
$region0: #{basic_block_forward.5}
  #allocation0 [shape = 'u32[]', space=smem, size = 0x4, offset = 0x4, fixed_abs, tag = 'smem constant byte address 0x4 - core index']
  #allocation1 [shape = 'u32[144,128]{1,0:T(1,128)}', space=vmem, size = 0x12000, scoped, tag = 'internal scratch']
  %s0 = inlined_call_operand.vmem [shape: bf16[2,8,8,128], index: 0, kind: input, shape index: {}]
  %s1 = inlined_call_operand.vmem [shape: f32[1,128], index: 1, kind: input, shape index: {}]
  %s2 = inlined_call_operand.vmem [shape: f32[1,128], index: 2, kind: input, shape index: {}]
  %s3 = inlined_call_operand.vmem [shape: bf16[2,8,8,128], index: 3, kind: input, shape index: {}]
  %s4 = inlined_call_operand.vmem [shape: f32[2,8,8,128], index: 4, kind: output, shape index: {}]
  %s5 = sld [smem:[#allocation0]]
  $region26: #{basic_block_forward.5} parent=0
    _
  %s7 = ssub.s32 1, %s5
  %s8 = scalar_select 0, %s7, %s5
  // Predicated region
  $region2: #{basic_block_forward.5} parent=0 // pred_check
    _
  $region3: #{basic_block_forward.5} parent=0 // pred_check_branch
    %10 = sbr.rel (0) target = $region5
  $region4: #{basic_block_forward.5} parent=0 // pred_region
    _
  $region5: #{basic_block_forward.5} parent=0 // pred_fallthru
    _
  // Predicated region
  $region6: #{basic_block_forward.5} parent=0 // pred_check
    _
  $region7: #{basic_block_forward.5} parent=0 // pred_check_branch
    %12 = sbr.rel (0) target = $region9
  $region8: #{basic_block_forward.5} parent=0 // pred_region
    _
  $region9: #{basic_block_forward.5} parent=0 // pred_fallthru
    _
  // Predicated region
  $region10: #{basic_block_forward.5} parent=0 // pred_check
    _
  $region11: #{basic_block_forward.5} parent=0 // pred_check_branch
    %14 = sbr.rel (0) target = $region13
  $region12: #{basic_block_forward.5} parent=0 // pred_region
    _
  $region13: #{basic_block_forward.5} parent=0 // pred_fallthru
    _
  // Predicated region
  $region14: #{basic_block_forward.5} parent=0 // pred_check
    _
  $region15: #{basic_block_forward.5} parent=0 // pred_check_branch
    %16 = sbr.rel (0) target = $region17
  $region16: #{basic_block_forward.5} parent=0 // pred_region
    _
  $region17: #{basic_block_forward.5} parent=0 // pred_fallthru
    _
  %v17 = vld [vmem:[%s0] sm:$0xf]
  %v18 = vld [vmem:[%s0 + $0x4] sm:$0xf]
  %v19 = vld [vmem:[%s0 + $0x8] sm:$0xf]
  %v20 = vld [vmem:[%s0 + $0xc] sm:$0xf]
  %v21 = vld [vmem:[%s0 + $0x10] sm:$0xf]
  %v22 = vld [vmem:[%s0 + $0x14] sm:$0xf]
  %v23 = vld [vmem:[%s0 + $0x18] sm:$0xf]
  %v24 = vld [vmem:[%s0 + $0x1c] sm:$0xf]
  %v25 = vld [vmem:[%s0 + $0x20] sm:$0xf]
  %v26 = vld [vmem:[%s0 + $0x24] sm:$0xf]
  %v27 = vld [vmem:[%s0 + $0x28] sm:$0xf]
  %v28 = vld [vmem:[%s0 + $0x2c] sm:$0xf]
  %v29 = vld [vmem:[%s0 + $0x30] sm:$0xf]
  %v30 = vld [vmem:[%s0 + $0x34] sm:$0xf]
  %v31 = vld [vmem:[%s0 + $0x38] sm:$0xf]
  %v32 = vld [vmem:[%s0 + $0x3c] sm:$0xf]
  %v33 = vunpack.c.l.bf16 %v17
  %v34 = vunpack.c.l.bf16 %v18
  %v35 = vunpack.c.l.bf16 %v19
  %v36 = vunpack.c.l.bf16 %v20
  %v37 = vunpack.c.l.bf16 %v21
  %v38 = vunpack.c.l.bf16 %v22
  %v39 = vunpack.c.l.bf16 %v23
  %v40 = vunpack.c.l.bf16 %v24
  %v41 = vunpack.c.l.bf16 %v25
  %v42 = vunpack.c.l.bf16 %v26
  %v43 = vunpack.c.l.bf16 %v27
  %v44 = vunpack.c.l.bf16 %v28
  %v45 = vunpack.c.l.bf16 %v29
  %v46 = vunpack.c.l.bf16 %v30
  %v47 = vunpack.c.l.bf16 %v31
  %v48 = vunpack.c.l.bf16 %v32
  %v49 = vld [vmem:[%s1] sm:$0x1]
  %v51 = vlaneseq
  %v52 = vshrl.u32 %v51, 7
  %v53 = vsub.s32 0, %v52
  %v54 = vrot.slane %v49, %v53
  %v56 = vmul.f32 %v33, %v54
  %v57 = vmul.f32 %v34, %v54
  %v58 = vmul.f32 %v35, %v54
  %v59 = vmul.f32 %v36, %v54
  %v60 = vmul.f32 %v37, %v54
  %v61 = vmul.f32 %v38, %v54
  %v62 = vmul.f32 %v39, %v54
  %v63 = vmul.f32 %v40, %v54
  %v64 = vmul.f32 %v41, %v54
  %v65 = vmul.f32 %v42, %v54
  %v66 = vmul.f32 %v43, %v54
  %v67 = vmul.f32 %v44, %v54
  %v68 = vmul.f32 %v45, %v54
  %v69 = vmul.f32 %v46, %v54
  %v70 = vmul.f32 %v47, %v54
  %v71 = vmul.f32 %v48, %v54
  %v72 = vld [vmem:[%s2] sm:$0x1]
  %v74 = vlaneseq
  %v75 = vshrl.u32 %v74, 7
  %v76 = vsub.s32 0, %v75
  %v77 = vrot.slane %v72, %v76
  %v79 = vadd.f32 %v56, %v77
  %v80 = vadd.f32 %v57, %v77
  %v81 = vadd.f32 %v58, %v77
  %v82 = vadd.f32 %v59, %v77
  %v83 = vadd.f32 %v60, %v77
  %v84 = vadd.f32 %v61, %v77
  %v85 = vadd.f32 %v62, %v77
  %v86 = vadd.f32 %v63, %v77
  %v87 = vadd.f32 %v64, %v77
  %v88 = vadd.f32 %v65, %v77
  %v89 = vadd.f32 %v66, %v77
  %v90 = vadd.f32 %v67, %v77
  %v91 = vadd.f32 %v68, %v77
  %v92 = vadd.f32 %v69, %v77
  %v93 = vadd.f32 %v70, %v77
  %v94 = vadd.f32 %v71, %v77
  %v95 = vld [vmem:[%s3] sm:$0xf]
  %v96 = vld [vmem:[%s3 + $0x4] sm:$0xf]
  %v97 = vld [vmem:[%s3 + $0x8] sm:$0xf]
  %v98 = vld [vmem:[%s3 + $0xc] sm:$0xf]
  %v99 = vld [vmem:[%s3 + $0x10] sm:$0xf]
  %v100 = vld [vmem:[%s3 + $0x14] sm:$0xf]
  %v101 = vld [vmem:[%s3 + $0x18] sm:$0xf]
  %v102 = vld [vmem:[%s3 + $0x1c] sm:$0xf]
  %v103 = vld [vmem:[%s3 + $0x20] sm:$0xf]
  %v104 = vld [vmem:[%s3 + $0x24] sm:$0xf]
  %v105 = vld [vmem:[%s3 + $0x28] sm:$0xf]
  %v106 = vld [vmem:[%s3 + $0x2c] sm:$0xf]
  %v107 = vld [vmem:[%s3 + $0x30] sm:$0xf]
  %v108 = vld [vmem:[%s3 + $0x34] sm:$0xf]
  %v109 = vld [vmem:[%s3 + $0x38] sm:$0xf]
  %v110 = vld [vmem:[%s3 + $0x3c] sm:$0xf]
  %v111 = vunpack.c.l.bf16 %v95
  %v112 = vunpack.c.l.bf16 %v96
  %v113 = vunpack.c.l.bf16 %v97
  %v114 = vunpack.c.l.bf16 %v98
  %v115 = vunpack.c.l.bf16 %v99
  %v116 = vunpack.c.l.bf16 %v100
  %v117 = vunpack.c.l.bf16 %v101
  %v118 = vunpack.c.l.bf16 %v102
  %v119 = vunpack.c.l.bf16 %v103
  %v120 = vunpack.c.l.bf16 %v104
  %v121 = vunpack.c.l.bf16 %v105
  %v122 = vunpack.c.l.bf16 %v106
  %v123 = vunpack.c.l.bf16 %v107
  %v124 = vunpack.c.l.bf16 %v108
  %v125 = vunpack.c.l.bf16 %v109
  %v126 = vunpack.c.l.bf16 %v110
  %v127 = vadd.f32 %v79, %v111
  %v128 = vadd.f32 %v80, %v112
  %v129 = vadd.f32 %v81, %v113
  %v130 = vadd.f32 %v82, %v114
  %v131 = vadd.f32 %v83, %v115
  %v132 = vadd.f32 %v84, %v116
  %v133 = vadd.f32 %v85, %v117
  %v134 = vadd.f32 %v86, %v118
  %v135 = vadd.f32 %v87, %v119
  %v136 = vadd.f32 %v88, %v120
  %v137 = vadd.f32 %v89, %v121
  %v138 = vadd.f32 %v90, %v122
  %v139 = vadd.f32 %v91, %v123
  %v140 = vadd.f32 %v92, %v124
  %v141 = vadd.f32 %v93, %v125
  %v142 = vadd.f32 %v94, %v126
  %v143 = vmax.f32 %v127, 0.0
  %v144 = vmax.f32 %v128, 0.0
  %v145 = vmax.f32 %v129, 0.0
  %v146 = vmax.f32 %v130, 0.0
  %v147 = vmax.f32 %v131, 0.0
  %v148 = vmax.f32 %v132, 0.0
  %v149 = vmax.f32 %v133, 0.0
  %v150 = vmax.f32 %v134, 0.0
  %v151 = vmax.f32 %v135, 0.0
  %v152 = vmax.f32 %v136, 0.0
  %v153 = vmax.f32 %v137, 0.0
  %v154 = vmax.f32 %v138, 0.0
  %v155 = vmax.f32 %v139, 0.0
  %v156 = vmax.f32 %v140, 0.0
  %v157 = vmax.f32 %v141, 0.0
  %v158 = vmax.f32 %v142, 0.0
  %159 = vst [vmem:[%s4] sm:$0xff] %v143
  %160 = vst [vmem:[%s4 + $0x8] sm:$0xff] %v144
  %161 = vst [vmem:[%s4 + $0x10] sm:$0xff] %v145
  %162 = vst [vmem:[%s4 + $0x18] sm:$0xff] %v146
  %163 = vst [vmem:[%s4 + $0x20] sm:$0xff] %v147
  %164 = vst [vmem:[%s4 + $0x28] sm:$0xff] %v148
  %165 = vst [vmem:[%s4 + $0x30] sm:$0xff] %v149
  %166 = vst [vmem:[%s4 + $0x38] sm:$0xff] %v150
  %167 = vst [vmem:[%s4 + $0x40] sm:$0xff] %v151
  %168 = vst [vmem:[%s4 + $0x48] sm:$0xff] %v152
  %169 = vst [vmem:[%s4 + $0x50] sm:$0xff] %v153
  %170 = vst [vmem:[%s4 + $0x58] sm:$0xff] %v154
  %171 = vst [vmem:[%s4 + $0x60] sm:$0xff] %v155
  %172 = vst [vmem:[%s4 + $0x68] sm:$0xff] %v156
  %173 = vst [vmem:[%s4 + $0x70] sm:$0xff] %v157
  %174 = vst [vmem:[%s4 + $0x78] sm:$0xff] %v158
  // Predicated region
  $region18: #{basic_block_forward.5} parent=0 // pred_check
    _
  $region19: #{basic_block_forward.5} parent=0 // pred_check_branch
    %176 = sbr.rel (0) target = $region21
  $region20: #{basic_block_forward.5} parent=0 // pred_region
    _
  $region21: #{basic_block_forward.5} parent=0 // pred_fallthru
    _
  // Predicated region
  $region22: #{basic_block_forward.5} parent=0 // pred_check
    _
  $region23: #{basic_block_forward.5} parent=0 // pred_check_branch
    %178 = sbr.rel (0) target = $region25
  $region24: #{basic_block_forward.5} parent=0 // pred_region
    _
  $region25: #{basic_block_forward.5} parent=0 // pred_fallthru
    _

// kernel: basic_block_forward.4
$region0: #{basic_block_forward.4}
  #allocation0 [shape = 'u32[]', space=smem, size = 0x4, offset = 0x4, fixed_abs, tag = 'smem constant byte address 0x4 - core index']
  #allocation1 [shape = 'u32[144,128]{1,0:T(1,128)}', space=vmem, size = 0x12000, scoped, tag = 'internal scratch']
  #allocation2 [shape = 'bf16[2,10,10,128]{3,2,1,0:T(8,128)(2,1)}', space=vmem, size = 0x14000, scoped, tag = 'scratch operand']
  %s0 = inlined_call_operand.vmem [shape: bf16[2,8,8,128], index: 0, kind: input, shape index: {}]
  %s1 = inlined_call_operand.vmem [shape: f32[1,128], index: 1, kind: input, shape index: {}]
  %s2 = inlined_call_operand.vmem [shape: f32[1,128], index: 2, kind: input, shape index: {}]
  %s3 = inlined_call_operand.vmem [shape: bf16[9,128,128], index: 3, kind: input, shape index: {}]
  %s4 = inlined_call_operand.vmem [shape: bf16[2,8,8,128], index: 4, kind: output, shape index: {0}]
  %s5 = inlined_call_operand.vmem [shape: f32[1,2,128], index: 5, kind: output, shape index: {1}]
  %6 = xla_tuple %s4, %s5
  %s7 = sld [smem:[#allocation0]]
  $region34: #{basic_block_forward.4} parent=0
    _
  %s9 = ssub.s32 1, %s7
  %s10 = scalar_select 0, %s9, %s7
  // Predicated region
  $region2: #{basic_block_forward.4} parent=0 // pred_check
    _
  $region3: #{basic_block_forward.4} parent=0 // pred_check_branch
    %12 = sbr.rel (0) target = $region5
  $region4: #{basic_block_forward.4} parent=0 // pred_region
    _
  $region5: #{basic_block_forward.4} parent=0 // pred_fallthru
    _
  // Predicated region
  $region6: #{basic_block_forward.4} parent=0 // pred_check
    _
  $region7: #{basic_block_forward.4} parent=0 // pred_check_branch
    %14 = sbr.rel (0) target = $region9
  $region8: #{basic_block_forward.4} parent=0 // pred_region
    _
  $region9: #{basic_block_forward.4} parent=0 // pred_fallthru
    _
  // Predicated region
  $region10: #{basic_block_forward.4} parent=0 // pred_check
    _
  $region11: #{basic_block_forward.4} parent=0 // pred_check_branch
    %16 = sbr.rel (0) target = $region13
  $region12: #{basic_block_forward.4} parent=0 // pred_region
    _
  $region13: #{basic_block_forward.4} parent=0 // pred_fallthru
    _
  // Predicated region
  $region14: #{basic_block_forward.4} parent=0 // pred_check
    _
  $region15: #{basic_block_forward.4} parent=0 // pred_check_branch
    %18 = sbr.rel (0) target = $region17
  $region16: #{basic_block_forward.4} parent=0 // pred_region
    _
  $region17: #{basic_block_forward.4} parent=0 // pred_fallthru
    _
  %v20 = vld [vmem:[%s0] sm:$0xf]
  %v21 = vld [vmem:[%s0 + $0x4] sm:$0xf]
  %v22 = vld [vmem:[%s0 + $0x8] sm:$0xf]
  %v23 = vld [vmem:[%s0 + $0xc] sm:$0xf]
  %v24 = vld [vmem:[%s0 + $0x10] sm:$0xf]
  %v25 = vld [vmem:[%s0 + $0x14] sm:$0xf]
  %v26 = vld [vmem:[%s0 + $0x18] sm:$0xf]
  %v27 = vld [vmem:[%s0 + $0x1c] sm:$0xf]
  %v28 = vld [vmem:[%s0 + $0x20] sm:$0xf]
  %v29 = vld [vmem:[%s0 + $0x24] sm:$0xf]
  %v30 = vld [vmem:[%s0 + $0x28] sm:$0xf]
  %v31 = vld [vmem:[%s0 + $0x2c] sm:$0xf]
  %v32 = vld [vmem:[%s0 + $0x30] sm:$0xf]
  %v33 = vld [vmem:[%s0 + $0x34] sm:$0xf]
  %v34 = vld [vmem:[%s0 + $0x38] sm:$0xf]
  %v35 = vld [vmem:[%s0 + $0x3c] sm:$0xf]
  %v36 = vunpack.c.l.bf16 %v20
  %v37 = vunpack.c.l.bf16 %v21
  %v38 = vunpack.c.l.bf16 %v22
  %v39 = vunpack.c.l.bf16 %v23
  %v40 = vunpack.c.l.bf16 %v24
  %v41 = vunpack.c.l.bf16 %v25
  %v42 = vunpack.c.l.bf16 %v26
  %v43 = vunpack.c.l.bf16 %v27
  %v44 = vunpack.c.l.bf16 %v28
  %v45 = vunpack.c.l.bf16 %v29
  %v46 = vunpack.c.l.bf16 %v30
  %v47 = vunpack.c.l.bf16 %v31
  %v48 = vunpack.c.l.bf16 %v32
  %v49 = vunpack.c.l.bf16 %v33
  %v50 = vunpack.c.l.bf16 %v34
  %v51 = vunpack.c.l.bf16 %v35
  %v52 = vld [vmem:[%s1] sm:$0x1]
  %v54 = vlaneseq
  %v55 = vshrl.u32 %v54, 7
  %v56 = vsub.s32 0, %v55
  %v57 = vrot.slane %v52, %v56
  %v59 = vmul.f32 %v36, %v57
  %v60 = vmul.f32 %v37, %v57
  %v61 = vmul.f32 %v38, %v57
  %v62 = vmul.f32 %v39, %v57
  %v63 = vmul.f32 %v40, %v57
  %v64 = vmul.f32 %v41, %v57
  %v65 = vmul.f32 %v42, %v57
  %v66 = vmul.f32 %v43, %v57
  %v67 = vmul.f32 %v44, %v57
  %v68 = vmul.f32 %v45, %v57
  %v69 = vmul.f32 %v46, %v57
  %v70 = vmul.f32 %v47, %v57
  %v71 = vmul.f32 %v48, %v57
  %v72 = vmul.f32 %v49, %v57
  %v73 = vmul.f32 %v50, %v57
  %v74 = vmul.f32 %v51, %v57
  %v75 = vld [vmem:[%s2] sm:$0x1]
  %v77 = vlaneseq
  %v78 = vshrl.u32 %v77, 7
  %v79 = vsub.s32 0, %v78
  %v80 = vrot.slane %v75, %v79
  %v82 = vadd.f32 %v59, %v80
  %v83 = vadd.f32 %v60, %v80
  %v84 = vadd.f32 %v61, %v80
  %v85 = vadd.f32 %v62, %v80
  %v86 = vadd.f32 %v63, %v80
  %v87 = vadd.f32 %v64, %v80
  %v88 = vadd.f32 %v65, %v80
  %v89 = vadd.f32 %v66, %v80
  %v90 = vadd.f32 %v67, %v80
  %v91 = vadd.f32 %v68, %v80
  %v92 = vadd.f32 %v69, %v80
  %v93 = vadd.f32 %v70, %v80
  %v94 = vadd.f32 %v71, %v80
  %v95 = vadd.f32 %v72, %v80
  %v96 = vadd.f32 %v73, %v80
  %v97 = vadd.f32 %v74, %v80
  %v98 = vmax.f32 %v82, 0.0
  %v99 = vmax.f32 %v83, 0.0
  %v100 = vmax.f32 %v84, 0.0
  %v101 = vmax.f32 %v85, 0.0
  %v102 = vmax.f32 %v86, 0.0
  %v103 = vmax.f32 %v87, 0.0
  %v104 = vmax.f32 %v88, 0.0
  %v105 = vmax.f32 %v89, 0.0
  %v106 = vmax.f32 %v90, 0.0
  %v107 = vmax.f32 %v91, 0.0
  %v108 = vmax.f32 %v92, 0.0
  %v109 = vmax.f32 %v93, 0.0
  %v110 = vmax.f32 %v94, 0.0
  %v111 = vmax.f32 %v95, 0.0
  %v112 = vmax.f32 %v96, 0.0
  %v113 = vmax.f32 %v97, 0.0
  %114 = vst [vmem:[#allocation2] sm:$0xf] 0
  %115 = vst [vmem:[#allocation2 + $0x4] sm:$0x1] 0
  %116 = vst [vmem:[#allocation2 + $0x50] sm:$0xf] 0
  %117 = vst [vmem:[#allocation2 + $0x54] sm:$0x1] 0
  %s118 = scalar_lea.vmem [#allocation2], 72
  %119 = vst [vmem:[%s118] sm:$0xf] 0
  %120 = vst [vmem:[%s118 + $0x4] sm:$0x1] 0
  %121 = vst [vmem:[%s118 + $0x50] sm:$0xf] 0
  %122 = vst [vmem:[%s118 + $0x54] sm:$0x1] 0
  %vm123 = vcmask 1040384
  %vm124 = vsmask.f32 256
  %vm125 = vmand %vm123, %vm124
  %v126 = vld [vmem:[#allocation2] sm:$0x1]
  %v127 = vsel %vm125, 0, %v126
  %128 = vst [vmem:[#allocation2] sm:$0x1] %v127
  %v129 = vld [vmem:[#allocation2 + $0x8] sm:$0x1]
  %v130 = vsel %vm125, 0, %v129
  %131 = vst [vmem:[#allocation2 + $0x8] sm:$0x1] %v130
  %v132 = vld [vmem:[#allocation2 + $0x10] sm:$0x1]
  %v133 = vsel %vm125, 0, %v132
  %134 = vst [vmem:[#allocation2 + $0x10] sm:$0x1] %v133
  %v135 = vld [vmem:[#allocation2 + $0x18] sm:$0x1]
  %v136 = vsel %vm125, 0, %v135
  %137 = vst [vmem:[#allocation2 + $0x18] sm:$0x1] %v136
  %v138 = vld [vmem:[#allocation2 + $0x20] sm:$0x1]
  %v139 = vsel %vm125, 0, %v138
  %140 = vst [vmem:[#allocation2 + $0x20] sm:$0x1] %v139
  %v141 = vld [vmem:[#allocation2 + $0x28] sm:$0x1]
  %v142 = vsel %vm125, 0, %v141
  %143 = vst [vmem:[#allocation2 + $0x28] sm:$0x1] %v142
  %v144 = vld [vmem:[#allocation2 + $0x30] sm:$0x1]
  %v145 = vsel %vm125, 0, %v144
  %146 = vst [vmem:[#allocation2 + $0x30] sm:$0x1] %v145
  %v147 = vld [vmem:[#allocation2 + $0x38] sm:$0x1]
  %v148 = vsel %vm125, 0, %v147
  %149 = vst [vmem:[#allocation2 + $0x38] sm:$0x1] %v148
  %v150 = vld [vmem:[#allocation2 + $0x40] sm:$0x1]
  %v151 = vsel %vm125, 0, %v150
  %152 = vst [vmem:[#allocation2 + $0x40] sm:$0x1] %v151
  %v153 = vld [vmem:[#allocation2 + $0x48] sm:$0x1]
  %v154 = vsel %vm125, 0, %v153
  %155 = vst [vmem:[#allocation2 + $0x48] sm:$0x1] %v154
  %v156 = vld [vmem:[#allocation2 + $0x50] sm:$0x1]
  %v157 = vsel %vm125, 0, %v156
  %158 = vst [vmem:[#allocation2 + $0x50] sm:$0x1] %v157
  %v159 = vld [vmem:[#allocation2 + $0x58] sm:$0x1]
  %v160 = vsel %vm125, 0, %v159
  %161 = vst [vmem:[#allocation2 + $0x58] sm:$0x1] %v160
  %v162 = vld [vmem:[#allocation2 + $0x60] sm:$0x1]
  %v163 = vsel %vm125, 0, %v162
  %164 = vst [vmem:[#allocation2 + $0x60] sm:$0x1] %v163
  %v165 = vld [vmem:[#allocation2 + $0x68] sm:$0x1]
  %v166 = vsel %vm125, 0, %v165
  %167 = vst [vmem:[#allocation2 + $0x68] sm:$0x1] %v166
  %v168 = vld [vmem:[#allocation2 + $0x70] sm:$0x1]
  %v169 = vsel %vm125, 0, %v168
  %170 = vst [vmem:[#allocation2 + $0x70] sm:$0x1] %v169
  %v171 = vld [vmem:[#allocation2 + $0x78] sm:$0x1]
  %v172 = vsel %vm125, 0, %v171
  %173 = vst [vmem:[#allocation2 + $0x78] sm:$0x1] %v172
  %v174 = vld [vmem:[#allocation2 + $0x80] sm:$0x1]
  %v175 = vsel %vm125, 0, %v174
  %176 = vst [vmem:[#allocation2 + $0x80] sm:$0x1] %v175
  %v177 = vld [vmem:[#allocation2 + $0x88] sm:$0x1]
  %v178 = vsel %vm125, 0, %v177
  %179 = vst [vmem:[#allocation2 + $0x88] sm:$0x1] %v178
  %v180 = vld [vmem:[#allocation2 + $0x90] sm:$0x1]
  %v181 = vsel %vm125, 0, %v180
  %182 = vst [vmem:[#allocation2 + $0x90] sm:$0x1] %v181
  %v183 = vld [vmem:[#allocation2 + $0x98] sm:$0x1]
  %v184 = vsel %vm125, 0, %v183
  %185 = vst [vmem:[#allocation2 + $0x98] sm:$0x1] %v184
  %vm186 = vsmask.f32 7938
  %vm187 = vmand %vm123, %vm186
  %v188 = vld [vmem:[#allocation2 + $0x4] sm:$0x1]
  %v189 = vsel %vm187, 0, %v188
  %190 = vst [vmem:[#allocation2 + $0x4] sm:$0x1] %v189
  %v191 = vld [vmem:[#allocation2 + $0xc] sm:$0x1]
  %v192 = vsel %vm187, 0, %v191
  %193 = vst [vmem:[#allocation2 + $0xc] sm:$0x1] %v192
  %v194 = vld [vmem:[#allocation2 + $0x14] sm:$0x1]
  %v195 = vsel %vm187, 0, %v194
  %196 = vst [vmem:[#allocation2 + $0x14] sm:$0x1] %v195
  %v197 = vld [vmem:[#allocation2 + $0x1c] sm:$0x1]
  %v198 = vsel %vm187, 0, %v197
  %199 = vst [vmem:[#allocation2 + $0x1c] sm:$0x1] %v198
  %v200 = vld [vmem:[#allocation2 + $0x24] sm:$0x1]
  %v201 = vsel %vm187, 0, %v200
  %202 = vst [vmem:[#allocation2 + $0x24] sm:$0x1] %v201
  %v203 = vld [vmem:[#allocation2 + $0x2c] sm:$0x1]
  %v204 = vsel %vm187, 0, %v203
  %205 = vst [vmem:[#allocation2 + $0x2c] sm:$0x1] %v204
  %v206 = vld [vmem:[#allocation2 + $0x34] sm:$0x1]
  %v207 = vsel %vm187, 0, %v206
  %208 = vst [vmem:[#allocation2 + $0x34] sm:$0x1] %v207
  %v209 = vld [vmem:[#allocation2 + $0x3c] sm:$0x1]
  %v210 = vsel %vm187, 0, %v209
  %211 = vst [vmem:[#allocation2 + $0x3c] sm:$0x1] %v210
  %v212 = vld [vmem:[#allocation2 + $0x44] sm:$0x1]
  %v213 = vsel %vm187, 0, %v212
  %214 = vst [vmem:[#allocation2 + $0x44] sm:$0x1] %v213
  %v215 = vld [vmem:[#allocation2 + $0x4c] sm:$0x1]
  %v216 = vsel %vm187, 0, %v215
  %217 = vst [vmem:[#allocation2 + $0x4c] sm:$0x1] %v216
  %v218 = vld [vmem:[#allocation2 + $0x54] sm:$0x1]
  %v219 = vsel %vm187, 0, %v218
  %220 = vst [vmem:[#allocation2 + $0x54] sm:$0x1] %v219
  %v221 = vld [vmem:[#allocation2 + $0x5c] sm:$0x1]
  %v222 = vsel %vm187, 0, %v221
  %223 = vst [vmem:[#allocation2 + $0x5c] sm:$0x1] %v222
  %v224 = vld [vmem:[#allocation2 + $0x64] sm:$0x1]
  %v225 = vsel %vm187, 0, %v224
  %226 = vst [vmem:[#allocation2 + $0x64] sm:$0x1] %v225
  %v227 = vld [vmem:[#allocation2 + $0x6c] sm:$0x1]
  %v228 = vsel %vm187, 0, %v227
  %229 = vst [vmem:[#allocation2 + $0x6c] sm:$0x1] %v228
  %v230 = vld [vmem:[#allocation2 + $0x74] sm:$0x1]
  %v231 = vsel %vm187, 0, %v230
  %232 = vst [vmem:[#allocation2 + $0x74] sm:$0x1] %v231
  %v233 = vld [vmem:[#allocation2 + $0x7c] sm:$0x1]
  %v234 = vsel %vm187, 0, %v233
  %235 = vst [vmem:[#allocation2 + $0x7c] sm:$0x1] %v234
  %v236 = vld [vmem:[#allocation2 + $0x84] sm:$0x1]
  %v237 = vsel %vm187, 0, %v236
  %238 = vst [vmem:[#allocation2 + $0x84] sm:$0x1] %v237
  %v239 = vld [vmem:[#allocation2 + $0x8c] sm:$0x1]
  %v240 = vsel %vm187, 0, %v239
  %241 = vst [vmem:[#allocation2 + $0x8c] sm:$0x1] %v240
  %v242 = vld [vmem:[#allocation2 + $0x94] sm:$0x1]
  %v243 = vsel %vm187, 0, %v242
  %244 = vst [vmem:[#allocation2 + $0x94] sm:$0x1] %v243
  %v245 = vld [vmem:[#allocation2 + $0x9c] sm:$0x1]
  %v246 = vsel %vm187, 0, %v245
  %247 = vst [vmem:[#allocation2 + $0x9c] sm:$0x1] %v246
  %v248 = vpack.c.bf16 %v98, %v98
  %v249 = vpack.c.bf16 %v99, %v99
  %v250 = vpack.c.bf16 %v100, %v100
  %v251 = vpack.c.bf16 %v101, %v101
  %v252 = vpack.c.bf16 %v102, %v102
  %v253 = vpack.c.bf16 %v103, %v103
  %v254 = vpack.c.bf16 %v104, %v104
  %v255 = vpack.c.bf16 %v105, %v105
  %v256 = vpack.c.bf16 %v106, %v106
  %v257 = vpack.c.bf16 %v107, %v107
  %v258 = vpack.c.bf16 %v108, %v108
  %v259 = vpack.c.bf16 %v109, %v109
  %v260 = vpack.c.bf16 %v110, %v110
  %v261 = vpack.c.bf16 %v111, %v111
  %v262 = vpack.c.bf16 %v112, %v112
  %v263 = vpack.c.bf16 %v113, %v113
  %v280 = vunpack.c.l.b16 %v248
  %v281 = vunpack.c.l.b16 %v249
  %v282 = vunpack.c.l.b16 %v250
  %v283 = vunpack.c.l.b16 %v251
  %v284 = vunpack.c.l.b16 %v252
  %v285 = vunpack.c.l.b16 %v253
  %v286 = vunpack.c.l.b16 %v254
  %v287 = vunpack.c.l.b16 %v255
  %v288 = vunpack.c.l.b16 %v256
  %v289 = vunpack.c.l.b16 %v257
  %v290 = vunpack.c.l.b16 %v258
  %v291 = vunpack.c.l.b16 %v259
  %v292 = vunpack.c.l.b16 %v260
  %v293 = vunpack.c.l.b16 %v261
  %v294 = vunpack.c.l.b16 %v262
  %v295 = vunpack.c.l.b16 %v263
  %v296 = vpack.c.b16 %v280, %v280
  %v297 = vpack.c.b16 %v281, %v281
  %v298 = vpack.c.b16 %v282, %v282
  %v299 = vpack.c.b16 %v283, %v283
  %v300 = vpack.c.b16 %v284, %v284
  %v301 = vpack.c.b16 %v285, %v285
  %v302 = vpack.c.b16 %v286, %v286
  %v303 = vpack.c.b16 %v287, %v287
  %v304 = vpack.c.b16 %v288, %v288
  %v305 = vpack.c.b16 %v289, %v289
  %v306 = vpack.c.b16 %v290, %v290
  %v307 = vpack.c.b16 %v291, %v291
  %v308 = vpack.c.b16 %v292, %v292
  %v309 = vpack.c.b16 %v293, %v293
  %v310 = vpack.c.b16 %v294, %v294
  %v311 = vpack.c.b16 %v295, %v295
  %v313 = vshrl.u32 %v296, 16
  %v315 = vrot.slane %v313, 7
  %v316 = vshll.u32 %v296, 16
  %v318 = vor.u32 %v315, %v316
  %v319 = vrot.slane %v315, 4
  %v321 = vshrl.u32 %v297, 16
  %v323 = vrot.slane %v321, 7
  %v324 = vshll.u32 %v297, 16
  %v326 = vor.u32 %v323, %v324
  %v327 = vrot.slane %v323, 4
  %v329 = vshrl.u32 %v298, 16
  %v331 = vrot.slane %v329, 7
  %v332 = vshll.u32 %v298, 16
  %v334 = vor.u32 %v331, %v332
  %v335 = vrot.slane %v331, 4
  %v337 = vshrl.u32 %v299, 16
  %v339 = vrot.slane %v337, 7
  %v340 = vshll.u32 %v299, 16
  %v342 = vor.u32 %v339, %v340
  %v343 = vrot.slane %v339, 4
  %v345 = vshrl.u32 %v300, 16
  %v347 = vrot.slane %v345, 7
  %v348 = vshll.u32 %v300, 16
  %v350 = vor.u32 %v347, %v348
  %v351 = vrot.slane %v347, 4
  %v353 = vshrl.u32 %v301, 16
  %v355 = vrot.slane %v353, 7
  %v356 = vshll.u32 %v301, 16
  %v358 = vor.u32 %v355, %v356
  %v359 = vrot.slane %v355, 4
  %v361 = vshrl.u32 %v302, 16
  %v363 = vrot.slane %v361, 7
  %v364 = vshll.u32 %v302, 16
  %v366 = vor.u32 %v363, %v364
  %v367 = vrot.slane %v363, 4
  %v369 = vshrl.u32 %v303, 16
  %v371 = vrot.slane %v369, 7
  %v372 = vshll.u32 %v303, 16
  %v374 = vor.u32 %v371, %v372
  %v375 = vrot.slane %v371, 4
  %v377 = vshrl.u32 %v304, 16
  %v379 = vrot.slane %v377, 7
  %v380 = vshll.u32 %v304, 16
  %v382 = vor.u32 %v379, %v380
  %v383 = vrot.slane %v379, 4
  %v385 = vshrl.u32 %v305, 16
  %v387 = vrot.slane %v385, 7
  %v388 = vshll.u32 %v305, 16
  %v390 = vor.u32 %v387, %v388
  %v391 = vrot.slane %v387, 4
  %v393 = vshrl.u32 %v306, 16
  %v395 = vrot.slane %v393, 7
  %v396 = vshll.u32 %v306, 16
  %v398 = vor.u32 %v395, %v396
  %v399 = vrot.slane %v395, 4
  %v401 = vshrl.u32 %v307, 16
  %v403 = vrot.slane %v401, 7
  %v404 = vshll.u32 %v307, 16
  %v406 = vor.u32 %v403, %v404
  %v407 = vrot.slane %v403, 4
  %v409 = vshrl.u32 %v308, 16
  %v411 = vrot.slane %v409, 7
  %v412 = vshll.u32 %v308, 16
  %v414 = vor.u32 %v411, %v412
  %v415 = vrot.slane %v411, 4
  %v417 = vshrl.u32 %v309, 16
  %v419 = vrot.slane %v417, 7
  %v420 = vshll.u32 %v309, 16
  %v422 = vor.u32 %v419, %v420
  %v423 = vrot.slane %v419, 4
  %v425 = vshrl.u32 %v310, 16
  %v427 = vrot.slane %v425, 7
  %v428 = vshll.u32 %v310, 16
  %v430 = vor.u32 %v427, %v428
  %v431 = vrot.slane %v427, 4
  %v433 = vshrl.u32 %v311, 16
  %v435 = vrot.slane %v433, 7
  %v436 = vshll.u32 %v311, 16
  %v438 = vor.u32 %v435, %v436
  %v439 = vrot.slane %v435, 4
  %s472 = scalar_lea.vmem [#allocation2], 8
  %vm473 = vcmask 1043456
  %vm474 = vmand %vm473, %vm186
  %v475 = vld [vmem:[%s472] sm:$0xf]
  %v476 = vsel %vm474, %v318, %v475
  %477 = vst [vmem:[%s472] sm:$0xf] %v476
  %v478 = vld [vmem:[%s472 + $0x4] sm:$0x1]
  %v479 = vsel %vm125, %v319, %v478
  %480 = vst [vmem:[%s472 + $0x4] sm:$0x1] %v479
  %v481 = vld [vmem:[%s472 + $0x8] sm:$0xf]
  %v482 = vsel %vm474, %v326, %v481
  %483 = vst [vmem:[%s472 + $0x8] sm:$0xf] %v482
  %v484 = vld [vmem:[%s472 + $0xc] sm:$0x1]
  %v485 = vsel %vm125, %v327, %v484
  %486 = vst [vmem:[%s472 + $0xc] sm:$0x1] %v485
  %v487 = vld [vmem:[%s472 + $0x10] sm:$0xf]
  %v488 = vsel %vm474, %v334, %v487
  %489 = vst [vmem:[%s472 + $0x10] sm:$0xf] %v488
  %v490 = vld [vmem:[%s472 + $0x14] sm:$0x1]
  %v491 = vsel %vm125, %v335, %v490
  %492 = vst [vmem:[%s472 + $0x14] sm:$0x1] %v491
  %v493 = vld [vmem:[%s472 + $0x18] sm:$0xf]
  %v494 = vsel %vm474, %v342, %v493
  %495 = vst [vmem:[%s472 + $0x18] sm:$0xf] %v494
  %v496 = vld [vmem:[%s472 + $0x1c] sm:$0x1]
  %v497 = vsel %vm125, %v343, %v496
  %498 = vst [vmem:[%s472 + $0x1c] sm:$0x1] %v497
  %v499 = vld [vmem:[%s472 + $0x20] sm:$0xf]
  %v500 = vsel %vm474, %v350, %v499
  %501 = vst [vmem:[%s472 + $0x20] sm:$0xf] %v500
  %v502 = vld [vmem:[%s472 + $0x24] sm:$0x1]
  %v503 = vsel %vm125, %v351, %v502
  %504 = vst [vmem:[%s472 + $0x24] sm:$0x1] %v503
  %v505 = vld [vmem:[%s472 + $0x28] sm:$0xf]
  %v506 = vsel %vm474, %v358, %v505
  %507 = vst [vmem:[%s472 + $0x28] sm:$0xf] %v506
  %v508 = vld [vmem:[%s472 + $0x2c] sm:$0x1]
  %v509 = vsel %vm125, %v359, %v508
  %510 = vst [vmem:[%s472 + $0x2c] sm:$0x1] %v509
  %v511 = vld [vmem:[%s472 + $0x30] sm:$0xf]
  %v512 = vsel %vm474, %v366, %v511
  %513 = vst [vmem:[%s472 + $0x30] sm:$0xf] %v512
  %v514 = vld [vmem:[%s472 + $0x34] sm:$0x1]
  %v515 = vsel %vm125, %v367, %v514
  %516 = vst [vmem:[%s472 + $0x34] sm:$0x1] %v515
  %v517 = vld [vmem:[%s472 + $0x38] sm:$0xf]
  %v518 = vsel %vm474, %v374, %v517
  %519 = vst [vmem:[%s472 + $0x38] sm:$0xf] %v518
  %v520 = vld [vmem:[%s472 + $0x3c] sm:$0x1]
  %v521 = vsel %vm125, %v375, %v520
  %522 = vst [vmem:[%s472 + $0x3c] sm:$0x1] %v521
  %v523 = vld [vmem:[%s472 + $0x50] sm:$0xf]
  %v524 = vsel %vm474, %v382, %v523
  %525 = vst [vmem:[%s472 + $0x50] sm:$0xf] %v524
  %v526 = vld [vmem:[%s472 + $0x54] sm:$0x1]
  %v527 = vsel %vm125, %v383, %v526
  %528 = vst [vmem:[%s472 + $0x54] sm:$0x1] %v527
  %v529 = vld [vmem:[%s472 + $0x58] sm:$0xf]
  %v530 = vsel %vm474, %v390, %v529
  %531 = vst [vmem:[%s472 + $0x58] sm:$0xf] %v530
  %v532 = vld [vmem:[%s472 + $0x5c] sm:$0x1]
  %v533 = vsel %vm125, %v391, %v532
  %534 = vst [vmem:[%s472 + $0x5c] sm:$0x1] %v533
  %v535 = vld [vmem:[%s472 + $0x60] sm:$0xf]
  %v536 = vsel %vm474, %v398, %v535
  %537 = vst [vmem:[%s472 + $0x60] sm:$0xf] %v536
  %v538 = vld [vmem:[%s472 + $0x64] sm:$0x1]
  %v539 = vsel %vm125, %v399, %v538
  %540 = vst [vmem:[%s472 + $0x64] sm:$0x1] %v539
  %v541 = vld [vmem:[%s472 + $0x68] sm:$0xf]
  %v542 = vsel %vm474, %v406, %v541
  %543 = vst [vmem:[%s472 + $0x68] sm:$0xf] %v542
  %v544 = vld [vmem:[%s472 + $0x6c] sm:$0x1]
  %v545 = vsel %vm125, %v407, %v544
  %546 = vst [vmem:[%s472 + $0x6c] sm:$0x1] %v545
  %v547 = vld [vmem:[%s472 + $0x70] sm:$0xf]
  %v548 = vsel %vm474, %v414, %v547
  %549 = vst [vmem:[%s472 + $0x70] sm:$0xf] %v548
  %v550 = vld [vmem:[%s472 + $0x74] sm:$0x1]
  %v551 = vsel %vm125, %v415, %v550
  %552 = vst [vmem:[%s472 + $0x74] sm:$0x1] %v551
  %v553 = vld [vmem:[%s472 + $0x78] sm:$0xf]
  %v554 = vsel %vm474, %v422, %v553
  %555 = vst [vmem:[%s472 + $0x78] sm:$0xf] %v554
  %v556 = vld [vmem:[%s472 + $0x7c] sm:$0x1]
  %v557 = vsel %vm125, %v423, %v556
  %558 = vst [vmem:[%s472 + $0x7c] sm:$0x1] %v557
  %v559 = vld [vmem:[%s472 + $0x80] sm:$0xf]
  %v560 = vsel %vm474, %v430, %v559
  %561 = vst [vmem:[%s472 + $0x80] sm:$0xf] %v560
  %v562 = vld [vmem:[%s472 + $0x84] sm:$0x1]
  %v563 = vsel %vm125, %v431, %v562
  %564 = vst [vmem:[%s472 + $0x84] sm:$0x1] %v563
  %v565 = vld [vmem:[%s472 + $0x88] sm:$0xf]
  %v566 = vsel %vm474, %v438, %v565
  %567 = vst [vmem:[%s472 + $0x88] sm:$0xf] %v566
  %v568 = vld [vmem:[%s472 + $0x8c] sm:$0x1]
  %v569 = vsel %vm125, %v439, %v568
  %570 = vst [vmem:[%s472 + $0x8c] sm:$0x1] %v569
  %v571 = vld [vmem:[#allocation2] sm:$0xf]
  %v572 = vld [vmem:[#allocation2 + $0x8] sm:$0xf]
  %v573 = vld [vmem:[#allocation2 + $0x10] sm:$0xf]
  %v574 = vld [vmem:[#allocation2 + $0x18] sm:$0xf]
  %v575 = vld [vmem:[#allocation2 + $0x20] sm:$0xf]
  %v576 = vld [vmem:[#allocation2 + $0x28] sm:$0xf]
  %v577 = vld [vmem:[#allocation2 + $0x30] sm:$0xf]
  %v578 = vld [vmem:[#allocation2 + $0x38] sm:$0xf]
  %v579 = vld [vmem:[#allocation2 + $0x40] sm:$0xf]
  %v580 = vld [vmem:[#allocation2 + $0x48] sm:$0xf]
  %v581 = vld [vmem:[#allocation2 + $0x50] sm:$0xf]
  %v582 = vld [vmem:[#allocation2 + $0x58] sm:$0xf]
  %v583 = vld [vmem:[#allocation2 + $0x60] sm:$0xf]
  %v584 = vld [vmem:[#allocation2 + $0x68] sm:$0xf]
  %v585 = vld [vmem:[#allocation2 + $0x70] sm:$0xf]
  %v586 = vld [vmem:[#allocation2 + $0x78] sm:$0xf]
  %v587 = vld [vmem:[#allocation2 + $0x80] sm:$0xf]
  %v588 = vld [vmem:[#allocation2 + $0x88] sm:$0xf]
  %v589 = vld [vmem:[#allocation2 + $0x90] sm:$0xf]
  %v590 = vld [vmem:[#allocation2 + $0x98] sm:$0xf]
  %v591 = vld [vmem:[%s3] sm:$0xf]
  %v592 = vld [vmem:[%s3 + $0x4] sm:$0xf]
  %v593 = vld [vmem:[%s3 + $0x8] sm:$0xf]
  %v594 = vld [vmem:[%s3 + $0xc] sm:$0xf]
  %v595 = vld [vmem:[%s3 + $0x10] sm:$0xf]
  %v596 = vld [vmem:[%s3 + $0x14] sm:$0xf]
  %v597 = vld [vmem:[%s3 + $0x18] sm:$0xf]
  %v598 = vld [vmem:[%s3 + $0x1c] sm:$0xf]
  %v599 = vld [vmem:[%s3 + $0x20] sm:$0xf]
  %v600 = vld [vmem:[%s3 + $0x24] sm:$0xf]
  %v601 = vld [vmem:[%s3 + $0x28] sm:$0xf]
  %v602 = vld [vmem:[%s3 + $0x2c] sm:$0xf]
  %v603 = vld [vmem:[%s3 + $0x30] sm:$0xf]
  %v604 = vld [vmem:[%s3 + $0x34] sm:$0xf]
  %v605 = vld [vmem:[%s3 + $0x38] sm:$0xf]
  %v606 = vld [vmem:[%s3 + $0x3c] sm:$0xf]
  %s607 = scalar_lea.vmem %s3, 192
  %v608 = vld [vmem:[%s607] sm:$0xf]
  %v609 = vld [vmem:[%s607 + $0x4] sm:$0xf]
  %v610 = vld [vmem:[%s607 + $0x8] sm:$0xf]
  %v611 = vld [vmem:[%s607 + $0xc] sm:$0xf]
  %v612 = vld [vmem:[%s607 + $0x10] sm:$0xf]
  %v613 = vld [vmem:[%s607 + $0x14] sm:$0xf]
  %v614 = vld [vmem:[%s607 + $0x18] sm:$0xf]
  %v615 = vld [vmem:[%s607 + $0x1c] sm:$0xf]
  %v616 = vld [vmem:[%s607 + $0x20] sm:$0xf]
  %v617 = vld [vmem:[%s607 + $0x24] sm:$0xf]
  %v618 = vld [vmem:[%s607 + $0x28] sm:$0xf]
  %v619 = vld [vmem:[%s607 + $0x2c] sm:$0xf]
  %v620 = vld [vmem:[%s607 + $0x30] sm:$0xf]
  %v621 = vld [vmem:[%s607 + $0x34] sm:$0xf]
  %v622 = vld [vmem:[%s607 + $0x38] sm:$0xf]
  %v623 = vld [vmem:[%s607 + $0x3c] sm:$0xf]
  %v640 = vunpack.c.l.b16 %v572
  %v641 = vunpack.c.l.b16 %v573
  %v642 = vunpack.c.l.b16 %v574
  %v643 = vunpack.c.l.b16 %v575
  %v644 = vunpack.c.l.b16 %v576
  %v645 = vunpack.c.l.b16 %v577
  %v646 = vunpack.c.l.b16 %v578
  %v647 = vunpack.c.l.b16 %v579
  %v648 = vunpack.c.l.b16 %v582
  %v649 = vunpack.c.l.b16 %v583
  %v650 = vunpack.c.l.b16 %v584
  %v651 = vunpack.c.l.b16 %v585
  %v652 = vunpack.c.l.b16 %v586
  %v653 = vunpack.c.l.b16 %v587
  %v654 = vunpack.c.l.b16 %v588
  %v655 = vunpack.c.l.b16 %v589
  %v656 = vpack.c.b16 %v641, %v640
  %v657 = vpack.c.b16 %v643, %v642
  %v658 = vpack.c.b16 %v645, %v644
  %v659 = vpack.c.b16 %v647, %v646
  %v660 = vpack.c.b16 %v649, %v648
  %v661 = vpack.c.b16 %v651, %v650
  %v662 = vpack.c.b16 %v653, %v652
  %v663 = vpack.c.b16 %v655, %v654
  %v688 = vunpack.c.l.b16 %v608
  %v689 = vunpack.c.l.b16 %v609
  %v690 = vunpack.c.l.b16 %v610
  %v691 = vunpack.c.l.b16 %v611
  %v692 = vunpack.c.l.b16 %v612
  %v693 = vunpack.c.l.b16 %v613
  %v694 = vunpack.c.l.b16 %v614
  %v695 = vunpack.c.l.b16 %v615
  %v696 = vunpack.c.l.b16 %v616
  %v697 = vunpack.c.l.b16 %v617
  %v698 = vunpack.c.l.b16 %v618
  %v699 = vunpack.c.l.b16 %v619
  %v700 = vunpack.c.l.b16 %v620
  %v701 = vunpack.c.l.b16 %v621
  %v702 = vunpack.c.l.b16 %v622
  %v703 = vunpack.c.l.b16 %v623
  %v704 = vpack.c.b16 %v689, %v688
  %v705 = vpack.c.b16 %v691, %v690
  %v706 = vpack.c.b16 %v693, %v692
  %v707 = vpack.c.b16 %v695, %v694
  %v708 = vpack.c.b16 %v697, %v696
  %v709 = vpack.c.b16 %v699, %v698
  %v710 = vpack.c.b16 %v701, %v700
  %v711 = vpack.c.b16 %v703, %v702
  %720 = vmatprep.subr.bf16.mxu0 0
  %721 = vmatpush1.bf16.msra.mxu0 %v711
  %722 = vmatprep.subr.bf16.mxu0 0
  %723 = vmatpush1.bf16.msra.mxu0 %v710
  %724 = vmatprep.subr.bf16.mxu0 0
  %725 = vmatpush1.bf16.msra.mxu0 %v709
  %726 = vmatprep.subr.bf16.mxu0 0
  %727 = vmatpush1.bf16.msra.mxu0 %v708
  %728 = vmatprep.subr.bf16.mxu0 0
  %729 = vmatpush1.bf16.msra.mxu0 %v707
  %730 = vmatprep.subr.bf16.mxu0 0
  %731 = vmatpush1.bf16.msra.mxu0 %v706
  %732 = vmatprep.subr.bf16.mxu0 0
  %733 = vmatpush1.bf16.msra.mxu0 %v705
  %734 = vmatprep.subr.bf16.mxu0 0
  %735 = vmatpush1.bf16.msra.mxu0 %v704
  %736 = vmatprep.subr.bf16.mxu0 0
  %737 = vmatpush2.bf16.msra.mxu0 0
  %738 = vmatprep.subr.bf16.mxu0 0
  %739 = vmatpush2.bf16.msra.mxu0 0
  %740 = vmatprep.subr.bf16.mxu0 0
  %741 = vmatpush2.bf16.msra.mxu0 0
  %742 = vmatprep.subr.bf16.mxu0 0
  %743 = vmatpush2.bf16.msra.mxu0 0
  %744 = vmatprep.subr.bf16.mxu0 0
  %745 = vmatpush2.bf16.msra.mxu0 0
  %746 = vmatprep.subr.bf16.mxu0 0
  %747 = vmatpush2.bf16.msra.mxu0 0
  %748 = vmatprep.subr.bf16.mxu0 0
  %749 = vmatpush2.bf16.msra.mxu0 0
  %750 = vmatprep.subr.bf16.mxu0 0
  %751 = vmatpush2.bf16.msra.mxu0 0
  %752 = vmatprep.mubr.bf16.mxu0 0
  %753 = vmatmul.mubr.bf16.gmra.mxu0 %v656
  %v754 = vpop.f32.mrf.mxu0
  %v755 = vadd.f32 0.0, %v754
  %v756 = vpop.f32.mrf.mxu0
  %v757 = vpop.f32.mrf.mxu0
  %v758 = vadd.f32 0.0, %v757
  %v759 = vpop.f32.mrf.mxu0
  %760 = vmatprep.mubr.bf16.mxu0 0
  %761 = vmatmul.mubr.bf16.gmra.mxu0 %v657
  %v762 = vpop.f32.mrf.mxu0
  %v763 = vadd.f32 0.0, %v762
  %v764 = vpop.f32.mrf.mxu0
  %v765 = vpop.f32.mrf.mxu0
  %v766 = vadd.f32 0.0, %v765
  %v767 = vpop.f32.mrf.mxu0
  %768 = vmatprep.mubr.bf16.mxu0 0
  %769 = vmatmul.mubr.bf16.gmra.mxu0 %v658
  %v770 = vpop.f32.mrf.mxu0
  %v771 = vadd.f32 0.0, %v770
  %v772 = vpop.f32.mrf.mxu0
  %v773 = vpop.f32.mrf.mxu0
  %v774 = vadd.f32 0.0, %v773
  %v775 = vpop.f32.mrf.mxu0
  %776 = vmatprep.mubr.bf16.mxu0 0
  %777 = vmatmul.mubr.bf16.gmra.mxu0 %v659
  %v778 = vpop.f32.mrf.mxu0
  %v779 = vadd.f32 0.0, %v778
  %v780 = vpop.f32.mrf.mxu0
  %v781 = vpop.f32.mrf.mxu0
  %v782 = vadd.f32 0.0, %v781
  %v783 = vpop.f32.mrf.mxu0
  %784 = vmatprep.mubr.bf16.mxu0 0
  %785 = vmatmul.mubr.bf16.gmra.mxu0 %v660
  %v786 = vpop.f32.mrf.mxu0
  %v787 = vadd.f32 0.0, %v786
  %v788 = vpop.f32.mrf.mxu0
  %v789 = vpop.f32.mrf.mxu0
  %v790 = vadd.f32 0.0, %v789
  %v791 = vpop.f32.mrf.mxu0
  %792 = vmatprep.mubr.bf16.mxu0 0
  %793 = vmatmul.mubr.bf16.gmra.mxu0 %v661
  %v794 = vpop.f32.mrf.mxu0
  %v795 = vadd.f32 0.0, %v794
  %v796 = vpop.f32.mrf.mxu0
  %v797 = vpop.f32.mrf.mxu0
  %v798 = vadd.f32 0.0, %v797
  %v799 = vpop.f32.mrf.mxu0
  %800 = vmatprep.mubr.bf16.mxu0 0
  %801 = vmatmul.mubr.bf16.gmra.mxu0 %v662
  %v802 = vpop.f32.mrf.mxu0
  %v803 = vadd.f32 0.0, %v802
  %v804 = vpop.f32.mrf.mxu0
  %v805 = vpop.f32.mrf.mxu0
  %v806 = vadd.f32 0.0, %v805
  %v807 = vpop.f32.mrf.mxu0
  %808 = vmatprep.mubr.bf16.mxu0 0
  %809 = vmatmul.mubr.bf16.gmra.mxu0 %v663
  %v810 = vpop.f32.mrf.mxu0
  %v811 = vadd.f32 0.0, %v810
  %v812 = vpop.f32.mrf.mxu0
  %v813 = vpop.f32.mrf.mxu0
  %v814 = vadd.f32 0.0, %v813
  %v815 = vpop.f32.mrf.mxu0
  %816 = vdwg.mxu0
  %v819 = vunpack.c.l.b16 %v571
  %v820 = vunpack.c.l.b16 %v581
  %v821 = vpack.c.b16 %v640, %v819
  %v822 = vpack.c.b16 %v642, %v641
  %v823 = vpack.c.b16 %v644, %v643
  %v824 = vpack.c.b16 %v646, %v645
  %v825 = vpack.c.b16 %v648, %v820
  %v826 = vpack.c.b16 %v650, %v649
  %v827 = vpack.c.b16 %v652, %v651
  %v828 = vpack.c.b16 %v654, %v653
  %v853 = vunpack.c.l.b16 %v591
  %v854 = vunpack.c.l.b16 %v592
  %v855 = vunpack.c.l.b16 %v593
  %v856 = vunpack.c.l.b16 %v594
  %v857 = vunpack.c.l.b16 %v595
  %v858 = vunpack.c.l.b16 %v596
  %v859 = vunpack.c.l.b16 %v597
  %v860 = vunpack.c.l.b16 %v598
  %v861 = vunpack.c.l.b16 %v599
  %v862 = vunpack.c.l.b16 %v600
  %v863 = vunpack.c.l.b16 %v601
  %v864 = vunpack.c.l.b16 %v602
  %v865 = vunpack.c.l.b16 %v603
  %v866 = vunpack.c.l.b16 %v604
  %v867 = vunpack.c.l.b16 %v605
  %v868 = vunpack.c.l.b16 %v606
  %v869 = vpack.c.b16 %v854, %v853
  %v870 = vpack.c.b16 %v856, %v855
  %v871 = vpack.c.b16 %v858, %v857
  %v872 = vpack.c.b16 %v860, %v859
  %v873 = vpack.c.b16 %v862, %v861
  %v874 = vpack.c.b16 %v864, %v863
  %v875 = vpack.c.b16 %v866, %v865
  %v876 = vpack.c.b16 %v868, %v867
  %885 = vmatprep.subr.bf16.mxu0 0
  %886 = vmatpush1.bf16.msra.mxu0 %v876
  %887 = vmatprep.subr.bf16.mxu0 0
  %888 = vmatpush1.bf16.msra.mxu0 %v875
  %889 = vmatprep.subr.bf16.mxu0 0
  %890 = vmatpush1.bf16.msra.mxu0 %v874
  %891 = vmatprep.subr.bf16.mxu0 0
  %892 = vmatpush1.bf16.msra.mxu0 %v873
  %893 = vmatprep.subr.bf16.mxu0 0
  %894 = vmatpush1.bf16.msra.mxu0 %v872
  %895 = vmatprep.subr.bf16.mxu0 0
  %896 = vmatpush1.bf16.msra.mxu0 %v871
  %897 = vmatprep.subr.bf16.mxu0 0
  %898 = vmatpush1.bf16.msra.mxu0 %v870
  %899 = vmatprep.subr.bf16.mxu0 0
  %900 = vmatpush1.bf16.msra.mxu0 %v869
  %901 = vmatprep.subr.bf16.mxu0 0
  %902 = vmatpush2.bf16.msra.mxu0 0
  %903 = vmatprep.subr.bf16.mxu0 0
  %904 = vmatpush2.bf16.msra.mxu0 0
  %905 = vmatprep.subr.bf16.mxu0 0
  %906 = vmatpush2.bf16.msra.mxu0 0
  %907 = vmatprep.subr.bf16.mxu0 0
  %908 = vmatpush2.bf16.msra.mxu0 0
  %909 = vmatprep.subr.bf16.mxu0 0
  %910 = vmatpush2.bf16.msra.mxu0 0
  %911 = vmatprep.subr.bf16.mxu0 0
  %912 = vmatpush2.bf16.msra.mxu0 0
  %913 = vmatprep.subr.bf16.mxu0 0
  %914 = vmatpush2.bf16.msra.mxu0 0
  %915 = vmatprep.subr.bf16.mxu0 0
  %916 = vmatpush2.bf16.msra.mxu0 0
  %917 = vmatprep.mubr.bf16.mxu0 0
  %918 = vmatmul.mubr.bf16.gmra.mxu0 %v821
  %v919 = vpop.f32.mrf.mxu0
  %v920 = vadd.f32 %v755, %v919
  %v921 = vpop.f32.mrf.mxu0
  %v922 = vpop.f32.mrf.mxu0
  %v923 = vadd.f32 %v758, %v922
  %v924 = vpop.f32.mrf.mxu0
  %925 = vmatprep.mubr.bf16.mxu0 0
  %926 = vmatmul.mubr.bf16.gmra.mxu0 %v822
  %v927 = vpop.f32.mrf.mxu0
  %v928 = vadd.f32 %v763, %v927
  %v929 = vpop.f32.mrf.mxu0
  %v930 = vpop.f32.mrf.mxu0
  %v931 = vadd.f32 %v766, %v930
  %v932 = vpop.f32.mrf.mxu0
  %933 = vmatprep.mubr.bf16.mxu0 0
  %934 = vmatmul.mubr.bf16.gmra.mxu0 %v823
  %v935 = vpop.f32.mrf.mxu0
  %v936 = vadd.f32 %v771, %v935
  %v937 = vpop.f32.mrf.mxu0
  %v938 = vpop.f32.mrf.mxu0
  %v939 = vadd.f32 %v774, %v938
  %v940 = vpop.f32.mrf.mxu0
  %941 = vmatprep.mubr.bf16.mxu0 0
  %942 = vmatmul.mubr.bf16.gmra.mxu0 %v824
  %v943 = vpop.f32.mrf.mxu0
  %v944 = vadd.f32 %v779, %v943
  %v945 = vpop.f32.mrf.mxu0
  %v946 = vpop.f32.mrf.mxu0
  %v947 = vadd.f32 %v782, %v946
  %v948 = vpop.f32.mrf.mxu0
  %949 = vmatprep.mubr.bf16.mxu0 0
  %950 = vmatmul.mubr.bf16.gmra.mxu0 %v825
  %v951 = vpop.f32.mrf.mxu0
  %v952 = vadd.f32 %v787, %v951
  %v953 = vpop.f32.mrf.mxu0
  %v954 = vpop.f32.mrf.mxu0
  %v955 = vadd.f32 %v790, %v954
  %v956 = vpop.f32.mrf.mxu0
  %957 = vmatprep.mubr.bf16.mxu0 0
  %958 = vmatmul.mubr.bf16.gmra.mxu0 %v826
  %v959 = vpop.f32.mrf.mxu0
  %v960 = vadd.f32 %v795, %v959
  %v961 = vpop.f32.mrf.mxu0
  %v962 = vpop.f32.mrf.mxu0
  %v963 = vadd.f32 %v798, %v962
  %v964 = vpop.f32.mrf.mxu0
  %965 = vmatprep.mubr.bf16.mxu0 0
  %966 = vmatmul.mubr.bf16.gmra.mxu0 %v827
  %v967 = vpop.f32.mrf.mxu0
  %v968 = vadd.f32 %v803, %v967
  %v969 = vpop.f32.mrf.mxu0
  %v970 = vpop.f32.mrf.mxu0
  %v971 = vadd.f32 %v806, %v970
  %v972 = vpop.f32.mrf.mxu0
  %973 = vmatprep.mubr.bf16.mxu0 0
  %974 = vmatmul.mubr.bf16.gmra.mxu0 %v828
  %v975 = vpop.f32.mrf.mxu0
  %v976 = vadd.f32 %v811, %v975
  %v977 = vpop.f32.mrf.mxu0
  %v978 = vpop.f32.mrf.mxu0
  %v979 = vadd.f32 %v814, %v978
  %v980 = vpop.f32.mrf.mxu0
  %981 = vdwg.mxu0
  %s982 = scalar_lea.vmem %s3, 384
  %v983 = vld [vmem:[%s982] sm:$0xf]
  %v984 = vld [vmem:[%s982 + $0x4] sm:$0xf]
  %v985 = vld [vmem:[%s982 + $0x8] sm:$0xf]
  %v986 = vld [vmem:[%s982 + $0xc] sm:$0xf]
  %v987 = vld [vmem:[%s982 + $0x10] sm:$0xf]
  %v988 = vld [vmem:[%s982 + $0x14] sm:$0xf]
  %v989 = vld [vmem:[%s982 + $0x18] sm:$0xf]
  %v990 = vld [vmem:[%s982 + $0x1c] sm:$0xf]
  %v991 = vld [vmem:[%s982 + $0x20] sm:$0xf]
  %v992 = vld [vmem:[%s982 + $0x24] sm:$0xf]
  %v993 = vld [vmem:[%s982 + $0x28] sm:$0xf]
  %v994 = vld [vmem:[%s982 + $0x2c] sm:$0xf]
  %v995 = vld [vmem:[%s982 + $0x30] sm:$0xf]
  %v996 = vld [vmem:[%s982 + $0x34] sm:$0xf]
  %v997 = vld [vmem:[%s982 + $0x38] sm:$0xf]
  %v998 = vld [vmem:[%s982 + $0x3c] sm:$0xf]
  %v1001 = vunpack.c.l.b16 %v580
  %v1002 = vunpack.c.l.b16 %v590
  %v1003 = vpack.c.b16 %v1001, %v647
  %v1004 = vpack.c.b16 %v1002, %v655
  %v1023 = vunpack.c.l.b16 %v983
  %v1024 = vunpack.c.l.b16 %v984
  %v1025 = vunpack.c.l.b16 %v985
  %v1026 = vunpack.c.l.b16 %v986
  %v1027 = vunpack.c.l.b16 %v987
  %v1028 = vunpack.c.l.b16 %v988
  %v1029 = vunpack.c.l.b16 %v989
  %v1030 = vunpack.c.l.b16 %v990
  %v1031 = vunpack.c.l.b16 %v991
  %v1032 = vunpack.c.l.b16 %v992
  %v1033 = vunpack.c.l.b16 %v993
  %v1034 = vunpack.c.l.b16 %v994
  %v1035 = vunpack.c.l.b16 %v995
  %v1036 = vunpack.c.l.b16 %v996
  %v1037 = vunpack.c.l.b16 %v997
  %v1038 = vunpack.c.l.b16 %v998
  %v1039 = vpack.c.b16 %v1024, %v1023
  %v1040 = vpack.c.b16 %v1026, %v1025
  %v1041 = vpack.c.b16 %v1028, %v1027
  %v1042 = vpack.c.b16 %v1030, %v1029
  %v1043 = vpack.c.b16 %v1032, %v1031
  %v1044 = vpack.c.b16 %v1034, %v1033
  %v1045 = vpack.c.b16 %v1036, %v1035
  %v1046 = vpack.c.b16 %v1038, %v1037
  %1055 = vmatprep.subr.bf16.mxu0 0
  %1056 = vmatpush1.bf16.msra.mxu0 %v1046
  %1057 = vmatprep.subr.bf16.mxu0 0
  %1058 = vmatpush1.bf16.msra.mxu0 %v1045
  %1059 = vmatprep.subr.bf16.mxu0 0
  %1060 = vmatpush1.bf16.msra.mxu0 %v1044
  %1061 = vmatprep.subr.bf16.mxu0 0
  %1062 = vmatpush1.bf16.msra.mxu0 %v1043
  %1063 = vmatprep.subr.bf16.mxu0 0
  %1064 = vmatpush1.bf16.msra.mxu0 %v1042
  %1065 = vmatprep.subr.bf16.mxu0 0
  %1066 = vmatpush1.bf16.msra.mxu0 %v1041
  %1067 = vmatprep.subr.bf16.mxu0 0
  %1068 = vmatpush1.bf16.msra.mxu0 %v1040
  %1069 = vmatprep.subr.bf16.mxu0 0
  %1070 = vmatpush1.bf16.msra.mxu0 %v1039
  %1071 = vmatprep.subr.bf16.mxu0 0
  %1072 = vmatpush2.bf16.msra.mxu0 0
  %1073 = vmatprep.subr.bf16.mxu0 0
  %1074 = vmatpush2.bf16.msra.mxu0 0
  %1075 = vmatprep.subr.bf16.mxu0 0
  %1076 = vmatpush2.bf16.msra.mxu0 0
  %1077 = vmatprep.subr.bf16.mxu0 0
  %1078 = vmatpush2.bf16.msra.mxu0 0
  %1079 = vmatprep.subr.bf16.mxu0 0
  %1080 = vmatpush2.bf16.msra.mxu0 0
  %1081 = vmatprep.subr.bf16.mxu0 0
  %1082 = vmatpush2.bf16.msra.mxu0 0
  %1083 = vmatprep.subr.bf16.mxu0 0
  %1084 = vmatpush2.bf16.msra.mxu0 0
  %1085 = vmatprep.subr.bf16.mxu0 0
  %1086 = vmatpush2.bf16.msra.mxu0 0
  %1087 = vmatprep.mubr.bf16.mxu0 0
  %1088 = vmatmul.mubr.bf16.gmra.mxu0 %v822
  %v1089 = vpop.f32.mrf.mxu0
  %v1090 = vadd.f32 0.0, %v1089
  %v1091 = vpop.f32.mrf.mxu0
  %v1092 = vpop.f32.mrf.mxu0
  %v1093 = vadd.f32 0.0, %v1092
  %v1094 = vpop.f32.mrf.mxu0
  %1095 = vmatprep.mubr.bf16.mxu0 0
  %1096 = vmatmul.mubr.bf16.gmra.mxu0 %v823
  %v1097 = vpop.f32.mrf.mxu0
  %v1098 = vadd.f32 0.0, %v1097
  %v1099 = vpop.f32.mrf.mxu0
  %v1100 = vpop.f32.mrf.mxu0
  %v1101 = vadd.f32 0.0, %v1100
  %v1102 = vpop.f32.mrf.mxu0
  %1103 = vmatprep.mubr.bf16.mxu0 0
  %1104 = vmatmul.mubr.bf16.gmra.mxu0 %v824
  %v1105 = vpop.f32.mrf.mxu0
  %v1106 = vadd.f32 0.0, %v1105
  %v1107 = vpop.f32.mrf.mxu0
  %v1108 = vpop.f32.mrf.mxu0
  %v1109 = vadd.f32 0.0, %v1108
  %v1110 = vpop.f32.mrf.mxu0
  %1111 = vmatprep.mubr.bf16.mxu0 0
  %1112 = vmatmul.mubr.bf16.gmra.mxu0 %v1003
  %v1113 = vpop.f32.mrf.mxu0
  %v1114 = vadd.f32 0.0, %v1113
  %v1115 = vpop.f32.mrf.mxu0
  %v1116 = vpop.f32.mrf.mxu0
  %v1117 = vadd.f32 0.0, %v1116
  %v1118 = vpop.f32.mrf.mxu0
  %1119 = vmatprep.mubr.bf16.mxu0 0
  %1120 = vmatmul.mubr.bf16.gmra.mxu0 %v826
  %v1121 = vpop.f32.mrf.mxu0
  %v1122 = vadd.f32 0.0, %v1121
  %v1123 = vpop.f32.mrf.mxu0
  %v1124 = vpop.f32.mrf.mxu0
  %v1125 = vadd.f32 0.0, %v1124
  %v1126 = vpop.f32.mrf.mxu0
  %1127 = vmatprep.mubr.bf16.mxu0 0
  %1128 = vmatmul.mubr.bf16.gmra.mxu0 %v827
  %v1129 = vpop.f32.mrf.mxu0
  %v1130 = vadd.f32 0.0, %v1129
  %v1131 = vpop.f32.mrf.mxu0
  %v1132 = vpop.f32.mrf.mxu0
  %v1133 = vadd.f32 0.0, %v1132
  %v1134 = vpop.f32.mrf.mxu0
  %1135 = vmatprep.mubr.bf16.mxu0 0
  %1136 = vmatmul.mubr.bf16.gmra.mxu0 %v828
  %v1137 = vpop.f32.mrf.mxu0
  %v1138 = vadd.f32 0.0, %v1137
  %v1139 = vpop.f32.mrf.mxu0
  %v1140 = vpop.f32.mrf.mxu0
  %v1141 = vadd.f32 0.0, %v1140
  %v1142 = vpop.f32.mrf.mxu0
  %1143 = vmatprep.mubr.bf16.mxu0 0
  %1144 = vmatmul.mubr.bf16.gmra.mxu0 %v1004
  %v1145 = vpop.f32.mrf.mxu0
  %v1146 = vadd.f32 0.0, %v1145
  %v1147 = vpop.f32.mrf.mxu0
  %v1148 = vpop.f32.mrf.mxu0
  %v1149 = vadd.f32 0.0, %v1148
  %v1150 = vpop.f32.mrf.mxu0
  %1151 = vdwg.mxu0
  %v1152 = vadd.f32 %v920, %v1090
  %v1153 = vadd.f32 %v923, %v1093
  %v1154 = vadd.f32 %v928, %v1098
  %v1155 = vadd.f32 %v931, %v1101
  %v1156 = vadd.f32 %v936, %v1106
  %v1157 = vadd.f32 %v939, %v1109
  %v1158 = vadd.f32 %v944, %v1114
  %v1159 = vadd.f32 %v947, %v1117
  %v1160 = vadd.f32 %v952, %v1122
  %v1161 = vadd.f32 %v955, %v1125
  %v1162 = vadd.f32 %v960, %v1130
  %v1163 = vadd.f32 %v963, %v1133
  %v1164 = vadd.f32 %v968, %v1138
  %v1165 = vadd.f32 %v971, %v1141
  %v1166 = vadd.f32 %v976, %v1146
  %v1167 = vadd.f32 %v979, %v1149
  %v1168 = vld [vmem:[#allocation2] sm:$0xf]
  %v1169 = vld [vmem:[#allocation2 + $0x4] sm:$0x1]
  %v1170 = vld [vmem:[#allocation2 + $0x8] sm:$0xf]
  %v1171 = vld [vmem:[#allocation2 + $0xc] sm:$0x1]
  %v1172 = vld [vmem:[#allocation2 + $0x10] sm:$0xf]
  %v1173 = vld [vmem:[#allocation2 + $0x14] sm:$0x1]
  %v1174 = vld [vmem:[#allocation2 + $0x18] sm:$0xf]
  %v1175 = vld [vmem:[#allocation2 + $0x1c] sm:$0x1]
  %v1176 = vld [vmem:[#allocation2 + $0x20] sm:$0xf]
  %v1177 = vld [vmem:[#allocation2 + $0x24] sm:$0x1]
  %v1178 = vld [vmem:[#allocation2 + $0x28] sm:$0xf]
  %v1179 = vld [vmem:[#allocation2 + $0x2c] sm:$0x1]
  %v1180 = vld [vmem:[#allocation2 + $0x30] sm:$0xf]
  %v1181 = vld [vmem:[#allocation2 + $0x34] sm:$0x1]
  %v1182 = vld [vmem:[#allocation2 + $0x38] sm:$0xf]
  %v1183 = vld [vmem:[#allocation2 + $0x3c] sm:$0x1]
  %v1184 = vld [vmem:[#allocation2 + $0x40] sm:$0xf]
  %v1185 = vld [vmem:[#allocation2 + $0x44] sm:$0x1]
  %v1186 = vld [vmem:[#allocation2 + $0x48] sm:$0xf]
  %v1187 = vld [vmem:[#allocation2 + $0x4c] sm:$0x1]
  %v1188 = vld [vmem:[#allocation2 + $0x50] sm:$0xf]
  %v1189 = vld [vmem:[#allocation2 + $0x54] sm:$0x1]
  %v1190 = vld [vmem:[#allocation2 + $0x58] sm:$0xf]
  %v1191 = vld [vmem:[#allocation2 + $0x5c] sm:$0x1]
  %v1192 = vld [vmem:[#allocation2 + $0x60] sm:$0xf]
  %v1193 = vld [vmem:[#allocation2 + $0x64] sm:$0x1]
  %v1194 = vld [vmem:[#allocation2 + $0x68] sm:$0xf]
  %v1195 = vld [vmem:[#allocation2 + $0x6c] sm:$0x1]
  %v1196 = vld [vmem:[#allocation2 + $0x70] sm:$0xf]
  %v1197 = vld [vmem:[#allocation2 + $0x74] sm:$0x1]
  %v1198 = vld [vmem:[#allocation2 + $0x78] sm:$0xf]
  %v1199 = vld [vmem:[#allocation2 + $0x7c] sm:$0x1]
  %v1200 = vld [vmem:[#allocation2 + $0x80] sm:$0xf]
  %v1201 = vld [vmem:[#allocation2 + $0x84] sm:$0x1]
  %v1202 = vld [vmem:[#allocation2 + $0x88] sm:$0xf]
  %v1203 = vld [vmem:[#allocation2 + $0x8c] sm:$0x1]
  %v1204 = vld [vmem:[#allocation2 + $0x90] sm:$0xf]
  %v1205 = vld [vmem:[#allocation2 + $0x94] sm:$0x1]
  %v1206 = vld [vmem:[#allocation2 + $0x98] sm:$0xf]
  %v1207 = vld [vmem:[#allocation2 + $0x9c] sm:$0x1]
  %vm1208 = vsmask.f32 3328
  %vm1209 = vsmask.f32 7440
  %vm1210 = vmor %vm1208, %vm1209
  %v1212 = vshrl.u32 %v1168, 16
  %v1214 = vrot.slane %v1212, 4
  %v1215 = vshll.u32 %v1168, 16
  %v1217 = vrot.slane %v1215, 5
  %v1218 = vor.u32 %v1214, %v1217
  %v1219 = vrot.slane %v1218, 4
  %v1221 = vshll.u32 %v1169, 16
  %v1223 = vrot.slane %v1221, 5
  %v1224 = vsel %vm1210, %v1219, %v1223
  %v1226 = vshrl.u32 %v1170, 16
  %v1228 = vrot.slane %v1226, 4
  %v1229 = vshll.u32 %v1170, 16
  %v1231 = vrot.slane %v1229, 5
  %v1232 = vor.u32 %v1228, %v1231
  %v1233 = vrot.slane %v1232, 4
  %v1235 = vshll.u32 %v1171, 16
  %v1237 = vrot.slane %v1235, 5
  %v1238 = vsel %vm1210, %v1233, %v1237
  %v1240 = vshrl.u32 %v1172, 16
  %v1242 = vrot.slane %v1240, 4
  %v1243 = vshll.u32 %v1172, 16
  %v1245 = vrot.slane %v1243, 5
  %v1246 = vor.u32 %v1242, %v1245
  %v1247 = vrot.slane %v1246, 4
  %v1249 = vshll.u32 %v1173, 16
  %v1251 = vrot.slane %v1249, 5
  %v1252 = vsel %vm1210, %v1247, %v1251
  %v1254 = vshrl.u32 %v1174, 16
  %v1256 = vrot.slane %v1254, 4
  %v1257 = vshll.u32 %v1174, 16
  %v1259 = vrot.slane %v1257, 5
  %v1260 = vor.u32 %v1256, %v1259
  %v1261 = vrot.slane %v1260, 4
  %v1263 = vshll.u32 %v1175, 16
  %v1265 = vrot.slane %v1263, 5
  %v1266 = vsel %vm1210, %v1261, %v1265
  %v1268 = vshrl.u32 %v1176, 16
  %v1270 = vrot.slane %v1268, 4
  %v1271 = vshll.u32 %v1176, 16
  %v1273 = vrot.slane %v1271, 5
  %v1274 = vor.u32 %v1270, %v1273
  %v1275 = vrot.slane %v1274, 4
  %v1277 = vshll.u32 %v1177, 16
  %v1279 = vrot.slane %v1277, 5
  %v1280 = vsel %vm1210, %v1275, %v1279
  %v1282 = vshrl.u32 %v1178, 16
  %v1284 = vrot.slane %v1282, 4
  %v1285 = vshll.u32 %v1178, 16
  %v1287 = vrot.slane %v1285, 5
  %v1288 = vor.u32 %v1284, %v1287
  %v1289 = vrot.slane %v1288, 4
  %v1291 = vshll.u32 %v1179, 16
  %v1293 = vrot.slane %v1291, 5
  %v1294 = vsel %vm1210, %v1289, %v1293
  %v1296 = vshrl.u32 %v1180, 16
  %v1298 = vrot.slane %v1296, 4
  %v1299 = vshll.u32 %v1180, 16
  %v1301 = vrot.slane %v1299, 5
  %v1302 = vor.u32 %v1298, %v1301
  %v1303 = vrot.slane %v1302, 4
  %v1305 = vshll.u32 %v1181, 16
  %v1307 = vrot.slane %v1305, 5
  %v1308 = vsel %vm1210, %v1303, %v1307
  %v1310 = vshrl.u32 %v1182, 16
  %v1312 = vrot.slane %v1310, 4
  %v1313 = vshll.u32 %v1182, 16
  %v1315 = vrot.slane %v1313, 5
  %v1316 = vor.u32 %v1312, %v1315
  %v1317 = vrot.slane %v1316, 4
  %v1319 = vshll.u32 %v1183, 16
  %v1321 = vrot.slane %v1319, 5
  %v1322 = vsel %vm1210, %v1317, %v1321
  %v1324 = vshrl.u32 %v1188, 16
  %v1326 = vrot.slane %v1324, 4
  %v1327 = vshll.u32 %v1188, 16
  %v1329 = vrot.slane %v1327, 5
  %v1330 = vor.u32 %v1326, %v1329
  %v1331 = vrot.slane %v1330, 4
  %v1333 = vshll.u32 %v1189, 16
  %v1335 = vrot.slane %v1333, 5
  %v1336 = vsel %vm1210, %v1331, %v1335
  %v1338 = vshrl.u32 %v1190, 16
  %v1340 = vrot.slane %v1338, 4
  %v1341 = vshll.u32 %v1190, 16
  %v1343 = vrot.slane %v1341, 5
  %v1344 = vor.u32 %v1340, %v1343
  %v1345 = vrot.slane %v1344, 4
  %v1347 = vshll.u32 %v1191, 16
  %v1349 = vrot.slane %v1347, 5
  %v1350 = vsel %vm1210, %v1345, %v1349
  %v1352 = vshrl.u32 %v1192, 16
  %v1354 = vrot.slane %v1352, 4
  %v1355 = vshll.u32 %v1192, 16
  %v1357 = vrot.slane %v1355, 5
  %v1358 = vor.u32 %v1354, %v1357
  %v1359 = vrot.slane %v1358, 4
  %v1361 = vshll.u32 %v1193, 16
  %v1363 = vrot.slane %v1361, 5
  %v1364 = vsel %vm1210, %v1359, %v1363
  %v1366 = vshrl.u32 %v1194, 16
  %v1368 = vrot.slane %v1366, 4
  %v1369 = vshll.u32 %v1194, 16
  %v1371 = vrot.slane %v1369, 5
  %v1372 = vor.u32 %v1368, %v1371
  %v1373 = vrot.slane %v1372, 4
  %v1375 = vshll.u32 %v1195, 16
  %v1377 = vrot.slane %v1375, 5
  %v1378 = vsel %vm1210, %v1373, %v1377
  %v1380 = vshrl.u32 %v1196, 16
  %v1382 = vrot.slane %v1380, 4
  %v1383 = vshll.u32 %v1196, 16
  %v1385 = vrot.slane %v1383, 5
  %v1386 = vor.u32 %v1382, %v1385
  %v1387 = vrot.slane %v1386, 4
  %v1389 = vshll.u32 %v1197, 16
  %v1391 = vrot.slane %v1389, 5
  %v1392 = vsel %vm1210, %v1387, %v1391
  %v1394 = vshrl.u32 %v1198, 16
  %v1396 = vrot.slane %v1394, 4
  %v1397 = vshll.u32 %v1198, 16
  %v1399 = vrot.slane %v1397, 5
  %v1400 = vor.u32 %v1396, %v1399
  %v1401 = vrot.slane %v1400, 4
  %v1403 = vshll.u32 %v1199, 16
  %v1405 = vrot.slane %v1403, 5
  %v1406 = vsel %vm1210, %v1401, %v1405
  %v1408 = vshrl.u32 %v1200, 16
  %v1410 = vrot.slane %v1408, 4
  %v1411 = vshll.u32 %v1200, 16
  %v1413 = vrot.slane %v1411, 5
  %v1414 = vor.u32 %v1410, %v1413
  %v1415 = vrot.slane %v1414, 4
  %v1417 = vshll.u32 %v1201, 16
  %v1419 = vrot.slane %v1417, 5
  %v1420 = vsel %vm1210, %v1415, %v1419
  %v1422 = vshrl.u32 %v1202, 16
  %v1424 = vrot.slane %v1422, 4
  %v1425 = vshll.u32 %v1202, 16
  %v1427 = vrot.slane %v1425, 5
  %v1428 = vor.u32 %v1424, %v1427
  %v1429 = vrot.slane %v1428, 4
  %v1431 = vshll.u32 %v1203, 16
  %v1433 = vrot.slane %v1431, 5
  %v1434 = vsel %vm1210, %v1429, %v1433
  %s1435 = scalar_lea.vmem %s3, 64
  %v1436 = vld [vmem:[%s1435] sm:$0xf]
  %v1437 = vld [vmem:[%s1435 + $0x4] sm:$0xf]
  %v1438 = vld [vmem:[%s1435 + $0x8] sm:$0xf]
  %v1439 = vld [vmem:[%s1435 + $0xc] sm:$0xf]
  %v1440 = vld [vmem:[%s1435 + $0x10] sm:$0xf]
  %v1441 = vld [vmem:[%s1435 + $0x14] sm:$0xf]
  %v1442 = vld [vmem:[%s1435 + $0x18] sm:$0xf]
  %v1443 = vld [vmem:[%s1435 + $0x1c] sm:$0xf]
  %v1444 = vld [vmem:[%s1435 + $0x20] sm:$0xf]
  %v1445 = vld [vmem:[%s1435 + $0x24] sm:$0xf]
  %v1446 = vld [vmem:[%s1435 + $0x28] sm:$0xf]
  %v1447 = vld [vmem:[%s1435 + $0x2c] sm:$0xf]
  %v1448 = vld [vmem:[%s1435 + $0x30] sm:$0xf]
  %v1449 = vld [vmem:[%s1435 + $0x34] sm:$0xf]
  %v1450 = vld [vmem:[%s1435 + $0x38] sm:$0xf]
  %v1451 = vld [vmem:[%s1435 + $0x3c] sm:$0xf]
  %v1452 = vunpack.c.l.b16 %v1224
  %v1453 = vunpack.c.l.b16 %v1238
  %v1454 = vunpack.c.l.b16 %v1252
  %v1455 = vunpack.c.l.b16 %v1266
  %v1456 = vunpack.c.l.b16 %v1280
  %v1457 = vunpack.c.l.b16 %v1294
  %v1458 = vunpack.c.l.b16 %v1308
  %v1459 = vunpack.c.l.b16 %v1322
  %v1460 = vunpack.c.l.b16 %v1336
  %v1461 = vunpack.c.l.b16 %v1350
  %v1462 = vunpack.c.l.b16 %v1364
  %v1463 = vunpack.c.l.b16 %v1378
  %v1464 = vunpack.c.l.b16 %v1392
  %v1465 = vunpack.c.l.b16 %v1406
  %v1466 = vunpack.c.l.b16 %v1420
  %v1467 = vunpack.c.l.b16 %v1434
  %v1468 = vpack.c.b16 %v1453, %v1452
  %v1469 = vpack.c.b16 %v1455, %v1454
  %v1470 = vpack.c.b16 %v1457, %v1456
  %v1471 = vpack.c.b16 %v1459, %v1458
  %v1472 = vpack.c.b16 %v1461, %v1460
  %v1473 = vpack.c.b16 %v1463, %v1462
  %v1474 = vpack.c.b16 %v1465, %v1464
  %v1475 = vpack.c.b16 %v1467, %v1466
  %v1500 = vunpack.c.l.b16 %v1436
  %v1501 = vunpack.c.l.b16 %v1437
  %v1502 = vunpack.c.l.b16 %v1438
  %v1503 = vunpack.c.l.b16 %v1439
  %v1504 = vunpack.c.l.b16 %v1440
  %v1505 = vunpack.c.l.b16 %v1441
  %v1506 = vunpack.c.l.b16 %v1442
  %v1507 = vunpack.c.l.b16 %v1443
  %v1508 = vunpack.c.l.b16 %v1444
  %v1509 = vunpack.c.l.b16 %v1445
  %v1510 = vunpack.c.l.b16 %v1446
  %v1511 = vunpack.c.l.b16 %v1447
  %v1512 = vunpack.c.l.b16 %v1448
  %v1513 = vunpack.c.l.b16 %v1449
  %v1514 = vunpack.c.l.b16 %v1450
  %v1515 = vunpack.c.l.b16 %v1451
  %v1516 = vpack.c.b16 %v1501, %v1500
  %v1517 = vpack.c.b16 %v1503, %v1502
  %v1518 = vpack.c.b16 %v1505, %v1504
  %v1519 = vpack.c.b16 %v1507, %v1506
  %v1520 = vpack.c.b16 %v1509, %v1508
  %v1521 = vpack.c.b16 %v1511, %v1510
  %v1522 = vpack.c.b16 %v1513, %v1512
  %v1523 = vpack.c.b16 %v1515, %v1514
  %1532 = vmatprep.subr.bf16.mxu0 0
  %1533 = vmatpush1.bf16.msra.mxu0 %v1523
  %1534 = vmatprep.subr.bf16.mxu0 0
  %1535 = vmatpush1.bf16.msra.mxu0 %v1522
  %1536 = vmatprep.subr.bf16.mxu0 0
  %1537 = vmatpush1.bf16.msra.mxu0 %v1521
  %1538 = vmatprep.subr.bf16.mxu0 0
  %1539 = vmatpush1.bf16.msra.mxu0 %v1520
  %1540 = vmatprep.subr.bf16.mxu0 0
  %1541 = vmatpush1.bf16.msra.mxu0 %v1519
  %1542 = vmatprep.subr.bf16.mxu0 0
  %1543 = vmatpush1.bf16.msra.mxu0 %v1518
  %1544 = vmatprep.subr.bf16.mxu0 0
  %1545 = vmatpush1.bf16.msra.mxu0 %v1517
  %1546 = vmatprep.subr.bf16.mxu0 0
  %1547 = vmatpush1.bf16.msra.mxu0 %v1516
  %1548 = vmatprep.subr.bf16.mxu0 0
  %1549 = vmatpush2.bf16.msra.mxu0 0
  %1550 = vmatprep.subr.bf16.mxu0 0
  %1551 = vmatpush2.bf16.msra.mxu0 0
  %1552 = vmatprep.subr.bf16.mxu0 0
  %1553 = vmatpush2.bf16.msra.mxu0 0
  %1554 = vmatprep.subr.bf16.mxu0 0
  %1555 = vmatpush2.bf16.msra.mxu0 0
  %1556 = vmatprep.subr.bf16.mxu0 0
  %1557 = vmatpush2.bf16.msra.mxu0 0
  %1558 = vmatprep.subr.bf16.mxu0 0
  %1559 = vmatpush2.bf16.msra.mxu0 0
  %1560 = vmatprep.subr.bf16.mxu0 0
  %1561 = vmatpush2.bf16.msra.mxu0 0
  %1562 = vmatprep.subr.bf16.mxu0 0
  %1563 = vmatpush2.bf16.msra.mxu0 0
  %1564 = vmatprep.mubr.bf16.mxu0 0
  %1565 = vmatmul.mubr.bf16.gmra.mxu0 %v1468
  %v1566 = vpop.f32.mrf.mxu0
  %v1567 = vadd.f32 0.0, %v1566
  %v1568 = vpop.f32.mrf.mxu0
  %v1569 = vpop.f32.mrf.mxu0
  %v1570 = vadd.f32 0.0, %v1569
  %v1571 = vpop.f32.mrf.mxu0
  %1572 = vmatprep.mubr.bf16.mxu0 0
  %1573 = vmatmul.mubr.bf16.gmra.mxu0 %v1469
  %v1574 = vpop.f32.mrf.mxu0
  %v1575 = vadd.f32 0.0, %v1574
  %v1576 = vpop.f32.mrf.mxu0
  %v1577 = vpop.f32.mrf.mxu0
  %v1578 = vadd.f32 0.0, %v1577
  %v1579 = vpop.f32.mrf.mxu0
  %1580 = vmatprep.mubr.bf16.mxu0 0
  %1581 = vmatmul.mubr.bf16.gmra.mxu0 %v1470
  %v1582 = vpop.f32.mrf.mxu0
  %v1583 = vadd.f32 0.0, %v1582
  %v1584 = vpop.f32.mrf.mxu0
  %v1585 = vpop.f32.mrf.mxu0
  %v1586 = vadd.f32 0.0, %v1585
  %v1587 = vpop.f32.mrf.mxu0
  %1588 = vmatprep.mubr.bf16.mxu0 0
  %1589 = vmatmul.mubr.bf16.gmra.mxu0 %v1471
  %v1590 = vpop.f32.mrf.mxu0
  %v1591 = vadd.f32 0.0, %v1590
  %v1592 = vpop.f32.mrf.mxu0
  %v1593 = vpop.f32.mrf.mxu0
  %v1594 = vadd.f32 0.0, %v1593
  %v1595 = vpop.f32.mrf.mxu0
  %1596 = vmatprep.mubr.bf16.mxu0 0
  %1597 = vmatmul.mubr.bf16.gmra.mxu0 %v1472
  %v1598 = vpop.f32.mrf.mxu0
  %v1599 = vadd.f32 0.0, %v1598
  %v1600 = vpop.f32.mrf.mxu0
  %v1601 = vpop.f32.mrf.mxu0
  %v1602 = vadd.f32 0.0, %v1601
  %v1603 = vpop.f32.mrf.mxu0
  %1604 = vmatprep.mubr.bf16.mxu0 0
  %1605 = vmatmul.mubr.bf16.gmra.mxu0 %v1473
  %v1606 = vpop.f32.mrf.mxu0
  %v1607 = vadd.f32 0.0, %v1606
  %v1608 = vpop.f32.mrf.mxu0
  %v1609 = vpop.f32.mrf.mxu0
  %v1610 = vadd.f32 0.0, %v1609
  %v1611 = vpop.f32.mrf.mxu0
  %1612 = vmatprep.mubr.bf16.mxu0 0
  %1613 = vmatmul.mubr.bf16.gmra.mxu0 %v1474
  %v1614 = vpop.f32.mrf.mxu0
  %v1615 = vadd.f32 0.0, %v1614
  %v1616 = vpop.f32.mrf.mxu0
  %v1617 = vpop.f32.mrf.mxu0
  %v1618 = vadd.f32 0.0, %v1617
  %v1619 = vpop.f32.mrf.mxu0
  %1620 = vmatprep.mubr.bf16.mxu0 0
  %1621 = vmatmul.mubr.bf16.gmra.mxu0 %v1475
  %v1622 = vpop.f32.mrf.mxu0
  %v1623 = vadd.f32 0.0, %v1622
  %v1624 = vpop.f32.mrf.mxu0
  %v1625 = vpop.f32.mrf.mxu0
  %v1626 = vadd.f32 0.0, %v1625
  %v1627 = vpop.f32.mrf.mxu0
  %1628 = vdwg.mxu0
  %v1629 = vadd.f32 %v1152, %v1567
  %v1630 = vadd.f32 %v1153, %v1570
  %v1631 = vadd.f32 %v1154, %v1575
  %v1632 = vadd.f32 %v1155, %v1578
  %v1633 = vadd.f32 %v1156, %v1583
  %v1634 = vadd.f32 %v1157, %v1586
  %v1635 = vadd.f32 %v1158, %v1591
  %v1636 = vadd.f32 %v1159, %v1594
  %v1637 = vadd.f32 %v1160, %v1599
  %v1638 = vadd.f32 %v1161, %v1602
  %v1639 = vadd.f32 %v1162, %v1607
  %v1640 = vadd.f32 %v1163, %v1610
  %v1641 = vadd.f32 %v1164, %v1615
  %v1642 = vadd.f32 %v1165, %v1618
  %v1643 = vadd.f32 %v1166, %v1623
  %v1644 = vadd.f32 %v1167, %v1626
  %v1646 = vshrl.u32 %v1184, 16
  %v1648 = vrot.slane %v1646, 4
  %v1649 = vshll.u32 %v1184, 16
  %v1651 = vrot.slane %v1649, 5
  %v1652 = vor.u32 %v1648, %v1651
  %v1653 = vrot.slane %v1652, 4
  %v1655 = vshll.u32 %v1185, 16
  %v1657 = vrot.slane %v1655, 5
  %v1658 = vsel %vm1210, %v1653, %v1657
  %v1660 = vshrl.u32 %v1204, 16
  %v1662 = vrot.slane %v1660, 4
  %v1663 = vshll.u32 %v1204, 16
  %v1665 = vrot.slane %v1663, 5
  %v1666 = vor.u32 %v1662, %v1665
  %v1667 = vrot.slane %v1666, 4
  %v1669 = vshll.u32 %v1205, 16
  %v1671 = vrot.slane %v1669, 5
  %v1672 = vsel %vm1210, %v1667, %v1671
  %s1673 = scalar_lea.vmem %s3, 256
  %v1674 = vld [vmem:[%s1673] sm:$0xf]
  %v1675 = vld [vmem:[%s1673 + $0x4] sm:$0xf]
  %v1676 = vld [vmem:[%s1673 + $0x8] sm:$0xf]
  %v1677 = vld [vmem:[%s1673 + $0xc] sm:$0xf]
  %v1678 = vld [vmem:[%s1673 + $0x10] sm:$0xf]
  %v1679 = vld [vmem:[%s1673 + $0x14] sm:$0xf]
  %v1680 = vld [vmem:[%s1673 + $0x18] sm:$0xf]
  %v1681 = vld [vmem:[%s1673 + $0x1c] sm:$0xf]
  %v1682 = vld [vmem:[%s1673 + $0x20] sm:$0xf]
  %v1683 = vld [vmem:[%s1673 + $0x24] sm:$0xf]
  %v1684 = vld [vmem:[%s1673 + $0x28] sm:$0xf]
  %v1685 = vld [vmem:[%s1673 + $0x2c] sm:$0xf]
  %v1686 = vld [vmem:[%s1673 + $0x30] sm:$0xf]
  %v1687 = vld [vmem:[%s1673 + $0x34] sm:$0xf]
  %v1688 = vld [vmem:[%s1673 + $0x38] sm:$0xf]
  %v1689 = vld [vmem:[%s1673 + $0x3c] sm:$0xf]
  %v1690 = vunpack.c.l.b16 %v1658
  %v1691 = vunpack.c.l.b16 %v1672
  %v1692 = vpack.c.b16 %v1454, %v1453
  %v1693 = vpack.c.b16 %v1456, %v1455
  %v1694 = vpack.c.b16 %v1458, %v1457
  %v1695 = vpack.c.b16 %v1690, %v1459
  %v1696 = vpack.c.b16 %v1462, %v1461
  %v1697 = vpack.c.b16 %v1464, %v1463
  %v1698 = vpack.c.b16 %v1466, %v1465
  %v1699 = vpack.c.b16 %v1691, %v1467
  %v1724 = vunpack.c.l.b16 %v1674
  %v1725 = vunpack.c.l.b16 %v1675
  %v1726 = vunpack.c.l.b16 %v1676
  %v1727 = vunpack.c.l.b16 %v1677
  %v1728 = vunpack.c.l.b16 %v1678
  %v1729 = vunpack.c.l.b16 %v1679
  %v1730 = vunpack.c.l.b16 %v1680
  %v1731 = vunpack.c.l.b16 %v1681
  %v1732 = vunpack.c.l.b16 %v1682
  %v1733 = vunpack.c.l.b16 %v1683
  %v1734 = vunpack.c.l.b16 %v1684
  %v1735 = vunpack.c.l.b16 %v1685
  %v1736 = vunpack.c.l.b16 %v1686
  %v1737 = vunpack.c.l.b16 %v1687
  %v1738 = vunpack.c.l.b16 %v1688
  %v1739 = vunpack.c.l.b16 %v1689
  %v1740 = vpack.c.b16 %v1725, %v1724
  %v1741 = vpack.c.b16 %v1727, %v1726
  %v1742 = vpack.c.b16 %v1729, %v1728
  %v1743 = vpack.c.b16 %v1731, %v1730
  %v1744 = vpack.c.b16 %v1733, %v1732
  %v1745 = vpack.c.b16 %v1735, %v1734
  %v1746 = vpack.c.b16 %v1737, %v1736
  %v1747 = vpack.c.b16 %v1739, %v1738
  %1756 = vmatprep.subr.bf16.mxu0 0
  %1757 = vmatpush1.bf16.msra.mxu0 %v1747
  %1758 = vmatprep.subr.bf16.mxu0 0
  %1759 = vmatpush1.bf16.msra.mxu0 %v1746
  %1760 = vmatprep.subr.bf16.mxu0 0
  %1761 = vmatpush1.bf16.msra.mxu0 %v1745
  %1762 = vmatprep.subr.bf16.mxu0 0
  %1763 = vmatpush1.bf16.msra.mxu0 %v1744
  %1764 = vmatprep.subr.bf16.mxu0 0
  %1765 = vmatpush1.bf16.msra.mxu0 %v1743
  %1766 = vmatprep.subr.bf16.mxu0 0
  %1767 = vmatpush1.bf16.msra.mxu0 %v1742
  %1768 = vmatprep.subr.bf16.mxu0 0
  %1769 = vmatpush1.bf16.msra.mxu0 %v1741
  %1770 = vmatprep.subr.bf16.mxu0 0
  %1771 = vmatpush1.bf16.msra.mxu0 %v1740
  %1772 = vmatprep.subr.bf16.mxu0 0
  %1773 = vmatpush2.bf16.msra.mxu0 0
  %1774 = vmatprep.subr.bf16.mxu0 0
  %1775 = vmatpush2.bf16.msra.mxu0 0
  %1776 = vmatprep.subr.bf16.mxu0 0
  %1777 = vmatpush2.bf16.msra.mxu0 0
  %1778 = vmatprep.subr.bf16.mxu0 0
  %1779 = vmatpush2.bf16.msra.mxu0 0
  %1780 = vmatprep.subr.bf16.mxu0 0
  %1781 = vmatpush2.bf16.msra.mxu0 0
  %1782 = vmatprep.subr.bf16.mxu0 0
  %1783 = vmatpush2.bf16.msra.mxu0 0
  %1784 = vmatprep.subr.bf16.mxu0 0
  %1785 = vmatpush2.bf16.msra.mxu0 0
  %1786 = vmatprep.subr.bf16.mxu0 0
  %1787 = vmatpush2.bf16.msra.mxu0 0
  %1788 = vmatprep.mubr.bf16.mxu0 0
  %1789 = vmatmul.mubr.bf16.gmra.mxu0 %v1692
  %v1790 = vpop.f32.mrf.mxu0
  %v1791 = vadd.f32 0.0, %v1790
  %v1792 = vpop.f32.mrf.mxu0
  %v1793 = vpop.f32.mrf.mxu0
  %v1794 = vadd.f32 0.0, %v1793
  %v1795 = vpop.f32.mrf.mxu0
  %1796 = vmatprep.mubr.bf16.mxu0 0
  %1797 = vmatmul.mubr.bf16.gmra.mxu0 %v1693
  %v1798 = vpop.f32.mrf.mxu0
  %v1799 = vadd.f32 0.0, %v1798
  %v1800 = vpop.f32.mrf.mxu0
  %v1801 = vpop.f32.mrf.mxu0
  %v1802 = vadd.f32 0.0, %v1801
  %v1803 = vpop.f32.mrf.mxu0
  %1804 = vmatprep.mubr.bf16.mxu0 0
  %1805 = vmatmul.mubr.bf16.gmra.mxu0 %v1694
  %v1806 = vpop.f32.mrf.mxu0
  %v1807 = vadd.f32 0.0, %v1806
  %v1808 = vpop.f32.mrf.mxu0
  %v1809 = vpop.f32.mrf.mxu0
  %v1810 = vadd.f32 0.0, %v1809
  %v1811 = vpop.f32.mrf.mxu0
  %1812 = vmatprep.mubr.bf16.mxu0 0
  %1813 = vmatmul.mubr.bf16.gmra.mxu0 %v1695
  %v1814 = vpop.f32.mrf.mxu0
  %v1815 = vadd.f32 0.0, %v1814
  %v1816 = vpop.f32.mrf.mxu0
  %v1817 = vpop.f32.mrf.mxu0
  %v1818 = vadd.f32 0.0, %v1817
  %v1819 = vpop.f32.mrf.mxu0
  %1820 = vmatprep.mubr.bf16.mxu0 0
  %1821 = vmatmul.mubr.bf16.gmra.mxu0 %v1696
  %v1822 = vpop.f32.mrf.mxu0
  %v1823 = vadd.f32 0.0, %v1822
  %v1824 = vpop.f32.mrf.mxu0
  %v1825 = vpop.f32.mrf.mxu0
  %v1826 = vadd.f32 0.0, %v1825
  %v1827 = vpop.f32.mrf.mxu0
  %1828 = vmatprep.mubr.bf16.mxu0 0
  %1829 = vmatmul.mubr.bf16.gmra.mxu0 %v1697
  %v1830 = vpop.f32.mrf.mxu0
  %v1831 = vadd.f32 0.0, %v1830
  %v1832 = vpop.f32.mrf.mxu0
  %v1833 = vpop.f32.mrf.mxu0
  %v1834 = vadd.f32 0.0, %v1833
  %v1835 = vpop.f32.mrf.mxu0
  %1836 = vmatprep.mubr.bf16.mxu0 0
  %1837 = vmatmul.mubr.bf16.gmra.mxu0 %v1698
  %v1838 = vpop.f32.mrf.mxu0
  %v1839 = vadd.f32 0.0, %v1838
  %v1840 = vpop.f32.mrf.mxu0
  %v1841 = vpop.f32.mrf.mxu0
  %v1842 = vadd.f32 0.0, %v1841
  %v1843 = vpop.f32.mrf.mxu0
  %1844 = vmatprep.mubr.bf16.mxu0 0
  %1845 = vmatmul.mubr.bf16.gmra.mxu0 %v1699
  %v1846 = vpop.f32.mrf.mxu0
  %v1847 = vadd.f32 0.0, %v1846
  %v1848 = vpop.f32.mrf.mxu0
  %v1849 = vpop.f32.mrf.mxu0
  %v1850 = vadd.f32 0.0, %v1849
  %v1851 = vpop.f32.mrf.mxu0
  %1852 = vdwg.mxu0
  %v1853 = vadd.f32 %v1629, %v1791
  %v1854 = vadd.f32 %v1630, %v1794
  %v1855 = vadd.f32 %v1631, %v1799
  %v1856 = vadd.f32 %v1632, %v1802
  %v1857 = vadd.f32 %v1633, %v1807
  %v1858 = vadd.f32 %v1634, %v1810
  %v1859 = vadd.f32 %v1635, %v1815
  %v1860 = vadd.f32 %v1636, %v1818
  %v1861 = vadd.f32 %v1637, %v1823
  %v1862 = vadd.f32 %v1638, %v1826
  %v1863 = vadd.f32 %v1639, %v1831
  %v1864 = vadd.f32 %v1640, %v1834
  %v1865 = vadd.f32 %v1641, %v1839
  %v1866 = vadd.f32 %v1642, %v1842
  %v1867 = vadd.f32 %v1643, %v1847
  %v1868 = vadd.f32 %v1644, %v1850
  %v1870 = vshrl.u32 %v1186, 16
  %v1872 = vrot.slane %v1870, 4
  %v1873 = vshll.u32 %v1186, 16
  %v1875 = vrot.slane %v1873, 5
  %v1876 = vor.u32 %v1872, %v1875
  %v1877 = vrot.slane %v1876, 4
  %v1879 = vshll.u32 %v1187, 16
  %v1881 = vrot.slane %v1879, 5
  %v1882 = vsel %vm1210, %v1877, %v1881
  %v1884 = vshrl.u32 %v1206, 16
  %v1886 = vrot.slane %v1884, 4
  %v1887 = vshll.u32 %v1206, 16
  %v1889 = vrot.slane %v1887, 5
  %v1890 = vor.u32 %v1886, %v1889
  %v1891 = vrot.slane %v1890, 4
  %v1893 = vshll.u32 %v1207, 16
  %v1895 = vrot.slane %v1893, 5
  %v1896 = vsel %vm1210, %v1891, %v1895
  %s1897 = scalar_lea.vmem %s3, 448
  %v1898 = vld [vmem:[%s1897] sm:$0xf]
  %v1899 = vld [vmem:[%s1897 + $0x4] sm:$0xf]
  %v1900 = vld [vmem:[%s1897 + $0x8] sm:$0xf]
  %v1901 = vld [vmem:[%s1897 + $0xc] sm:$0xf]
  %v1902 = vld [vmem:[%s1897 + $0x10] sm:$0xf]
  %v1903 = vld [vmem:[%s1897 + $0x14] sm:$0xf]
  %v1904 = vld [vmem:[%s1897 + $0x18] sm:$0xf]
  %v1905 = vld [vmem:[%s1897 + $0x1c] sm:$0xf]
  %v1906 = vld [vmem:[%s1897 + $0x20] sm:$0xf]
  %v1907 = vld [vmem:[%s1897 + $0x24] sm:$0xf]
  %v1908 = vld [vmem:[%s1897 + $0x28] sm:$0xf]
  %v1909 = vld [vmem:[%s1897 + $0x2c] sm:$0xf]
  %v1910 = vld [vmem:[%s1897 + $0x30] sm:$0xf]
  %v1911 = vld [vmem:[%s1897 + $0x34] sm:$0xf]
  %v1912 = vld [vmem:[%s1897 + $0x38] sm:$0xf]
  %v1913 = vld [vmem:[%s1897 + $0x3c] sm:$0xf]
  %v1914 = vunpack.c.l.b16 %v1882
  %v1915 = vunpack.c.l.b16 %v1896
  %v1916 = vpack.c.b16 %v1914, %v1690
  %v1917 = vpack.c.b16 %v1915, %v1691
  %v1936 = vunpack.c.l.b16 %v1898
  %v1937 = vunpack.c.l.b16 %v1899
  %v1938 = vunpack.c.l.b16 %v1900
  %v1939 = vunpack.c.l.b16 %v1901
  %v1940 = vunpack.c.l.b16 %v1902
  %v1941 = vunpack.c.l.b16 %v1903
  %v1942 = vunpack.c.l.b16 %v1904
  %v1943 = vunpack.c.l.b16 %v1905
  %v1944 = vunpack.c.l.b16 %v1906
  %v1945 = vunpack.c.l.b16 %v1907
  %v1946 = vunpack.c.l.b16 %v1908
  %v1947 = vunpack.c.l.b16 %v1909
  %v1948 = vunpack.c.l.b16 %v1910
  %v1949 = vunpack.c.l.b16 %v1911
  %v1950 = vunpack.c.l.b16 %v1912
  %v1951 = vunpack.c.l.b16 %v1913
  %v1952 = vpack.c.b16 %v1937, %v1936
  %v1953 = vpack.c.b16 %v1939, %v1938
  %v1954 = vpack.c.b16 %v1941, %v1940
  %v1955 = vpack.c.b16 %v1943, %v1942
  %v1956 = vpack.c.b16 %v1945, %v1944
  %v1957 = vpack.c.b16 %v1947, %v1946
  %v1958 = vpack.c.b16 %v1949, %v1948
  %v1959 = vpack.c.b16 %v1951, %v1950
  %1968 = vmatprep.subr.bf16.mxu0 0
  %1969 = vmatpush1.bf16.msra.mxu0 %v1959
  %1970 = vmatprep.subr.bf16.mxu0 0
  %1971 = vmatpush1.bf16.msra.mxu0 %v1958
  %1972 = vmatprep.subr.bf16.mxu0 0
  %1973 = vmatpush1.bf16.msra.mxu0 %v1957
  %1974 = vmatprep.subr.bf16.mxu0 0
  %1975 = vmatpush1.bf16.msra.mxu0 %v1956
  %1976 = vmatprep.subr.bf16.mxu0 0
  %1977 = vmatpush1.bf16.msra.mxu0 %v1955
  %1978 = vmatprep.subr.bf16.mxu0 0
  %1979 = vmatpush1.bf16.msra.mxu0 %v1954
  %1980 = vmatprep.subr.bf16.mxu0 0
  %1981 = vmatpush1.bf16.msra.mxu0 %v1953
  %1982 = vmatprep.subr.bf16.mxu0 0
  %1983 = vmatpush1.bf16.msra.mxu0 %v1952
  %1984 = vmatprep.subr.bf16.mxu0 0
  %1985 = vmatpush2.bf16.msra.mxu0 0
  %1986 = vmatprep.subr.bf16.mxu0 0
  %1987 = vmatpush2.bf16.msra.mxu0 0
  %1988 = vmatprep.subr.bf16.mxu0 0
  %1989 = vmatpush2.bf16.msra.mxu0 0
  %1990 = vmatprep.subr.bf16.mxu0 0
  %1991 = vmatpush2.bf16.msra.mxu0 0
  %1992 = vmatprep.subr.bf16.mxu0 0
  %1993 = vmatpush2.bf16.msra.mxu0 0
  %1994 = vmatprep.subr.bf16.mxu0 0
  %1995 = vmatpush2.bf16.msra.mxu0 0
  %1996 = vmatprep.subr.bf16.mxu0 0
  %1997 = vmatpush2.bf16.msra.mxu0 0
  %1998 = vmatprep.subr.bf16.mxu0 0
  %1999 = vmatpush2.bf16.msra.mxu0 0
  %2000 = vmatprep.mubr.bf16.mxu0 0
  %2001 = vmatmul.mubr.bf16.gmra.mxu0 %v1469
  %v2002 = vpop.f32.mrf.mxu0
  %v2003 = vadd.f32 0.0, %v2002
  %v2004 = vpop.f32.mrf.mxu0
  %v2005 = vpop.f32.mrf.mxu0
  %v2006 = vadd.f32 0.0, %v2005
  %v2007 = vpop.f32.mrf.mxu0
  %2008 = vmatprep.mubr.bf16.mxu0 0
  %2009 = vmatmul.mubr.bf16.gmra.mxu0 %v1470
  %v2010 = vpop.f32.mrf.mxu0
  %v2011 = vadd.f32 0.0, %v2010
  %v2012 = vpop.f32.mrf.mxu0
  %v2013 = vpop.f32.mrf.mxu0
  %v2014 = vadd.f32 0.0, %v2013
  %v2015 = vpop.f32.mrf.mxu0
  %2016 = vmatprep.mubr.bf16.mxu0 0
  %2017 = vmatmul.mubr.bf16.gmra.mxu0 %v1471
  %v2018 = vpop.f32.mrf.mxu0
  %v2019 = vadd.f32 0.0, %v2018
  %v2020 = vpop.f32.mrf.mxu0
  %v2021 = vpop.f32.mrf.mxu0
  %v2022 = vadd.f32 0.0, %v2021
  %v2023 = vpop.f32.mrf.mxu0
  %2024 = vmatprep.mubr.bf16.mxu0 0
  %2025 = vmatmul.mubr.bf16.gmra.mxu0 %v1916
  %v2026 = vpop.f32.mrf.mxu0
  %v2027 = vadd.f32 0.0, %v2026
  %v2028 = vpop.f32.mrf.mxu0
  %v2029 = vpop.f32.mrf.mxu0
  %v2030 = vadd.f32 0.0, %v2029
  %v2031 = vpop.f32.mrf.mxu0
  %2032 = vmatprep.mubr.bf16.mxu0 0
  %2033 = vmatmul.mubr.bf16.gmra.mxu0 %v1473
  %v2034 = vpop.f32.mrf.mxu0
  %v2035 = vadd.f32 0.0, %v2034
  %v2036 = vpop.f32.mrf.mxu0
  %v2037 = vpop.f32.mrf.mxu0
  %v2038 = vadd.f32 0.0, %v2037
  %v2039 = vpop.f32.mrf.mxu0
  %2040 = vmatprep.mubr.bf16.mxu0 0
  %2041 = vmatmul.mubr.bf16.gmra.mxu0 %v1474
  %v2042 = vpop.f32.mrf.mxu0
  %v2043 = vadd.f32 0.0, %v2042
  %v2044 = vpop.f32.mrf.mxu0
  %v2045 = vpop.f32.mrf.mxu0
  %v2046 = vadd.f32 0.0, %v2045
  %v2047 = vpop.f32.mrf.mxu0
  %2048 = vmatprep.mubr.bf16.mxu0 0
  %2049 = vmatmul.mubr.bf16.gmra.mxu0 %v1475
  %v2050 = vpop.f32.mrf.mxu0
  %v2051 = vadd.f32 0.0, %v2050
  %v2052 = vpop.f32.mrf.mxu0
  %v2053 = vpop.f32.mrf.mxu0
  %v2054 = vadd.f32 0.0, %v2053
  %v2055 = vpop.f32.mrf.mxu0
  %2056 = vmatprep.mubr.bf16.mxu0 0
  %2057 = vmatmul.mubr.bf16.gmra.mxu0 %v1917
  %v2058 = vpop.f32.mrf.mxu0
  %v2059 = vadd.f32 0.0, %v2058
  %v2060 = vpop.f32.mrf.mxu0
  %v2061 = vpop.f32.mrf.mxu0
  %v2062 = vadd.f32 0.0, %v2061
  %v2063 = vpop.f32.mrf.mxu0
  %2064 = vdwg.mxu0
  %v2065 = vadd.f32 %v1853, %v2003
  %v2066 = vadd.f32 %v1854, %v2006
  %v2067 = vadd.f32 %v1855, %v2011
  %v2068 = vadd.f32 %v1856, %v2014
  %v2069 = vadd.f32 %v1857, %v2019
  %v2070 = vadd.f32 %v1858, %v2022
  %v2071 = vadd.f32 %v1859, %v2027
  %v2072 = vadd.f32 %v1860, %v2030
  %v2073 = vadd.f32 %v1861, %v2035
  %v2074 = vadd.f32 %v1862, %v2038
  %v2075 = vadd.f32 %v1863, %v2043
  %v2076 = vadd.f32 %v1864, %v2046
  %v2077 = vadd.f32 %v1865, %v2051
  %v2078 = vadd.f32 %v1866, %v2054
  %v2079 = vadd.f32 %v1867, %v2059
  %v2080 = vadd.f32 %v1868, %v2062
  %v2081 = vld [vmem:[#allocation2] sm:$0xe]
  %v2082 = vld [vmem:[#allocation2 + $0x8] sm:$0xe]
  %v2083 = vld [vmem:[#allocation2 + $0x10] sm:$0xe]
  %v2084 = vld [vmem:[#allocation2 + $0x18] sm:$0xe]
  %v2085 = vld [vmem:[#allocation2 + $0x20] sm:$0xe]
  %v2086 = vld [vmem:[#allocation2 + $0x28] sm:$0xe]
  %v2087 = vld [vmem:[#allocation2 + $0x30] sm:$0xe]
  %v2088 = vld [vmem:[#allocation2 + $0x38] sm:$0xe]
  %v2089 = vld [vmem:[#allocation2 + $0x40] sm:$0xe]
  %v2090 = vld [vmem:[#allocation2 + $0x48] sm:$0xe]
  %v2091 = vld [vmem:[#allocation2 + $0x50] sm:$0xe]
  %v2092 = vld [vmem:[#allocation2 + $0x58] sm:$0xe]
  %v2093 = vld [vmem:[#allocation2 + $0x60] sm:$0xe]
  %v2094 = vld [vmem:[#allocation2 + $0x68] sm:$0xe]
  %v2095 = vld [vmem:[#allocation2 + $0x70] sm:$0xe]
  %v2096 = vld [vmem:[#allocation2 + $0x78] sm:$0xe]
  %v2097 = vld [vmem:[#allocation2 + $0x80] sm:$0xe]
  %v2098 = vld [vmem:[#allocation2 + $0x88] sm:$0xe]
  %v2099 = vld [vmem:[#allocation2 + $0x90] sm:$0xe]
  %v2100 = vld [vmem:[#allocation2 + $0x98] sm:$0xe]
  %vm2133 = vcmask 1042432
  %vm2134 = vcmask 1046532
  %vm2135 = vmor %vm2133, %vm2134
  %v2136 = vrot.slane %v2081, 5
  %v2137 = vrot.slane %v2136, 4
  %v2138 = vrot.slane %v1169, 5
  %v2139 = vsel %vm2135, %v2137, %v2138
  %v2140 = vrot.slane %v2082, 5
  %v2141 = vrot.slane %v2140, 4
  %v2142 = vrot.slane %v1171, 5
  %v2143 = vsel %vm2135, %v2141, %v2142
  %v2144 = vrot.slane %v2083, 5
  %v2145 = vrot.slane %v2144, 4
  %v2146 = vrot.slane %v1173, 5
  %v2147 = vsel %vm2135, %v2145, %v2146
  %v2148 = vrot.slane %v2084, 5
  %v2149 = vrot.slane %v2148, 4
  %v2150 = vrot.slane %v1175, 5
  %v2151 = vsel %vm2135, %v2149, %v2150
  %v2152 = vrot.slane %v2085, 5
  %v2153 = vrot.slane %v2152, 4
  %v2154 = vrot.slane %v1177, 5
  %v2155 = vsel %vm2135, %v2153, %v2154
  %v2156 = vrot.slane %v2086, 5
  %v2157 = vrot.slane %v2156, 4
  %v2158 = vrot.slane %v1179, 5
  %v2159 = vsel %vm2135, %v2157, %v2158
  %v2160 = vrot.slane %v2087, 5
  %v2161 = vrot.slane %v2160, 4
  %v2162 = vrot.slane %v1181, 5
  %v2163 = vsel %vm2135, %v2161, %v2162
  %v2164 = vrot.slane %v2088, 5
  %v2165 = vrot.slane %v2164, 4
  %v2166 = vrot.slane %v1183, 5
  %v2167 = vsel %vm2135, %v2165, %v2166
  %v2168 = vrot.slane %v2091, 5
  %v2169 = vrot.slane %v2168, 4
  %v2170 = vrot.slane %v1189, 5
  %v2171 = vsel %vm2135, %v2169, %v2170
  %v2172 = vrot.slane %v2092, 5
  %v2173 = vrot.slane %v2172, 4
  %v2174 = vrot.slane %v1191, 5
  %v2175 = vsel %vm2135, %v2173, %v2174
  %v2176 = vrot.slane %v2093, 5
  %v2177 = vrot.slane %v2176, 4
  %v2178 = vrot.slane %v1193, 5
  %v2179 = vsel %vm2135, %v2177, %v2178
  %v2180 = vrot.slane %v2094, 5
  %v2181 = vrot.slane %v2180, 4
  %v2182 = vrot.slane %v1195, 5
  %v2183 = vsel %vm2135, %v2181, %v2182
  %v2184 = vrot.slane %v2095, 5
  %v2185 = vrot.slane %v2184, 4
  %v2186 = vrot.slane %v1197, 5
  %v2187 = vsel %vm2135, %v2185, %v2186
  %v2188 = vrot.slane %v2096, 5
  %v2189 = vrot.slane %v2188, 4
  %v2190 = vrot.slane %v1199, 5
  %v2191 = vsel %vm2135, %v2189, %v2190
  %v2192 = vrot.slane %v2097, 5
  %v2193 = vrot.slane %v2192, 4
  %v2194 = vrot.slane %v1201, 5
  %v2195 = vsel %vm2135, %v2193, %v2194
  %v2196 = vrot.slane %v2098, 5
  %v2197 = vrot.slane %v2196, 4
  %v2198 = vrot.slane %v1203, 5
  %v2199 = vsel %vm2135, %v2197, %v2198
  %s2200 = scalar_lea.vmem %s3, 128
  %v2201 = vld [vmem:[%s2200] sm:$0xf]
  %v2202 = vld [vmem:[%s2200 + $0x4] sm:$0xf]
  %v2203 = vld [vmem:[%s2200 + $0x8] sm:$0xf]
  %v2204 = vld [vmem:[%s2200 + $0xc] sm:$0xf]
  %v2205 = vld [vmem:[%s2200 + $0x10] sm:$0xf]
  %v2206 = vld [vmem:[%s2200 + $0x14] sm:$0xf]
  %v2207 = vld [vmem:[%s2200 + $0x18] sm:$0xf]
  %v2208 = vld [vmem:[%s2200 + $0x1c] sm:$0xf]
  %v2209 = vld [vmem:[%s2200 + $0x20] sm:$0xf]
  %v2210 = vld [vmem:[%s2200 + $0x24] sm:$0xf]
  %v2211 = vld [vmem:[%s2200 + $0x28] sm:$0xf]
  %v2212 = vld [vmem:[%s2200 + $0x2c] sm:$0xf]
  %v2213 = vld [vmem:[%s2200 + $0x30] sm:$0xf]
  %v2214 = vld [vmem:[%s2200 + $0x34] sm:$0xf]
  %v2215 = vld [vmem:[%s2200 + $0x38] sm:$0xf]
  %v2216 = vld [vmem:[%s2200 + $0x3c] sm:$0xf]
  %v2217 = vunpack.c.l.b16 %v2139
  %v2218 = vunpack.c.l.b16 %v2143
  %v2219 = vunpack.c.l.b16 %v2147
  %v2220 = vunpack.c.l.b16 %v2151
  %v2221 = vunpack.c.l.b16 %v2155
  %v2222 = vunpack.c.l.b16 %v2159
  %v2223 = vunpack.c.l.b16 %v2163
  %v2224 = vunpack.c.l.b16 %v2167
  %v2225 = vunpack.c.l.b16 %v2171
  %v2226 = vunpack.c.l.b16 %v2175
  %v2227 = vunpack.c.l.b16 %v2179
  %v2228 = vunpack.c.l.b16 %v2183
  %v2229 = vunpack.c.l.b16 %v2187
  %v2230 = vunpack.c.l.b16 %v2191
  %v2231 = vunpack.c.l.b16 %v2195
  %v2232 = vunpack.c.l.b16 %v2199
  %v2233 = vpack.c.b16 %v2218, %v2217
  %v2234 = vpack.c.b16 %v2220, %v2219
  %v2235 = vpack.c.b16 %v2222, %v2221
  %v2236 = vpack.c.b16 %v2224, %v2223
  %v2237 = vpack.c.b16 %v2226, %v2225
  %v2238 = vpack.c.b16 %v2228, %v2227
  %v2239 = vpack.c.b16 %v2230, %v2229
  %v2240 = vpack.c.b16 %v2232, %v2231
  %v2265 = vunpack.c.l.b16 %v2201
  %v2266 = vunpack.c.l.b16 %v2202
  %v2267 = vunpack.c.l.b16 %v2203
  %v2268 = vunpack.c.l.b16 %v2204
  %v2269 = vunpack.c.l.b16 %v2205
  %v2270 = vunpack.c.l.b16 %v2206
  %v2271 = vunpack.c.l.b16 %v2207
  %v2272 = vunpack.c.l.b16 %v2208
  %v2273 = vunpack.c.l.b16 %v2209
  %v2274 = vunpack.c.l.b16 %v2210
  %v2275 = vunpack.c.l.b16 %v2211
  %v2276 = vunpack.c.l.b16 %v2212
  %v2277 = vunpack.c.l.b16 %v2213
  %v2278 = vunpack.c.l.b16 %v2214
  %v2279 = vunpack.c.l.b16 %v2215
  %v2280 = vunpack.c.l.b16 %v2216
  %v2281 = vpack.c.b16 %v2266, %v2265
  %v2282 = vpack.c.b16 %v2268, %v2267
  %v2283 = vpack.c.b16 %v2270, %v2269
  %v2284 = vpack.c.b16 %v2272, %v2271
  %v2285 = vpack.c.b16 %v2274, %v2273
  %v2286 = vpack.c.b16 %v2276, %v2275
  %v2287 = vpack.c.b16 %v2278, %v2277
  %v2288 = vpack.c.b16 %v2280, %v2279
  %2297 = vmatprep.subr.bf16.mxu0 0
  %2298 = vmatpush1.bf16.msra.mxu0 %v2288
  %2299 = vmatprep.subr.bf16.mxu0 0
  %2300 = vmatpush1.bf16.msra.mxu0 %v2287
  %2301 = vmatprep.subr.bf16.mxu0 0
  %2302 = vmatpush1.bf16.msra.mxu0 %v2286
  %2303 = vmatprep.subr.bf16.mxu0 0
  %2304 = vmatpush1.bf16.msra.mxu0 %v2285
  %2305 = vmatprep.subr.bf16.mxu0 0
  %2306 = vmatpush1.bf16.msra.mxu0 %v2284
  %2307 = vmatprep.subr.bf16.mxu0 0
  %2308 = vmatpush1.bf16.msra.mxu0 %v2283
  %2309 = vmatprep.subr.bf16.mxu0 0
  %2310 = vmatpush1.bf16.msra.mxu0 %v2282
  %2311 = vmatprep.subr.bf16.mxu0 0
  %2312 = vmatpush1.bf16.msra.mxu0 %v2281
  %2313 = vmatprep.subr.bf16.mxu0 0
  %2314 = vmatpush2.bf16.msra.mxu0 0
  %2315 = vmatprep.subr.bf16.mxu0 0
  %2316 = vmatpush2.bf16.msra.mxu0 0
  %2317 = vmatprep.subr.bf16.mxu0 0
  %2318 = vmatpush2.bf16.msra.mxu0 0
  %2319 = vmatprep.subr.bf16.mxu0 0
  %2320 = vmatpush2.bf16.msra.mxu0 0
  %2321 = vmatprep.subr.bf16.mxu0 0
  %2322 = vmatpush2.bf16.msra.mxu0 0
  %2323 = vmatprep.subr.bf16.mxu0 0
  %2324 = vmatpush2.bf16.msra.mxu0 0
  %2325 = vmatprep.subr.bf16.mxu0 0
  %2326 = vmatpush2.bf16.msra.mxu0 0
  %2327 = vmatprep.subr.bf16.mxu0 0
  %2328 = vmatpush2.bf16.msra.mxu0 0
  %2329 = vmatprep.mubr.bf16.mxu0 0
  %2330 = vmatmul.mubr.bf16.gmra.mxu0 %v2233
  %v2331 = vpop.f32.mrf.mxu0
  %v2332 = vadd.f32 0.0, %v2331
  %v2333 = vpop.f32.mrf.mxu0
  %v2334 = vpop.f32.mrf.mxu0
  %v2335 = vadd.f32 0.0, %v2334
  %v2336 = vpop.f32.mrf.mxu0
  %2337 = vmatprep.mubr.bf16.mxu0 0
  %2338 = vmatmul.mubr.bf16.gmra.mxu0 %v2234
  %v2339 = vpop.f32.mrf.mxu0
  %v2340 = vadd.f32 0.0, %v2339
  %v2341 = vpop.f32.mrf.mxu0
  %v2342 = vpop.f32.mrf.mxu0
  %v2343 = vadd.f32 0.0, %v2342
  %v2344 = vpop.f32.mrf.mxu0
  %2345 = vmatprep.mubr.bf16.mxu0 0
  %2346 = vmatmul.mubr.bf16.gmra.mxu0 %v2235
  %v2347 = vpop.f32.mrf.mxu0
  %v2348 = vadd.f32 0.0, %v2347
  %v2349 = vpop.f32.mrf.mxu0
  %v2350 = vpop.f32.mrf.mxu0
  %v2351 = vadd.f32 0.0, %v2350
  %v2352 = vpop.f32.mrf.mxu0
  %2353 = vmatprep.mubr.bf16.mxu0 0
  %2354 = vmatmul.mubr.bf16.gmra.mxu0 %v2236
  %v2355 = vpop.f32.mrf.mxu0
  %v2356 = vadd.f32 0.0, %v2355
  %v2357 = vpop.f32.mrf.mxu0
  %v2358 = vpop.f32.mrf.mxu0
  %v2359 = vadd.f32 0.0, %v2358
  %v2360 = vpop.f32.mrf.mxu0
  %2361 = vmatprep.mubr.bf16.mxu0 0
  %2362 = vmatmul.mubr.bf16.gmra.mxu0 %v2237
  %v2363 = vpop.f32.mrf.mxu0
  %v2364 = vadd.f32 0.0, %v2363
  %v2365 = vpop.f32.mrf.mxu0
  %v2366 = vpop.f32.mrf.mxu0
  %v2367 = vadd.f32 0.0, %v2366
  %v2368 = vpop.f32.mrf.mxu0
  %2369 = vmatprep.mubr.bf16.mxu0 0
  %2370 = vmatmul.mubr.bf16.gmra.mxu0 %v2238
  %v2371 = vpop.f32.mrf.mxu0
  %v2372 = vadd.f32 0.0, %v2371
  %v2373 = vpop.f32.mrf.mxu0
  %v2374 = vpop.f32.mrf.mxu0
  %v2375 = vadd.f32 0.0, %v2374
  %v2376 = vpop.f32.mrf.mxu0
  %2377 = vmatprep.mubr.bf16.mxu0 0
  %2378 = vmatmul.mubr.bf16.gmra.mxu0 %v2239
  %v2379 = vpop.f32.mrf.mxu0
  %v2380 = vadd.f32 0.0, %v2379
  %v2381 = vpop.f32.mrf.mxu0
  %v2382 = vpop.f32.mrf.mxu0
  %v2383 = vadd.f32 0.0, %v2382
  %v2384 = vpop.f32.mrf.mxu0
  %2385 = vmatprep.mubr.bf16.mxu0 0
  %2386 = vmatmul.mubr.bf16.gmra.mxu0 %v2240
  %v2387 = vpop.f32.mrf.mxu0
  %v2388 = vadd.f32 0.0, %v2387
  %v2389 = vpop.f32.mrf.mxu0
  %v2390 = vpop.f32.mrf.mxu0
  %v2391 = vadd.f32 0.0, %v2390
  %v2392 = vpop.f32.mrf.mxu0
  %2393 = vdwg.mxu0
  %v2394 = vadd.f32 %v2065, %v2332
  %v2395 = vadd.f32 %v2066, %v2335
  %v2396 = vadd.f32 %v2067, %v2340
  %v2397 = vadd.f32 %v2068, %v2343
  %v2398 = vadd.f32 %v2069, %v2348
  %v2399 = vadd.f32 %v2070, %v2351
  %v2400 = vadd.f32 %v2071, %v2356
  %v2401 = vadd.f32 %v2072, %v2359
  %v2402 = vadd.f32 %v2073, %v2364
  %v2403 = vadd.f32 %v2074, %v2367
  %v2404 = vadd.f32 %v2075, %v2372
  %v2405 = vadd.f32 %v2076, %v2375
  %v2406 = vadd.f32 %v2077, %v2380
  %v2407 = vadd.f32 %v2078, %v2383
  %v2408 = vadd.f32 %v2079, %v2388
  %v2409 = vadd.f32 %v2080, %v2391
  %v2414 = vrot.slane %v2089, 5
  %v2415 = vrot.slane %v2414, 4
  %v2416 = vrot.slane %v1185, 5
  %v2417 = vsel %vm2135, %v2415, %v2416
  %v2418 = vrot.slane %v2099, 5
  %v2419 = vrot.slane %v2418, 4
  %v2420 = vrot.slane %v1205, 5
  %v2421 = vsel %vm2135, %v2419, %v2420
  %s2422 = scalar_lea.vmem %s3, 320
  %v2423 = vld [vmem:[%s2422] sm:$0xf]
  %v2424 = vld [vmem:[%s2422 + $0x4] sm:$0xf]
  %v2425 = vld [vmem:[%s2422 + $0x8] sm:$0xf]
  %v2426 = vld [vmem:[%s2422 + $0xc] sm:$0xf]
  %v2427 = vld [vmem:[%s2422 + $0x10] sm:$0xf]
  %v2428 = vld [vmem:[%s2422 + $0x14] sm:$0xf]
  %v2429 = vld [vmem:[%s2422 + $0x18] sm:$0xf]
  %v2430 = vld [vmem:[%s2422 + $0x1c] sm:$0xf]
  %v2431 = vld [vmem:[%s2422 + $0x20] sm:$0xf]
  %v2432 = vld [vmem:[%s2422 + $0x24] sm:$0xf]
  %v2433 = vld [vmem:[%s2422 + $0x28] sm:$0xf]
  %v2434 = vld [vmem:[%s2422 + $0x2c] sm:$0xf]
  %v2435 = vld [vmem:[%s2422 + $0x30] sm:$0xf]
  %v2436 = vld [vmem:[%s2422 + $0x34] sm:$0xf]
  %v2437 = vld [vmem:[%s2422 + $0x38] sm:$0xf]
  %v2438 = vld [vmem:[%s2422 + $0x3c] sm:$0xf]
  %v2439 = vunpack.c.l.b16 %v2417
  %v2440 = vunpack.c.l.b16 %v2421
  %v2441 = vpack.c.b16 %v2219, %v2218
  %v2442 = vpack.c.b16 %v2221, %v2220
  %v2443 = vpack.c.b16 %v2223, %v2222
  %v2444 = vpack.c.b16 %v2439, %v2224
  %v2445 = vpack.c.b16 %v2227, %v2226
  %v2446 = vpack.c.b16 %v2229, %v2228
  %v2447 = vpack.c.b16 %v2231, %v2230
  %v2448 = vpack.c.b16 %v2440, %v2232
  %v2473 = vunpack.c.l.b16 %v2423
  %v2474 = vunpack.c.l.b16 %v2424
  %v2475 = vunpack.c.l.b16 %v2425
  %v2476 = vunpack.c.l.b16 %v2426
  %v2477 = vunpack.c.l.b16 %v2427
  %v2478 = vunpack.c.l.b16 %v2428
  %v2479 = vunpack.c.l.b16 %v2429
  %v2480 = vunpack.c.l.b16 %v2430
  %v2481 = vunpack.c.l.b16 %v2431
  %v2482 = vunpack.c.l.b16 %v2432
  %v2483 = vunpack.c.l.b16 %v2433
  %v2484 = vunpack.c.l.b16 %v2434
  %v2485 = vunpack.c.l.b16 %v2435
  %v2486 = vunpack.c.l.b16 %v2436
  %v2487 = vunpack.c.l.b16 %v2437
  %v2488 = vunpack.c.l.b16 %v2438
  %v2489 = vpack.c.b16 %v2474, %v2473
  %v2490 = vpack.c.b16 %v2476, %v2475
  %v2491 = vpack.c.b16 %v2478, %v2477
  %v2492 = vpack.c.b16 %v2480, %v2479
  %v2493 = vpack.c.b16 %v2482, %v2481
  %v2494 = vpack.c.b16 %v2484, %v2483
  %v2495 = vpack.c.b16 %v2486, %v2485
  %v2496 = vpack.c.b16 %v2488, %v2487
  %2505 = vmatprep.subr.bf16.mxu0 0
  %2506 = vmatpush1.bf16.msra.mxu0 %v2496
  %2507 = vmatprep.subr.bf16.mxu0 0
  %2508 = vmatpush1.bf16.msra.mxu0 %v2495
  %2509 = vmatprep.subr.bf16.mxu0 0
  %2510 = vmatpush1.bf16.msra.mxu0 %v2494
  %2511 = vmatprep.subr.bf16.mxu0 0
  %2512 = vmatpush1.bf16.msra.mxu0 %v2493
  %2513 = vmatprep.subr.bf16.mxu0 0
  %2514 = vmatpush1.bf16.msra.mxu0 %v2492
  %2515 = vmatprep.subr.bf16.mxu0 0
  %2516 = vmatpush1.bf16.msra.mxu0 %v2491
  %2517 = vmatprep.subr.bf16.mxu0 0
  %2518 = vmatpush1.bf16.msra.mxu0 %v2490
  %2519 = vmatprep.subr.bf16.mxu0 0
  %2520 = vmatpush1.bf16.msra.mxu0 %v2489
  %2521 = vmatprep.subr.bf16.mxu0 0
  %2522 = vmatpush2.bf16.msra.mxu0 0
  %2523 = vmatprep.subr.bf16.mxu0 0
  %2524 = vmatpush2.bf16.msra.mxu0 0
  %2525 = vmatprep.subr.bf16.mxu0 0
  %2526 = vmatpush2.bf16.msra.mxu0 0
  %2527 = vmatprep.subr.bf16.mxu0 0
  %2528 = vmatpush2.bf16.msra.mxu0 0
  %2529 = vmatprep.subr.bf16.mxu0 0
  %2530 = vmatpush2.bf16.msra.mxu0 0
  %2531 = vmatprep.subr.bf16.mxu0 0
  %2532 = vmatpush2.bf16.msra.mxu0 0
  %2533 = vmatprep.subr.bf16.mxu0 0
  %2534 = vmatpush2.bf16.msra.mxu0 0
  %2535 = vmatprep.subr.bf16.mxu0 0
  %2536 = vmatpush2.bf16.msra.mxu0 0
  %2537 = vmatprep.mubr.bf16.mxu0 0
  %2538 = vmatmul.mubr.bf16.gmra.mxu0 %v2441
  %v2539 = vpop.f32.mrf.mxu0
  %v2540 = vadd.f32 0.0, %v2539
  %v2541 = vpop.f32.mrf.mxu0
  %v2542 = vpop.f32.mrf.mxu0
  %v2543 = vadd.f32 0.0, %v2542
  %v2544 = vpop.f32.mrf.mxu0
  %2545 = vmatprep.mubr.bf16.mxu0 0
  %2546 = vmatmul.mubr.bf16.gmra.mxu0 %v2442
  %v2547 = vpop.f32.mrf.mxu0
  %v2548 = vadd.f32 0.0, %v2547
  %v2549 = vpop.f32.mrf.mxu0
  %v2550 = vpop.f32.mrf.mxu0
  %v2551 = vadd.f32 0.0, %v2550
  %v2552 = vpop.f32.mrf.mxu0
  %2553 = vmatprep.mubr.bf16.mxu0 0
  %2554 = vmatmul.mubr.bf16.gmra.mxu0 %v2443
  %v2555 = vpop.f32.mrf.mxu0
  %v2556 = vadd.f32 0.0, %v2555
  %v2557 = vpop.f32.mrf.mxu0
  %v2558 = vpop.f32.mrf.mxu0
  %v2559 = vadd.f32 0.0, %v2558
  %v2560 = vpop.f32.mrf.mxu0
  %2561 = vmatprep.mubr.bf16.mxu0 0
  %2562 = vmatmul.mubr.bf16.gmra.mxu0 %v2444
  %v2563 = vpop.f32.mrf.mxu0
  %v2564 = vadd.f32 0.0, %v2563
  %v2565 = vpop.f32.mrf.mxu0
  %v2566 = vpop.f32.mrf.mxu0
  %v2567 = vadd.f32 0.0, %v2566
  %v2568 = vpop.f32.mrf.mxu0
  %2569 = vmatprep.mubr.bf16.mxu0 0
  %2570 = vmatmul.mubr.bf16.gmra.mxu0 %v2445
  %v2571 = vpop.f32.mrf.mxu0
  %v2572 = vadd.f32 0.0, %v2571
  %v2573 = vpop.f32.mrf.mxu0
  %v2574 = vpop.f32.mrf.mxu0
  %v2575 = vadd.f32 0.0, %v2574
  %v2576 = vpop.f32.mrf.mxu0
  %2577 = vmatprep.mubr.bf16.mxu0 0
  %2578 = vmatmul.mubr.bf16.gmra.mxu0 %v2446
  %v2579 = vpop.f32.mrf.mxu0
  %v2580 = vadd.f32 0.0, %v2579
  %v2581 = vpop.f32.mrf.mxu0
  %v2582 = vpop.f32.mrf.mxu0
  %v2583 = vadd.f32 0.0, %v2582
  %v2584 = vpop.f32.mrf.mxu0
  %2585 = vmatprep.mubr.bf16.mxu0 0
  %2586 = vmatmul.mubr.bf16.gmra.mxu0 %v2447
  %v2587 = vpop.f32.mrf.mxu0
  %v2588 = vadd.f32 0.0, %v2587
  %v2589 = vpop.f32.mrf.mxu0
  %v2590 = vpop.f32.mrf.mxu0
  %v2591 = vadd.f32 0.0, %v2590
  %v2592 = vpop.f32.mrf.mxu0
  %2593 = vmatprep.mubr.bf16.mxu0 0
  %2594 = vmatmul.mubr.bf16.gmra.mxu0 %v2448
  %v2595 = vpop.f32.mrf.mxu0
  %v2596 = vadd.f32 0.0, %v2595
  %v2597 = vpop.f32.mrf.mxu0
  %v2598 = vpop.f32.mrf.mxu0
  %v2599 = vadd.f32 0.0, %v2598
  %v2600 = vpop.f32.mrf.mxu0
  %2601 = vdwg.mxu0
  %v2602 = vadd.f32 %v2394, %v2540
  %v2603 = vadd.f32 %v2395, %v2543
  %v2604 = vadd.f32 %v2396, %v2548
  %v2605 = vadd.f32 %v2397, %v2551
  %v2606 = vadd.f32 %v2398, %v2556
  %v2607 = vadd.f32 %v2399, %v2559
  %v2608 = vadd.f32 %v2400, %v2564
  %v2609 = vadd.f32 %v2401, %v2567
  %v2610 = vadd.f32 %v2402, %v2572
  %v2611 = vadd.f32 %v2403, %v2575
  %v2612 = vadd.f32 %v2404, %v2580
  %v2613 = vadd.f32 %v2405, %v2583
  %v2614 = vadd.f32 %v2406, %v2588
  %v2615 = vadd.f32 %v2407, %v2591
  %v2616 = vadd.f32 %v2408, %v2596
  %v2617 = vadd.f32 %v2409, %v2599
  %v2622 = vrot.slane %v2090, 5
  %v2623 = vrot.slane %v2622, 4
  %v2624 = vrot.slane %v1187, 5
  %v2625 = vsel %vm2135, %v2623, %v2624
  %v2626 = vrot.slane %v2100, 5
  %v2627 = vrot.slane %v2626, 4
  %v2628 = vrot.slane %v1207, 5
  %v2629 = vsel %vm2135, %v2627, %v2628
  %s2630 = scalar_lea.vmem %s3, 512
  %v2631 = vld [vmem:[%s2630] sm:$0xf]
  %v2632 = vld [vmem:[%s2630 + $0x4] sm:$0xf]
  %v2633 = vld [vmem:[%s2630 + $0x8] sm:$0xf]
  %v2634 = vld [vmem:[%s2630 + $0xc] sm:$0xf]
  %v2635 = vld [vmem:[%s2630 + $0x10] sm:$0xf]
  %v2636 = vld [vmem:[%s2630 + $0x14] sm:$0xf]
  %v2637 = vld [vmem:[%s2630 + $0x18] sm:$0xf]
  %v2638 = vld [vmem:[%s2630 + $0x1c] sm:$0xf]
  %v2639 = vld [vmem:[%s2630 + $0x20] sm:$0xf]
  %v2640 = vld [vmem:[%s2630 + $0x24] sm:$0xf]
  %v2641 = vld [vmem:[%s2630 + $0x28] sm:$0xf]
  %v2642 = vld [vmem:[%s2630 + $0x2c] sm:$0xf]
  %v2643 = vld [vmem:[%s2630 + $0x30] sm:$0xf]
  %v2644 = vld [vmem:[%s2630 + $0x34] sm:$0xf]
  %v2645 = vld [vmem:[%s2630 + $0x38] sm:$0xf]
  %v2646 = vld [vmem:[%s2630 + $0x3c] sm:$0xf]
  %v2647 = vunpack.c.l.b16 %v2625
  %v2648 = vunpack.c.l.b16 %v2629
  %v2649 = vpack.c.b16 %v2647, %v2439
  %v2650 = vpack.c.b16 %v2648, %v2440
  %v2669 = vunpack.c.l.b16 %v2631
  %v2670 = vunpack.c.l.b16 %v2632
  %v2671 = vunpack.c.l.b16 %v2633
  %v2672 = vunpack.c.l.b16 %v2634
  %v2673 = vunpack.c.l.b16 %v2635
  %v2674 = vunpack.c.l.b16 %v2636
  %v2675 = vunpack.c.l.b16 %v2637
  %v2676 = vunpack.c.l.b16 %v2638
  %v2677 = vunpack.c.l.b16 %v2639
  %v2678 = vunpack.c.l.b16 %v2640
  %v2679 = vunpack.c.l.b16 %v2641
  %v2680 = vunpack.c.l.b16 %v2642
  %v2681 = vunpack.c.l.b16 %v2643
  %v2682 = vunpack.c.l.b16 %v2644
  %v2683 = vunpack.c.l.b16 %v2645
  %v2684 = vunpack.c.l.b16 %v2646
  %v2685 = vpack.c.b16 %v2670, %v2669
  %v2686 = vpack.c.b16 %v2672, %v2671
  %v2687 = vpack.c.b16 %v2674, %v2673
  %v2688 = vpack.c.b16 %v2676, %v2675
  %v2689 = vpack.c.b16 %v2678, %v2677
  %v2690 = vpack.c.b16 %v2680, %v2679
  %v2691 = vpack.c.b16 %v2682, %v2681
  %v2692 = vpack.c.b16 %v2684, %v2683
  %2701 = vmatprep.subr.bf16.mxu0 0
  %2702 = vmatpush1.bf16.msra.mxu0 %v2692
  %2703 = vmatprep.subr.bf16.mxu0 0
  %2704 = vmatpush1.bf16.msra.mxu0 %v2691
  %2705 = vmatprep.subr.bf16.mxu0 0
  %2706 = vmatpush1.bf16.msra.mxu0 %v2690
  %2707 = vmatprep.subr.bf16.mxu0 0
  %2708 = vmatpush1.bf16.msra.mxu0 %v2689
  %2709 = vmatprep.subr.bf16.mxu0 0
  %2710 = vmatpush1.bf16.msra.mxu0 %v2688
  %2711 = vmatprep.subr.bf16.mxu0 0
  %2712 = vmatpush1.bf16.msra.mxu0 %v2687
  %2713 = vmatprep.subr.bf16.mxu0 0
  %2714 = vmatpush1.bf16.msra.mxu0 %v2686
  %2715 = vmatprep.subr.bf16.mxu0 0
  %2716 = vmatpush1.bf16.msra.mxu0 %v2685
  %2717 = vmatprep.subr.bf16.mxu0 0
  %2718 = vmatpush2.bf16.msra.mxu0 0
  %2719 = vmatprep.subr.bf16.mxu0 0
  %2720 = vmatpush2.bf16.msra.mxu0 0
  %2721 = vmatprep.subr.bf16.mxu0 0
  %2722 = vmatpush2.bf16.msra.mxu0 0
  %2723 = vmatprep.subr.bf16.mxu0 0
  %2724 = vmatpush2.bf16.msra.mxu0 0
  %2725 = vmatprep.subr.bf16.mxu0 0
  %2726 = vmatpush2.bf16.msra.mxu0 0
  %2727 = vmatprep.subr.bf16.mxu0 0
  %2728 = vmatpush2.bf16.msra.mxu0 0
  %2729 = vmatprep.subr.bf16.mxu0 0
  %2730 = vmatpush2.bf16.msra.mxu0 0
  %2731 = vmatprep.subr.bf16.mxu0 0
  %2732 = vmatpush2.bf16.msra.mxu0 0
  %2733 = vmatprep.mubr.bf16.mxu0 0
  %2734 = vmatmul.mubr.bf16.gmra.mxu0 %v2234
  %v2735 = vpop.f32.mrf.mxu0
  %v2736 = vadd.f32 0.0, %v2735
  %v2737 = vpop.f32.mrf.mxu0
  %v2738 = vpop.f32.mrf.mxu0
  %v2739 = vadd.f32 0.0, %v2738
  %v2740 = vpop.f32.mrf.mxu0
  %2741 = vmatprep.mubr.bf16.mxu0 0
  %2742 = vmatmul.mubr.bf16.gmra.mxu0 %v2235
  %v2743 = vpop.f32.mrf.mxu0
  %v2744 = vadd.f32 0.0, %v2743
  %v2745 = vpop.f32.mrf.mxu0
  %v2746 = vpop.f32.mrf.mxu0
  %v2747 = vadd.f32 0.0, %v2746
  %v2748 = vpop.f32.mrf.mxu0
  %2749 = vmatprep.mubr.bf16.mxu0 0
  %2750 = vmatmul.mubr.bf16.gmra.mxu0 %v2236
  %v2751 = vpop.f32.mrf.mxu0
  %v2752 = vadd.f32 0.0, %v2751
  %v2753 = vpop.f32.mrf.mxu0
  %v2754 = vpop.f32.mrf.mxu0
  %v2755 = vadd.f32 0.0, %v2754
  %v2756 = vpop.f32.mrf.mxu0
  %2757 = vmatprep.mubr.bf16.mxu0 0
  %2758 = vmatmul.mubr.bf16.gmra.mxu0 %v2649
  %v2759 = vpop.f32.mrf.mxu0
  %v2760 = vadd.f32 0.0, %v2759
  %v2761 = vpop.f32.mrf.mxu0
  %v2762 = vpop.f32.mrf.mxu0
  %v2763 = vadd.f32 0.0, %v2762
  %v2764 = vpop.f32.mrf.mxu0
  %2765 = vmatprep.mubr.bf16.mxu0 0
  %2766 = vmatmul.mubr.bf16.gmra.mxu0 %v2238
  %v2767 = vpop.f32.mrf.mxu0
  %v2768 = vadd.f32 0.0, %v2767
  %v2769 = vpop.f32.mrf.mxu0
  %v2770 = vpop.f32.mrf.mxu0
  %v2771 = vadd.f32 0.0, %v2770
  %v2772 = vpop.f32.mrf.mxu0
  %2773 = vmatprep.mubr.bf16.mxu0 0
  %2774 = vmatmul.mubr.bf16.gmra.mxu0 %v2239
  %v2775 = vpop.f32.mrf.mxu0
  %v2776 = vadd.f32 0.0, %v2775
  %v2777 = vpop.f32.mrf.mxu0
  %v2778 = vpop.f32.mrf.mxu0
  %v2779 = vadd.f32 0.0, %v2778
  %v2780 = vpop.f32.mrf.mxu0
  %2781 = vmatprep.mubr.bf16.mxu0 0
  %2782 = vmatmul.mubr.bf16.gmra.mxu0 %v2240
  %v2783 = vpop.f32.mrf.mxu0
  %v2784 = vadd.f32 0.0, %v2783
  %v2785 = vpop.f32.mrf.mxu0
  %v2786 = vpop.f32.mrf.mxu0
  %v2787 = vadd.f32 0.0, %v2786
  %v2788 = vpop.f32.mrf.mxu0
  %2789 = vmatprep.mubr.bf16.mxu0 0
  %2790 = vmatmul.mubr.bf16.gmra.mxu0 %v2650
  %v2791 = vpop.f32.mrf.mxu0
  %v2792 = vadd.f32 0.0, %v2791
  %v2793 = vpop.f32.mrf.mxu0
  %v2794 = vpop.f32.mrf.mxu0
  %v2795 = vadd.f32 0.0, %v2794
  %v2796 = vpop.f32.mrf.mxu0
  %2797 = vdwg.mxu0
  %v2798 = vadd.f32 %v2602, %v2736
  %v2799 = vadd.f32 %v2603, %v2739
  %v2800 = vadd.f32 %v2604, %v2744
  %v2801 = vadd.f32 %v2605, %v2747
  %v2802 = vadd.f32 %v2606, %v2752
  %v2803 = vadd.f32 %v2607, %v2755
  %v2804 = vadd.f32 %v2608, %v2760
  %v2805 = vadd.f32 %v2609, %v2763
  %v2806 = vadd.f32 %v2610, %v2768
  %v2807 = vadd.f32 %v2611, %v2771
  %v2808 = vadd.f32 %v2612, %v2776
  %v2809 = vadd.f32 %v2613, %v2779
  %v2810 = vadd.f32 %v2614, %v2784
  %v2811 = vadd.f32 %v2615, %v2787
  %v2812 = vadd.f32 %v2616, %v2792
  %v2813 = vadd.f32 %v2617, %v2795
  %v2814 = vpack.c.bf16 %v2798, %v2798
  %v2815 = vpack.c.bf16 %v2799, %v2799
  %v2816 = vpack.c.bf16 %v2800, %v2800
  %v2817 = vpack.c.bf16 %v2801, %v2801
  %v2818 = vpack.c.bf16 %v2802, %v2802
  %v2819 = vpack.c.bf16 %v2803, %v2803
  %v2820 = vpack.c.bf16 %v2804, %v2804
  %v2821 = vpack.c.bf16 %v2805, %v2805
  %v2822 = vpack.c.bf16 %v2806, %v2806
  %v2823 = vpack.c.bf16 %v2807, %v2807
  %v2824 = vpack.c.bf16 %v2808, %v2808
  %v2825 = vpack.c.bf16 %v2809, %v2809
  %v2826 = vpack.c.bf16 %v2810, %v2810
  %v2827 = vpack.c.bf16 %v2811, %v2811
  %v2828 = vpack.c.bf16 %v2812, %v2812
  %v2829 = vpack.c.bf16 %v2813, %v2813
  %2830 = vst [vmem:[%s4] sm:$0xf] %v2814
  %2831 = vst [vmem:[%s4 + $0x4] sm:$0xf] %v2815
  %2832 = vst [vmem:[%s4 + $0x8] sm:$0xf] %v2816
  %2833 = vst [vmem:[%s4 + $0xc] sm:$0xf] %v2817
  %2834 = vst [vmem:[%s4 + $0x10] sm:$0xf] %v2818
  %2835 = vst [vmem:[%s4 + $0x14] sm:$0xf] %v2819
  %2836 = vst [vmem:[%s4 + $0x18] sm:$0xf] %v2820
  %2837 = vst [vmem:[%s4 + $0x1c] sm:$0xf] %v2821
  %2838 = vst [vmem:[%s4 + $0x20] sm:$0xf] %v2822
  %2839 = vst [vmem:[%s4 + $0x24] sm:$0xf] %v2823
  %2840 = vst [vmem:[%s4 + $0x28] sm:$0xf] %v2824
  %2841 = vst [vmem:[%s4 + $0x2c] sm:$0xf] %v2825
  %2842 = vst [vmem:[%s4 + $0x30] sm:$0xf] %v2826
  %2843 = vst [vmem:[%s4 + $0x34] sm:$0xf] %v2827
  %2844 = vst [vmem:[%s4 + $0x38] sm:$0xf] %v2828
  %2845 = vst [vmem:[%s4 + $0x3c] sm:$0xf] %v2829
  %v2846 = vadd.f32 %v2798, %v2799
  %v2847 = vadd.f32 %v2846, %v2800
  %v2848 = vadd.f32 %v2847, %v2801
  %v2849 = vadd.f32 %v2848, %v2802
  %v2850 = vadd.f32 %v2849, %v2803
  %v2851 = vadd.f32 %v2850, %v2804
  %v2852 = vadd.f32 %v2851, %v2805
  %v2853 = vadd.f32 %v2852, %v2806
  %v2854 = vadd.f32 %v2853, %v2807
  %v2855 = vadd.f32 %v2854, %v2808
  %v2856 = vadd.f32 %v2855, %v2809
  %v2857 = vadd.f32 %v2856, %v2810
  %v2858 = vadd.f32 %v2857, %v2811
  %v2859 = vadd.f32 %v2858, %v2812
  %v2860 = vadd.f32 %v2859, %v2813
  %v2861 = vrot.slane %v2860, 4
  %v2862 = vadd.f32 %v2860, %v2861
  %v2863 = vrot.slane %v2862, 2
  %v2864 = vadd.f32 %v2862, %v2863
  %v2865 = vrot.slane %v2864, 1
  %v2866 = vadd.f32 %v2864, %v2865
  %2867 = vst [vmem:[%s5] sm:$0x1] %v2866
  %v2868 = vmul.f32 %v2798, %v2798
  %v2869 = vmul.f32 %v2799, %v2799
  %v2870 = vmul.f32 %v2800, %v2800
  %v2871 = vmul.f32 %v2801, %v2801
  %v2872 = vmul.f32 %v2802, %v2802
  %v2873 = vmul.f32 %v2803, %v2803
  %v2874 = vmul.f32 %v2804, %v2804
  %v2875 = vmul.f32 %v2805, %v2805
  %v2876 = vmul.f32 %v2806, %v2806
  %v2877 = vmul.f32 %v2807, %v2807
  %v2878 = vmul.f32 %v2808, %v2808
  %v2879 = vmul.f32 %v2809, %v2809
  %v2880 = vmul.f32 %v2810, %v2810
  %v2881 = vmul.f32 %v2811, %v2811
  %v2882 = vmul.f32 %v2812, %v2812
  %v2883 = vmul.f32 %v2813, %v2813
  %v2884 = vadd.f32 %v2868, %v2869
  %v2885 = vadd.f32 %v2884, %v2870
  %v2886 = vadd.f32 %v2885, %v2871
  %v2887 = vadd.f32 %v2886, %v2872
  %v2888 = vadd.f32 %v2887, %v2873
  %v2889 = vadd.f32 %v2888, %v2874
  %v2890 = vadd.f32 %v2889, %v2875
  %v2891 = vadd.f32 %v2890, %v2876
  %v2892 = vadd.f32 %v2891, %v2877
  %v2893 = vadd.f32 %v2892, %v2878
  %v2894 = vadd.f32 %v2893, %v2879
  %v2895 = vadd.f32 %v2894, %v2880
  %v2896 = vadd.f32 %v2895, %v2881
  %v2897 = vadd.f32 %v2896, %v2882
  %v2898 = vadd.f32 %v2897, %v2883
  %v2899 = vrot.slane %v2898, 4
  %v2900 = vadd.f32 %v2898, %v2899
  %v2901 = vrot.slane %v2900, 2
  %v2902 = vadd.f32 %v2900, %v2901
  %v2903 = vrot.slane %v2902, 1
  %v2904 = vadd.f32 %v2902, %v2903
  %2905 = vst [vmem:[%s5 + $0x1] sm:$0x1] %v2904
  // Predicated region
  $region18: #{basic_block_forward.4} parent=0 // pred_check
    _
  $region19: #{basic_block_forward.4} parent=0 // pred_check_branch
    %2907 = sbr.rel (0) target = $region21
  $region20: #{basic_block_forward.4} parent=0 // pred_region
    _
  $region21: #{basic_block_forward.4} parent=0 // pred_fallthru
    _
  // Predicated region
  $region22: #{basic_block_forward.4} parent=0 // pred_check
    _
  $region23: #{basic_block_forward.4} parent=0 // pred_check_branch
    %2909 = sbr.rel (0) target = $region25
  $region24: #{basic_block_forward.4} parent=0 // pred_region
    _
  $region25: #{basic_block_forward.4} parent=0 // pred_fallthru
    _
  // Predicated region
  $region26: #{basic_block_forward.4} parent=0 // pred_check
    _
  $region27: #{basic_block_forward.4} parent=0 // pred_check_branch
    %2911 = sbr.rel (0) target = $region29
  $region28: #{basic_block_forward.4} parent=0 // pred_region
    _
  $region29: #{basic_block_forward.4} parent=0 // pred_fallthru
    _
  // Predicated region
  $region30: #{basic_block_forward.4} parent=0 // pred_check
    _
  $region31: #{basic_block_forward.4} parent=0 // pred_check_branch
    %2913 = sbr.rel (0) target = $region33
  $region32: #{basic_block_forward.4} parent=0 // pred_region
    _
  $region33: #{basic_block_forward.4} parent=0 // pred_fallthru
    _

// kernel: basic_block_forward.3
$region0: #{basic_block_forward.3}
  #allocation0 [shape = 'u32[]', space=smem, size = 0x4, offset = 0x4, fixed_abs, tag = 'smem constant byte address 0x4 - core index']
  #allocation1 [shape = 'u32[144,128]{1,0:T(1,128)}', space=vmem, size = 0x12000, scoped, tag = 'internal scratch']
  %s0 = inlined_call_operand.vmem [shape: bf16[2,9,9,128], index: 0, kind: input, shape index: {}]
  %s1 = inlined_call_operand.vmem [shape: bf16[2,9,9,128], index: 1, kind: input, shape index: {}]
  %s2 = inlined_call_operand.vmem [shape: bf16[2,9,9,128], index: 2, kind: input, shape index: {}]
  %s3 = inlined_call_operand.vmem [shape: bf16[2,9,9,128], index: 3, kind: input, shape index: {}]
  %s4 = inlined_call_operand.vmem [shape: bf16[9,128,128], index: 4, kind: input, shape index: {}]
  %s5 = inlined_call_operand.vmem [shape: bf16[2,8,8,128], index: 5, kind: output, shape index: {0}]
  %s6 = inlined_call_operand.vmem [shape: f32[1,2,128], index: 6, kind: output, shape index: {1}]
  %s7 = inlined_call_operand.vmem [shape: bf16[2,8,8,128], index: 7, kind: output, shape index: {2}]
  %8 = xla_tuple %s5, %s6, %s7
  %s9 = sld [smem:[#allocation0]]
  $region46: #{basic_block_forward.3} parent=0
    _
  %s11 = ssub.s32 1, %s9
  %s12 = scalar_select 0, %s11, %s9
  // Predicated region
  $region2: #{basic_block_forward.3} parent=0 // pred_check
    _
  $region3: #{basic_block_forward.3} parent=0 // pred_check_branch
    %14 = sbr.rel (0) target = $region5
  $region4: #{basic_block_forward.3} parent=0 // pred_region
    _
  $region5: #{basic_block_forward.3} parent=0 // pred_fallthru
    _
  // Predicated region
  $region6: #{basic_block_forward.3} parent=0 // pred_check
    _
  $region7: #{basic_block_forward.3} parent=0 // pred_check_branch
    %16 = sbr.rel (0) target = $region9
  $region8: #{basic_block_forward.3} parent=0 // pred_region
    _
  $region9: #{basic_block_forward.3} parent=0 // pred_fallthru
    _
  // Predicated region
  $region10: #{basic_block_forward.3} parent=0 // pred_check
    _
  $region11: #{basic_block_forward.3} parent=0 // pred_check_branch
    %18 = sbr.rel (0) target = $region13
  $region12: #{basic_block_forward.3} parent=0 // pred_region
    _
  $region13: #{basic_block_forward.3} parent=0 // pred_fallthru
    _
  // Predicated region
  $region14: #{basic_block_forward.3} parent=0 // pred_check
    _
  $region15: #{basic_block_forward.3} parent=0 // pred_check_branch
    %20 = sbr.rel (0) target = $region17
  $region16: #{basic_block_forward.3} parent=0 // pred_region
    _
  $region17: #{basic_block_forward.3} parent=0 // pred_fallthru
    _
  // Predicated region
  $region18: #{basic_block_forward.3} parent=0 // pred_check
    _
  $region19: #{basic_block_forward.3} parent=0 // pred_check_branch
    %22 = sbr.rel (0) target = $region21
  $region20: #{basic_block_forward.3} parent=0 // pred_region
    _
  $region21: #{basic_block_forward.3} parent=0 // pred_fallthru
    _
  %v24 = vld [vmem:[%s0] sm:$0xf]
  %v25 = vld [vmem:[%s0 + $0x8] sm:$0xf]
  %v26 = vld [vmem:[%s0 + $0x10] sm:$0xf]
  %v27 = vld [vmem:[%s0 + $0x18] sm:$0xf]
  %v28 = vld [vmem:[%s0 + $0x20] sm:$0xf]
  %v29 = vld [vmem:[%s0 + $0x28] sm:$0xf]
  %v30 = vld [vmem:[%s0 + $0x30] sm:$0xf]
  %v31 = vld [vmem:[%s0 + $0x38] sm:$0xf]
  %v32 = vld [vmem:[%s0 + $0x40] sm:$0xf]
  %v33 = vld [vmem:[%s0 + $0x48] sm:$0xf]
  %v34 = vld [vmem:[%s0 + $0x50] sm:$0xf]
  %v35 = vld [vmem:[%s0 + $0x58] sm:$0xf]
  %v36 = vld [vmem:[%s0 + $0x60] sm:$0xf]
  %v37 = vld [vmem:[%s0 + $0x68] sm:$0xf]
  %v38 = vld [vmem:[%s0 + $0x70] sm:$0xf]
  %v39 = vld [vmem:[%s0 + $0x78] sm:$0xf]
  %v40 = vld [vmem:[%s0 + $0x80] sm:$0xf]
  %v41 = vld [vmem:[%s0 + $0x88] sm:$0xf]
  %v42 = vld [vmem:[%s2] sm:$0xf]
  %v43 = vld [vmem:[%s2 + $0x8] sm:$0xf]
  %v44 = vld [vmem:[%s2 + $0x10] sm:$0xf]
  %v45 = vld [vmem:[%s2 + $0x18] sm:$0xf]
  %v46 = vld [vmem:[%s2 + $0x20] sm:$0xf]
  %v47 = vld [vmem:[%s2 + $0x28] sm:$0xf]
  %v48 = vld [vmem:[%s2 + $0x30] sm:$0xf]
  %v49 = vld [vmem:[%s2 + $0x38] sm:$0xf]
  %v50 = vld [vmem:[%s2 + $0x48] sm:$0xf]
  %v51 = vld [vmem:[%s2 + $0x50] sm:$0xf]
  %v52 = vld [vmem:[%s2 + $0x58] sm:$0xf]
  %v53 = vld [vmem:[%s2 + $0x60] sm:$0xf]
  %v54 = vld [vmem:[%s2 + $0x68] sm:$0xf]
  %v55 = vld [vmem:[%s2 + $0x70] sm:$0xf]
  %v56 = vld [vmem:[%s2 + $0x78] sm:$0xf]
  %v57 = vld [vmem:[%s2 + $0x80] sm:$0xf]
  %v58 = vld [vmem:[%s4] sm:$0xf]
  %v59 = vld [vmem:[%s4 + $0x4] sm:$0xf]
  %v60 = vld [vmem:[%s4 + $0x8] sm:$0xf]
  %v61 = vld [vmem:[%s4 + $0xc] sm:$0xf]
  %v62 = vld [vmem:[%s4 + $0x10] sm:$0xf]
  %v63 = vld [vmem:[%s4 + $0x14] sm:$0xf]
  %v64 = vld [vmem:[%s4 + $0x18] sm:$0xf]
  %v65 = vld [vmem:[%s4 + $0x1c] sm:$0xf]
  %v66 = vld [vmem:[%s4 + $0x20] sm:$0xf]
  %v67 = vld [vmem:[%s4 + $0x24] sm:$0xf]
  %v68 = vld [vmem:[%s4 + $0x28] sm:$0xf]
  %v69 = vld [vmem:[%s4 + $0x2c] sm:$0xf]
  %v70 = vld [vmem:[%s4 + $0x30] sm:$0xf]
  %v71 = vld [vmem:[%s4 + $0x34] sm:$0xf]
  %v72 = vld [vmem:[%s4 + $0x38] sm:$0xf]
  %v73 = vld [vmem:[%s4 + $0x3c] sm:$0xf]
  %s74 = scalar_lea.vmem %s4, 192
  %v75 = vld [vmem:[%s74] sm:$0xf]
  %v76 = vld [vmem:[%s74 + $0x4] sm:$0xf]
  %v77 = vld [vmem:[%s74 + $0x8] sm:$0xf]
  %v78 = vld [vmem:[%s74 + $0xc] sm:$0xf]
  %v79 = vld [vmem:[%s74 + $0x10] sm:$0xf]
  %v80 = vld [vmem:[%s74 + $0x14] sm:$0xf]
  %v81 = vld [vmem:[%s74 + $0x18] sm:$0xf]
  %v82 = vld [vmem:[%s74 + $0x1c] sm:$0xf]
  %v83 = vld [vmem:[%s74 + $0x20] sm:$0xf]
  %v84 = vld [vmem:[%s74 + $0x24] sm:$0xf]
  %v85 = vld [vmem:[%s74 + $0x28] sm:$0xf]
  %v86 = vld [vmem:[%s74 + $0x2c] sm:$0xf]
  %v87 = vld [vmem:[%s74 + $0x30] sm:$0xf]
  %v88 = vld [vmem:[%s74 + $0x34] sm:$0xf]
  %v89 = vld [vmem:[%s74 + $0x38] sm:$0xf]
  %v90 = vld [vmem:[%s74 + $0x3c] sm:$0xf]
  %v107 = vunpack.c.l.b16 %v42
  %v108 = vunpack.c.l.b16 %v43
  %v109 = vunpack.c.l.b16 %v44
  %v110 = vunpack.c.l.b16 %v45
  %v111 = vunpack.c.l.b16 %v46
  %v112 = vunpack.c.l.b16 %v47
  %v113 = vunpack.c.l.b16 %v48
  %v114 = vunpack.c.l.b16 %v49
  %v115 = vunpack.c.l.b16 %v50
  %v116 = vunpack.c.l.b16 %v51
  %v117 = vunpack.c.l.b16 %v52
  %v118 = vunpack.c.l.b16 %v53
  %v119 = vunpack.c.l.b16 %v54
  %v120 = vunpack.c.l.b16 %v55
  %v121 = vunpack.c.l.b16 %v56
  %v122 = vunpack.c.l.b16 %v57
  %v123 = vpack.c.b16 %v108, %v107
  %v124 = vpack.c.b16 %v110, %v109
  %v125 = vpack.c.b16 %v112, %v111
  %v126 = vpack.c.b16 %v114, %v113
  %v127 = vpack.c.b16 %v116, %v115
  %v128 = vpack.c.b16 %v118, %v117
  %v129 = vpack.c.b16 %v120, %v119
  %v130 = vpack.c.b16 %v122, %v121
  %v155 = vunpack.c.l.b16 %v75
  %v156 = vunpack.c.l.b16 %v76
  %v157 = vunpack.c.l.b16 %v77
  %v158 = vunpack.c.l.b16 %v78
  %v159 = vunpack.c.l.b16 %v79
  %v160 = vunpack.c.l.b16 %v80
  %v161 = vunpack.c.l.b16 %v81
  %v162 = vunpack.c.l.b16 %v82
  %v163 = vunpack.c.l.b16 %v83
  %v164 = vunpack.c.l.b16 %v84
  %v165 = vunpack.c.l.b16 %v85
  %v166 = vunpack.c.l.b16 %v86
  %v167 = vunpack.c.l.b16 %v87
  %v168 = vunpack.c.l.b16 %v88
  %v169 = vunpack.c.l.b16 %v89
  %v170 = vunpack.c.l.b16 %v90
  %v171 = vpack.c.b16 %v156, %v155
  %v172 = vpack.c.b16 %v158, %v157
  %v173 = vpack.c.b16 %v160, %v159
  %v174 = vpack.c.b16 %v162, %v161
  %v175 = vpack.c.b16 %v164, %v163
  %v176 = vpack.c.b16 %v166, %v165
  %v177 = vpack.c.b16 %v168, %v167
  %v178 = vpack.c.b16 %v170, %v169
  %187 = vmatprep.subr.bf16.mxu0 0
  %188 = vmatpush1.bf16.msra.mxu0 %v178
  %189 = vmatprep.subr.bf16.mxu0 0
  %190 = vmatpush1.bf16.msra.mxu0 %v177
  %191 = vmatprep.subr.bf16.mxu0 0
  %192 = vmatpush1.bf16.msra.mxu0 %v176
  %193 = vmatprep.subr.bf16.mxu0 0
  %194 = vmatpush1.bf16.msra.mxu0 %v175
  %195 = vmatprep.subr.bf16.mxu0 0
  %196 = vmatpush1.bf16.msra.mxu0 %v174
  %197 = vmatprep.subr.bf16.mxu0 0
  %198 = vmatpush1.bf16.msra.mxu0 %v173
  %199 = vmatprep.subr.bf16.mxu0 0
  %200 = vmatpush1.bf16.msra.mxu0 %v172
  %201 = vmatprep.subr.bf16.mxu0 0
  %202 = vmatpush1.bf16.msra.mxu0 %v171
  %203 = vmatprep.subr.bf16.mxu0 0
  %204 = vmatpush2.bf16.msra.mxu0 0
  %205 = vmatprep.subr.bf16.mxu0 0
  %206 = vmatpush2.bf16.msra.mxu0 0
  %207 = vmatprep.subr.bf16.mxu0 0
  %208 = vmatpush2.bf16.msra.mxu0 0
  %209 = vmatprep.subr.bf16.mxu0 0
  %210 = vmatpush2.bf16.msra.mxu0 0
  %211 = vmatprep.subr.bf16.mxu0 0
  %212 = vmatpush2.bf16.msra.mxu0 0
  %213 = vmatprep.subr.bf16.mxu0 0
  %214 = vmatpush2.bf16.msra.mxu0 0
  %215 = vmatprep.subr.bf16.mxu0 0
  %216 = vmatpush2.bf16.msra.mxu0 0
  %217 = vmatprep.subr.bf16.mxu0 0
  %218 = vmatpush2.bf16.msra.mxu0 0
  %219 = vmatprep.mubr.bf16.mxu0 0
  %220 = vmatmul.mubr.bf16.gmra.mxu0 %v123
  %v221 = vpop.f32.mrf.mxu0
  %v222 = vadd.f32 0.0, %v221
  %v223 = vpop.f32.mrf.mxu0
  %v224 = vpop.f32.mrf.mxu0
  %v225 = vadd.f32 0.0, %v224
  %v226 = vpop.f32.mrf.mxu0
  %227 = vmatprep.mubr.bf16.mxu0 0
  %228 = vmatmul.mubr.bf16.gmra.mxu0 %v124
  %v229 = vpop.f32.mrf.mxu0
  %v230 = vadd.f32 0.0, %v229
  %v231 = vpop.f32.mrf.mxu0
  %v232 = vpop.f32.mrf.mxu0
  %v233 = vadd.f32 0.0, %v232
  %v234 = vpop.f32.mrf.mxu0
  %235 = vmatprep.mubr.bf16.mxu0 0
  %236 = vmatmul.mubr.bf16.gmra.mxu0 %v125
  %v237 = vpop.f32.mrf.mxu0
  %v238 = vadd.f32 0.0, %v237
  %v239 = vpop.f32.mrf.mxu0
  %v240 = vpop.f32.mrf.mxu0
  %v241 = vadd.f32 0.0, %v240
  %v242 = vpop.f32.mrf.mxu0
  %243 = vmatprep.mubr.bf16.mxu0 0
  %244 = vmatmul.mubr.bf16.gmra.mxu0 %v126
  %v245 = vpop.f32.mrf.mxu0
  %v246 = vadd.f32 0.0, %v245
  %v247 = vpop.f32.mrf.mxu0
  %v248 = vpop.f32.mrf.mxu0
  %v249 = vadd.f32 0.0, %v248
  %v250 = vpop.f32.mrf.mxu0
  %251 = vmatprep.mubr.bf16.mxu0 0
  %252 = vmatmul.mubr.bf16.gmra.mxu0 %v127
  %v253 = vpop.f32.mrf.mxu0
  %v254 = vadd.f32 0.0, %v253
  %v255 = vpop.f32.mrf.mxu0
  %v256 = vpop.f32.mrf.mxu0
  %v257 = vadd.f32 0.0, %v256
  %v258 = vpop.f32.mrf.mxu0
  %259 = vmatprep.mubr.bf16.mxu0 0
  %260 = vmatmul.mubr.bf16.gmra.mxu0 %v128
  %v261 = vpop.f32.mrf.mxu0
  %v262 = vadd.f32 0.0, %v261
  %v263 = vpop.f32.mrf.mxu0
  %v264 = vpop.f32.mrf.mxu0
  %v265 = vadd.f32 0.0, %v264
  %v266 = vpop.f32.mrf.mxu0
  %267 = vmatprep.mubr.bf16.mxu0 0
  %268 = vmatmul.mubr.bf16.gmra.mxu0 %v129
  %v269 = vpop.f32.mrf.mxu0
  %v270 = vadd.f32 0.0, %v269
  %v271 = vpop.f32.mrf.mxu0
  %v272 = vpop.f32.mrf.mxu0
  %v273 = vadd.f32 0.0, %v272
  %v274 = vpop.f32.mrf.mxu0
  %275 = vmatprep.mubr.bf16.mxu0 0
  %276 = vmatmul.mubr.bf16.gmra.mxu0 %v130
  %v277 = vpop.f32.mrf.mxu0
  %v278 = vadd.f32 0.0, %v277
  %v279 = vpop.f32.mrf.mxu0
  %v280 = vpop.f32.mrf.mxu0
  %v281 = vadd.f32 0.0, %v280
  %v282 = vpop.f32.mrf.mxu0
  %283 = vdwg.mxu0
  %v300 = vunpack.c.l.b16 %v24
  %v301 = vunpack.c.l.b16 %v25
  %v302 = vunpack.c.l.b16 %v26
  %v303 = vunpack.c.l.b16 %v27
  %v304 = vunpack.c.l.b16 %v28
  %v305 = vunpack.c.l.b16 %v29
  %v306 = vunpack.c.l.b16 %v30
  %v307 = vunpack.c.l.b16 %v31
  %v308 = vunpack.c.l.b16 %v33
  %v309 = vunpack.c.l.b16 %v34
  %v310 = vunpack.c.l.b16 %v35
  %v311 = vunpack.c.l.b16 %v36
  %v312 = vunpack.c.l.b16 %v37
  %v313 = vunpack.c.l.b16 %v38
  %v314 = vunpack.c.l.b16 %v39
  %v315 = vunpack.c.l.b16 %v40
  %v316 = vpack.c.b16 %v301, %v300
  %v317 = vpack.c.b16 %v303, %v302
  %v318 = vpack.c.b16 %v305, %v304
  %v319 = vpack.c.b16 %v307, %v306
  %v320 = vpack.c.b16 %v309, %v308
  %v321 = vpack.c.b16 %v311, %v310
  %v322 = vpack.c.b16 %v313, %v312
  %v323 = vpack.c.b16 %v315, %v314
  %v348 = vunpack.c.l.b16 %v58
  %v349 = vunpack.c.l.b16 %v59
  %v350 = vunpack.c.l.b16 %v60
  %v351 = vunpack.c.l.b16 %v61
  %v352 = vunpack.c.l.b16 %v62
  %v353 = vunpack.c.l.b16 %v63
  %v354 = vunpack.c.l.b16 %v64
  %v355 = vunpack.c.l.b16 %v65
  %v356 = vunpack.c.l.b16 %v66
  %v357 = vunpack.c.l.b16 %v67
  %v358 = vunpack.c.l.b16 %v68
  %v359 = vunpack.c.l.b16 %v69
  %v360 = vunpack.c.l.b16 %v70
  %v361 = vunpack.c.l.b16 %v71
  %v362 = vunpack.c.l.b16 %v72
  %v363 = vunpack.c.l.b16 %v73
  %v364 = vpack.c.b16 %v349, %v348
  %v365 = vpack.c.b16 %v351, %v350
  %v366 = vpack.c.b16 %v353, %v352
  %v367 = vpack.c.b16 %v355, %v354
  %v368 = vpack.c.b16 %v357, %v356
  %v369 = vpack.c.b16 %v359, %v358
  %v370 = vpack.c.b16 %v361, %v360
  %v371 = vpack.c.b16 %v363, %v362
  %380 = vmatprep.subr.bf16.mxu0 0
  %381 = vmatpush1.bf16.msra.mxu0 %v371
  %382 = vmatprep.subr.bf16.mxu0 0
  %383 = vmatpush1.bf16.msra.mxu0 %v370
  %384 = vmatprep.subr.bf16.mxu0 0
  %385 = vmatpush1.bf16.msra.mxu0 %v369
  %386 = vmatprep.subr.bf16.mxu0 0
  %387 = vmatpush1.bf16.msra.mxu0 %v368
  %388 = vmatprep.subr.bf16.mxu0 0
  %389 = vmatpush1.bf16.msra.mxu0 %v367
  %390 = vmatprep.subr.bf16.mxu0 0
  %391 = vmatpush1.bf16.msra.mxu0 %v366
  %392 = vmatprep.subr.bf16.mxu0 0
  %393 = vmatpush1.bf16.msra.mxu0 %v365
  %394 = vmatprep.subr.bf16.mxu0 0
  %395 = vmatpush1.bf16.msra.mxu0 %v364
  %396 = vmatprep.subr.bf16.mxu0 0
  %397 = vmatpush2.bf16.msra.mxu0 0
  %398 = vmatprep.subr.bf16.mxu0 0
  %399 = vmatpush2.bf16.msra.mxu0 0
  %400 = vmatprep.subr.bf16.mxu0 0
  %401 = vmatpush2.bf16.msra.mxu0 0
  %402 = vmatprep.subr.bf16.mxu0 0
  %403 = vmatpush2.bf16.msra.mxu0 0
  %404 = vmatprep.subr.bf16.mxu0 0
  %405 = vmatpush2.bf16.msra.mxu0 0
  %406 = vmatprep.subr.bf16.mxu0 0
  %407 = vmatpush2.bf16.msra.mxu0 0
  %408 = vmatprep.subr.bf16.mxu0 0
  %409 = vmatpush2.bf16.msra.mxu0 0
  %410 = vmatprep.subr.bf16.mxu0 0
  %411 = vmatpush2.bf16.msra.mxu0 0
  %412 = vmatprep.mubr.bf16.mxu0 0
  %413 = vmatmul.mubr.bf16.gmra.mxu0 %v316
  %v414 = vpop.f32.mrf.mxu0
  %v415 = vadd.f32 %v222, %v414
  %v416 = vpop.f32.mrf.mxu0
  %v417 = vpop.f32.mrf.mxu0
  %v418 = vadd.f32 %v225, %v417
  %v419 = vpop.f32.mrf.mxu0
  %420 = vmatprep.mubr.bf16.mxu0 0
  %421 = vmatmul.mubr.bf16.gmra.mxu0 %v317
  %v422 = vpop.f32.mrf.mxu0
  %v423 = vadd.f32 %v230, %v422
  %v424 = vpop.f32.mrf.mxu0
  %v425 = vpop.f32.mrf.mxu0
  %v426 = vadd.f32 %v233, %v425
  %v427 = vpop.f32.mrf.mxu0
  %428 = vmatprep.mubr.bf16.mxu0 0
  %429 = vmatmul.mubr.bf16.gmra.mxu0 %v318
  %v430 = vpop.f32.mrf.mxu0
  %v431 = vadd.f32 %v238, %v430
  %v432 = vpop.f32.mrf.mxu0
  %v433 = vpop.f32.mrf.mxu0
  %v434 = vadd.f32 %v241, %v433
  %v435 = vpop.f32.mrf.mxu0
  %436 = vmatprep.mubr.bf16.mxu0 0
  %437 = vmatmul.mubr.bf16.gmra.mxu0 %v319
  %v438 = vpop.f32.mrf.mxu0
  %v439 = vadd.f32 %v246, %v438
  %v440 = vpop.f32.mrf.mxu0
  %v441 = vpop.f32.mrf.mxu0
  %v442 = vadd.f32 %v249, %v441
  %v443 = vpop.f32.mrf.mxu0
  %444 = vmatprep.mubr.bf16.mxu0 0
  %445 = vmatmul.mubr.bf16.gmra.mxu0 %v320
  %v446 = vpop.f32.mrf.mxu0
  %v447 = vadd.f32 %v254, %v446
  %v448 = vpop.f32.mrf.mxu0
  %v449 = vpop.f32.mrf.mxu0
  %v450 = vadd.f32 %v257, %v449
  %v451 = vpop.f32.mrf.mxu0
  %452 = vmatprep.mubr.bf16.mxu0 0
  %453 = vmatmul.mubr.bf16.gmra.mxu0 %v321
  %v454 = vpop.f32.mrf.mxu0
  %v455 = vadd.f32 %v262, %v454
  %v456 = vpop.f32.mrf.mxu0
  %v457 = vpop.f32.mrf.mxu0
  %v458 = vadd.f32 %v265, %v457
  %v459 = vpop.f32.mrf.mxu0
  %460 = vmatprep.mubr.bf16.mxu0 0
  %461 = vmatmul.mubr.bf16.gmra.mxu0 %v322
  %v462 = vpop.f32.mrf.mxu0
  %v463 = vadd.f32 %v270, %v462
  %v464 = vpop.f32.mrf.mxu0
  %v465 = vpop.f32.mrf.mxu0
  %v466 = vadd.f32 %v273, %v465
  %v467 = vpop.f32.mrf.mxu0
  %468 = vmatprep.mubr.bf16.mxu0 0
  %469 = vmatmul.mubr.bf16.gmra.mxu0 %v323
  %v470 = vpop.f32.mrf.mxu0
  %v471 = vadd.f32 %v278, %v470
  %v472 = vpop.f32.mrf.mxu0
  %v473 = vpop.f32.mrf.mxu0
  %v474 = vadd.f32 %v281, %v473
  %v475 = vpop.f32.mrf.mxu0
  %476 = vdwg.mxu0
  %s477 = scalar_lea.vmem %s4, 384
  %v478 = vld [vmem:[%s477] sm:$0xf]
  %v479 = vld [vmem:[%s477 + $0x4] sm:$0xf]
  %v480 = vld [vmem:[%s477 + $0x8] sm:$0xf]
  %v481 = vld [vmem:[%s477 + $0xc] sm:$0xf]
  %v482 = vld [vmem:[%s477 + $0x10] sm:$0xf]
  %v483 = vld [vmem:[%s477 + $0x14] sm:$0xf]
  %v484 = vld [vmem:[%s477 + $0x18] sm:$0xf]
  %v485 = vld [vmem:[%s477 + $0x1c] sm:$0xf]
  %v486 = vld [vmem:[%s477 + $0x20] sm:$0xf]
  %v487 = vld [vmem:[%s477 + $0x24] sm:$0xf]
  %v488 = vld [vmem:[%s477 + $0x28] sm:$0xf]
  %v489 = vld [vmem:[%s477 + $0x2c] sm:$0xf]
  %v490 = vld [vmem:[%s477 + $0x30] sm:$0xf]
  %v491 = vld [vmem:[%s477 + $0x34] sm:$0xf]
  %v492 = vld [vmem:[%s477 + $0x38] sm:$0xf]
  %v493 = vld [vmem:[%s477 + $0x3c] sm:$0xf]
  %v496 = vunpack.c.l.b16 %v32
  %v497 = vunpack.c.l.b16 %v41
  %v498 = vpack.c.b16 %v302, %v301
  %v499 = vpack.c.b16 %v304, %v303
  %v500 = vpack.c.b16 %v306, %v305
  %v501 = vpack.c.b16 %v496, %v307
  %v502 = vpack.c.b16 %v310, %v309
  %v503 = vpack.c.b16 %v312, %v311
  %v504 = vpack.c.b16 %v314, %v313
  %v505 = vpack.c.b16 %v497, %v315
  %v530 = vunpack.c.l.b16 %v478
  %v531 = vunpack.c.l.b16 %v479
  %v532 = vunpack.c.l.b16 %v480
  %v533 = vunpack.c.l.b16 %v481
  %v534 = vunpack.c.l.b16 %v482
  %v535 = vunpack.c.l.b16 %v483
  %v536 = vunpack.c.l.b16 %v484
  %v537 = vunpack.c.l.b16 %v485
  %v538 = vunpack.c.l.b16 %v486
  %v539 = vunpack.c.l.b16 %v487
  %v540 = vunpack.c.l.b16 %v488
  %v541 = vunpack.c.l.b16 %v489
  %v542 = vunpack.c.l.b16 %v490
  %v543 = vunpack.c.l.b16 %v491
  %v544 = vunpack.c.l.b16 %v492
  %v545 = vunpack.c.l.b16 %v493
  %v546 = vpack.c.b16 %v531, %v530
  %v547 = vpack.c.b16 %v533, %v532
  %v548 = vpack.c.b16 %v535, %v534
  %v549 = vpack.c.b16 %v537, %v536
  %v550 = vpack.c.b16 %v539, %v538
  %v551 = vpack.c.b16 %v541, %v540
  %v552 = vpack.c.b16 %v543, %v542
  %v553 = vpack.c.b16 %v545, %v544
  %562 = vmatprep.subr.bf16.mxu0 0
  %563 = vmatpush1.bf16.msra.mxu0 %v553
  %564 = vmatprep.subr.bf16.mxu0 0
  %565 = vmatpush1.bf16.msra.mxu0 %v552
  %566 = vmatprep.subr.bf16.mxu0 0
  %567 = vmatpush1.bf16.msra.mxu0 %v551
  %568 = vmatprep.subr.bf16.mxu0 0
  %569 = vmatpush1.bf16.msra.mxu0 %v550
  %570 = vmatprep.subr.bf16.mxu0 0
  %571 = vmatpush1.bf16.msra.mxu0 %v549
  %572 = vmatprep.subr.bf16.mxu0 0
  %573 = vmatpush1.bf16.msra.mxu0 %v548
  %574 = vmatprep.subr.bf16.mxu0 0
  %575 = vmatpush1.bf16.msra.mxu0 %v547
  %576 = vmatprep.subr.bf16.mxu0 0
  %577 = vmatpush1.bf16.msra.mxu0 %v546
  %578 = vmatprep.subr.bf16.mxu0 0
  %579 = vmatpush2.bf16.msra.mxu0 0
  %580 = vmatprep.subr.bf16.mxu0 0
  %581 = vmatpush2.bf16.msra.mxu0 0
  %582 = vmatprep.subr.bf16.mxu0 0
  %583 = vmatpush2.bf16.msra.mxu0 0
  %584 = vmatprep.subr.bf16.mxu0 0
  %585 = vmatpush2.bf16.msra.mxu0 0
  %586 = vmatprep.subr.bf16.mxu0 0
  %587 = vmatpush2.bf16.msra.mxu0 0
  %588 = vmatprep.subr.bf16.mxu0 0
  %589 = vmatpush2.bf16.msra.mxu0 0
  %590 = vmatprep.subr.bf16.mxu0 0
  %591 = vmatpush2.bf16.msra.mxu0 0
  %592 = vmatprep.subr.bf16.mxu0 0
  %593 = vmatpush2.bf16.msra.mxu0 0
  %594 = vmatprep.mubr.bf16.mxu0 0
  %595 = vmatmul.mubr.bf16.gmra.mxu0 %v498
  %v596 = vpop.f32.mrf.mxu0
  %v597 = vadd.f32 0.0, %v596
  %v598 = vpop.f32.mrf.mxu0
  %v599 = vpop.f32.mrf.mxu0
  %v600 = vadd.f32 0.0, %v599
  %v601 = vpop.f32.mrf.mxu0
  %602 = vmatprep.mubr.bf16.mxu0 0
  %603 = vmatmul.mubr.bf16.gmra.mxu0 %v499
  %v604 = vpop.f32.mrf.mxu0
  %v605 = vadd.f32 0.0, %v604
  %v606 = vpop.f32.mrf.mxu0
  %v607 = vpop.f32.mrf.mxu0
  %v608 = vadd.f32 0.0, %v607
  %v609 = vpop.f32.mrf.mxu0
  %610 = vmatprep.mubr.bf16.mxu0 0
  %611 = vmatmul.mubr.bf16.gmra.mxu0 %v500
  %v612 = vpop.f32.mrf.mxu0
  %v613 = vadd.f32 0.0, %v612
  %v614 = vpop.f32.mrf.mxu0
  %v615 = vpop.f32.mrf.mxu0
  %v616 = vadd.f32 0.0, %v615
  %v617 = vpop.f32.mrf.mxu0
  %618 = vmatprep.mubr.bf16.mxu0 0
  %619 = vmatmul.mubr.bf16.gmra.mxu0 %v501
  %v620 = vpop.f32.mrf.mxu0
  %v621 = vadd.f32 0.0, %v620
  %v622 = vpop.f32.mrf.mxu0
  %v623 = vpop.f32.mrf.mxu0
  %v624 = vadd.f32 0.0, %v623
  %v625 = vpop.f32.mrf.mxu0
  %626 = vmatprep.mubr.bf16.mxu0 0
  %627 = vmatmul.mubr.bf16.gmra.mxu0 %v502
  %v628 = vpop.f32.mrf.mxu0
  %v629 = vadd.f32 0.0, %v628
  %v630 = vpop.f32.mrf.mxu0
  %v631 = vpop.f32.mrf.mxu0
  %v632 = vadd.f32 0.0, %v631
  %v633 = vpop.f32.mrf.mxu0
  %634 = vmatprep.mubr.bf16.mxu0 0
  %635 = vmatmul.mubr.bf16.gmra.mxu0 %v503
  %v636 = vpop.f32.mrf.mxu0
  %v637 = vadd.f32 0.0, %v636
  %v638 = vpop.f32.mrf.mxu0
  %v639 = vpop.f32.mrf.mxu0
  %v640 = vadd.f32 0.0, %v639
  %v641 = vpop.f32.mrf.mxu0
  %642 = vmatprep.mubr.bf16.mxu0 0
  %643 = vmatmul.mubr.bf16.gmra.mxu0 %v504
  %v644 = vpop.f32.mrf.mxu0
  %v645 = vadd.f32 0.0, %v644
  %v646 = vpop.f32.mrf.mxu0
  %v647 = vpop.f32.mrf.mxu0
  %v648 = vadd.f32 0.0, %v647
  %v649 = vpop.f32.mrf.mxu0
  %650 = vmatprep.mubr.bf16.mxu0 0
  %651 = vmatmul.mubr.bf16.gmra.mxu0 %v505
  %v652 = vpop.f32.mrf.mxu0
  %v653 = vadd.f32 0.0, %v652
  %v654 = vpop.f32.mrf.mxu0
  %v655 = vpop.f32.mrf.mxu0
  %v656 = vadd.f32 0.0, %v655
  %v657 = vpop.f32.mrf.mxu0
  %658 = vdwg.mxu0
  %v659 = vadd.f32 %v415, %v597
  %v660 = vadd.f32 %v418, %v600
  %v661 = vadd.f32 %v423, %v605
  %v662 = vadd.f32 %v426, %v608
  %v663 = vadd.f32 %v431, %v613
  %v664 = vadd.f32 %v434, %v616
  %v665 = vadd.f32 %v439, %v621
  %v666 = vadd.f32 %v442, %v624
  %v667 = vadd.f32 %v447, %v629
  %v668 = vadd.f32 %v450, %v632
  %v669 = vadd.f32 %v455, %v637
  %v670 = vadd.f32 %v458, %v640
  %v671 = vadd.f32 %v463, %v645
  %v672 = vadd.f32 %v466, %v648
  %v673 = vadd.f32 %v471, %v653
  %v674 = vadd.f32 %v474, %v656
  %v675 = vld [vmem:[%s1] sm:$0xf]
  %v676 = vld [vmem:[%s1 + $0x8] sm:$0xf]
  %v677 = vld [vmem:[%s1 + $0x10] sm:$0xf]
  %v678 = vld [vmem:[%s1 + $0x18] sm:$0xf]
  %v679 = vld [vmem:[%s1 + $0x20] sm:$0xf]
  %v680 = vld [vmem:[%s1 + $0x28] sm:$0xf]
  %v681 = vld [vmem:[%s1 + $0x30] sm:$0xf]
  %v682 = vld [vmem:[%s1 + $0x38] sm:$0xf]
  %v683 = vld [vmem:[%s1 + $0x40] sm:$0xf]
  %v684 = vld [vmem:[%s1 + $0x48] sm:$0xf]
  %v685 = vld [vmem:[%s1 + $0x50] sm:$0xf]
  %v686 = vld [vmem:[%s1 + $0x58] sm:$0xf]
  %v687 = vld [vmem:[%s1 + $0x60] sm:$0xf]
  %v688 = vld [vmem:[%s1 + $0x68] sm:$0xf]
  %v689 = vld [vmem:[%s1 + $0x70] sm:$0xf]
  %v690 = vld [vmem:[%s1 + $0x78] sm:$0xf]
  %v691 = vld [vmem:[%s1 + $0x80] sm:$0xf]
  %v692 = vld [vmem:[%s1 + $0x88] sm:$0xf]
  %v693 = vld [vmem:[%s3] sm:$0xf]
  %v694 = vld [vmem:[%s3 + $0x8] sm:$0xf]
  %v695 = vld [vmem:[%s3 + $0x10] sm:$0xf]
  %v696 = vld [vmem:[%s3 + $0x18] sm:$0xf]
  %v697 = vld [vmem:[%s3 + $0x20] sm:$0xf]
  %v698 = vld [vmem:[%s3 + $0x28] sm:$0xf]
  %v699 = vld [vmem:[%s3 + $0x30] sm:$0xf]
  %v700 = vld [vmem:[%s3 + $0x38] sm:$0xf]
  %v701 = vld [vmem:[%s3 + $0x48] sm:$0xf]
  %v702 = vld [vmem:[%s3 + $0x50] sm:$0xf]
  %v703 = vld [vmem:[%s3 + $0x58] sm:$0xf]
  %v704 = vld [vmem:[%s3 + $0x60] sm:$0xf]
  %v705 = vld [vmem:[%s3 + $0x68] sm:$0xf]
  %v706 = vld [vmem:[%s3 + $0x70] sm:$0xf]
  %v707 = vld [vmem:[%s3 + $0x78] sm:$0xf]
  %v708 = vld [vmem:[%s3 + $0x80] sm:$0xf]
  %s709 = scalar_lea.vmem %s4, 64
  %v710 = vld [vmem:[%s709] sm:$0xf]
  %v711 = vld [vmem:[%s709 + $0x4] sm:$0xf]
  %v712 = vld [vmem:[%s709 + $0x8] sm:$0xf]
  %v713 = vld [vmem:[%s709 + $0xc] sm:$0xf]
  %v714 = vld [vmem:[%s709 + $0x10] sm:$0xf]
  %v715 = vld [vmem:[%s709 + $0x14] sm:$0xf]
  %v716 = vld [vmem:[%s709 + $0x18] sm:$0xf]
  %v717 = vld [vmem:[%s709 + $0x1c] sm:$0xf]
  %v718 = vld [vmem:[%s709 + $0x20] sm:$0xf]
  %v719 = vld [vmem:[%s709 + $0x24] sm:$0xf]
  %v720 = vld [vmem:[%s709 + $0x28] sm:$0xf]
  %v721 = vld [vmem:[%s709 + $0x2c] sm:$0xf]
  %v722 = vld [vmem:[%s709 + $0x30] sm:$0xf]
  %v723 = vld [vmem:[%s709 + $0x34] sm:$0xf]
  %v724 = vld [vmem:[%s709 + $0x38] sm:$0xf]
  %v725 = vld [vmem:[%s709 + $0x3c] sm:$0xf]
  %v742 = vunpack.c.l.b16 %v675
  %v743 = vunpack.c.l.b16 %v676
  %v744 = vunpack.c.l.b16 %v677
  %v745 = vunpack.c.l.b16 %v678
  %v746 = vunpack.c.l.b16 %v679
  %v747 = vunpack.c.l.b16 %v680
  %v748 = vunpack.c.l.b16 %v681
  %v749 = vunpack.c.l.b16 %v682
  %v750 = vunpack.c.l.b16 %v684
  %v751 = vunpack.c.l.b16 %v685
  %v752 = vunpack.c.l.b16 %v686
  %v753 = vunpack.c.l.b16 %v687
  %v754 = vunpack.c.l.b16 %v688
  %v755 = vunpack.c.l.b16 %v689
  %v756 = vunpack.c.l.b16 %v690
  %v757 = vunpack.c.l.b16 %v691
  %v758 = vpack.c.b16 %v743, %v742
  %v759 = vpack.c.b16 %v745, %v744
  %v760 = vpack.c.b16 %v747, %v746
  %v761 = vpack.c.b16 %v749, %v748
  %v762 = vpack.c.b16 %v751, %v750
  %v763 = vpack.c.b16 %v753, %v752
  %v764 = vpack.c.b16 %v755, %v754
  %v765 = vpack.c.b16 %v757, %v756
  %v790 = vunpack.c.l.b16 %v710
  %v791 = vunpack.c.l.b16 %v711
  %v792 = vunpack.c.l.b16 %v712
  %v793 = vunpack.c.l.b16 %v713
  %v794 = vunpack.c.l.b16 %v714
  %v795 = vunpack.c.l.b16 %v715
  %v796 = vunpack.c.l.b16 %v716
  %v797 = vunpack.c.l.b16 %v717
  %v798 = vunpack.c.l.b16 %v718
  %v799 = vunpack.c.l.b16 %v719
  %v800 = vunpack.c.l.b16 %v720
  %v801 = vunpack.c.l.b16 %v721
  %v802 = vunpack.c.l.b16 %v722
  %v803 = vunpack.c.l.b16 %v723
  %v804 = vunpack.c.l.b16 %v724
  %v805 = vunpack.c.l.b16 %v725
  %v806 = vpack.c.b16 %v791, %v790
  %v807 = vpack.c.b16 %v793, %v792
  %v808 = vpack.c.b16 %v795, %v794
  %v809 = vpack.c.b16 %v797, %v796
  %v810 = vpack.c.b16 %v799, %v798
  %v811 = vpack.c.b16 %v801, %v800
  %v812 = vpack.c.b16 %v803, %v802
  %v813 = vpack.c.b16 %v805, %v804
  %822 = vmatprep.subr.bf16.mxu0 0
  %823 = vmatpush1.bf16.msra.mxu0 %v813
  %824 = vmatprep.subr.bf16.mxu0 0
  %825 = vmatpush1.bf16.msra.mxu0 %v812
  %826 = vmatprep.subr.bf16.mxu0 0
  %827 = vmatpush1.bf16.msra.mxu0 %v811
  %828 = vmatprep.subr.bf16.mxu0 0
  %829 = vmatpush1.bf16.msra.mxu0 %v810
  %830 = vmatprep.subr.bf16.mxu0 0
  %831 = vmatpush1.bf16.msra.mxu0 %v809
  %832 = vmatprep.subr.bf16.mxu0 0
  %833 = vmatpush1.bf16.msra.mxu0 %v808
  %834 = vmatprep.subr.bf16.mxu0 0
  %835 = vmatpush1.bf16.msra.mxu0 %v807
  %836 = vmatprep.subr.bf16.mxu0 0
  %837 = vmatpush1.bf16.msra.mxu0 %v806
  %838 = vmatprep.subr.bf16.mxu0 0
  %839 = vmatpush2.bf16.msra.mxu0 0
  %840 = vmatprep.subr.bf16.mxu0 0
  %841 = vmatpush2.bf16.msra.mxu0 0
  %842 = vmatprep.subr.bf16.mxu0 0
  %843 = vmatpush2.bf16.msra.mxu0 0
  %844 = vmatprep.subr.bf16.mxu0 0
  %845 = vmatpush2.bf16.msra.mxu0 0
  %846 = vmatprep.subr.bf16.mxu0 0
  %847 = vmatpush2.bf16.msra.mxu0 0
  %848 = vmatprep.subr.bf16.mxu0 0
  %849 = vmatpush2.bf16.msra.mxu0 0
  %850 = vmatprep.subr.bf16.mxu0 0
  %851 = vmatpush2.bf16.msra.mxu0 0
  %852 = vmatprep.subr.bf16.mxu0 0
  %853 = vmatpush2.bf16.msra.mxu0 0
  %854 = vmatprep.mubr.bf16.mxu0 0
  %855 = vmatmul.mubr.bf16.gmra.mxu0 %v758
  %v856 = vpop.f32.mrf.mxu0
  %v857 = vadd.f32 0.0, %v856
  %v858 = vpop.f32.mrf.mxu0
  %v859 = vpop.f32.mrf.mxu0
  %v860 = vadd.f32 0.0, %v859
  %v861 = vpop.f32.mrf.mxu0
  %862 = vmatprep.mubr.bf16.mxu0 0
  %863 = vmatmul.mubr.bf16.gmra.mxu0 %v759
  %v864 = vpop.f32.mrf.mxu0
  %v865 = vadd.f32 0.0, %v864
  %v866 = vpop.f32.mrf.mxu0
  %v867 = vpop.f32.mrf.mxu0
  %v868 = vadd.f32 0.0, %v867
  %v869 = vpop.f32.mrf.mxu0
  %870 = vmatprep.mubr.bf16.mxu0 0
  %871 = vmatmul.mubr.bf16.gmra.mxu0 %v760
  %v872 = vpop.f32.mrf.mxu0
  %v873 = vadd.f32 0.0, %v872
  %v874 = vpop.f32.mrf.mxu0
  %v875 = vpop.f32.mrf.mxu0
  %v876 = vadd.f32 0.0, %v875
  %v877 = vpop.f32.mrf.mxu0
  %878 = vmatprep.mubr.bf16.mxu0 0
  %879 = vmatmul.mubr.bf16.gmra.mxu0 %v761
  %v880 = vpop.f32.mrf.mxu0
  %v881 = vadd.f32 0.0, %v880
  %v882 = vpop.f32.mrf.mxu0
  %v883 = vpop.f32.mrf.mxu0
  %v884 = vadd.f32 0.0, %v883
  %v885 = vpop.f32.mrf.mxu0
  %886 = vmatprep.mubr.bf16.mxu0 0
  %887 = vmatmul.mubr.bf16.gmra.mxu0 %v762
  %v888 = vpop.f32.mrf.mxu0
  %v889 = vadd.f32 0.0, %v888
  %v890 = vpop.f32.mrf.mxu0
  %v891 = vpop.f32.mrf.mxu0
  %v892 = vadd.f32 0.0, %v891
  %v893 = vpop.f32.mrf.mxu0
  %894 = vmatprep.mubr.bf16.mxu0 0
  %895 = vmatmul.mubr.bf16.gmra.mxu0 %v763
  %v896 = vpop.f32.mrf.mxu0
  %v897 = vadd.f32 0.0, %v896
  %v898 = vpop.f32.mrf.mxu0
  %v899 = vpop.f32.mrf.mxu0
  %v900 = vadd.f32 0.0, %v899
  %v901 = vpop.f32.mrf.mxu0
  %902 = vmatprep.mubr.bf16.mxu0 0
  %903 = vmatmul.mubr.bf16.gmra.mxu0 %v764
  %v904 = vpop.f32.mrf.mxu0
  %v905 = vadd.f32 0.0, %v904
  %v906 = vpop.f32.mrf.mxu0
  %v907 = vpop.f32.mrf.mxu0
  %v908 = vadd.f32 0.0, %v907
  %v909 = vpop.f32.mrf.mxu0
  %910 = vmatprep.mubr.bf16.mxu0 0
  %911 = vmatmul.mubr.bf16.gmra.mxu0 %v765
  %v912 = vpop.f32.mrf.mxu0
  %v913 = vadd.f32 0.0, %v912
  %v914 = vpop.f32.mrf.mxu0
  %v915 = vpop.f32.mrf.mxu0
  %v916 = vadd.f32 0.0, %v915
  %v917 = vpop.f32.mrf.mxu0
  %918 = vdwg.mxu0
  %v919 = vadd.f32 %v659, %v857
  %v920 = vadd.f32 %v660, %v860
  %v921 = vadd.f32 %v661, %v865
  %v922 = vadd.f32 %v662, %v868
  %v923 = vadd.f32 %v663, %v873
  %v924 = vadd.f32 %v664, %v876
  %v925 = vadd.f32 %v665, %v881
  %v926 = vadd.f32 %v666, %v884
  %v927 = vadd.f32 %v667, %v889
  %v928 = vadd.f32 %v668, %v892
  %v929 = vadd.f32 %v669, %v897
  %v930 = vadd.f32 %v670, %v900
  %v931 = vadd.f32 %v671, %v905
  %v932 = vadd.f32 %v672, %v908
  %v933 = vadd.f32 %v673, %v913
  %v934 = vadd.f32 %v674, %v916
  %s935 = scalar_lea.vmem %s4, 256
  %v936 = vld [vmem:[%s935] sm:$0xf]
  %v937 = vld [vmem:[%s935 + $0x4] sm:$0xf]
  %v938 = vld [vmem:[%s935 + $0x8] sm:$0xf]
  %v939 = vld [vmem:[%s935 + $0xc] sm:$0xf]
  %v940 = vld [vmem:[%s935 + $0x10] sm:$0xf]
  %v941 = vld [vmem:[%s935 + $0x14] sm:$0xf]
  %v942 = vld [vmem:[%s935 + $0x18] sm:$0xf]
  %v943 = vld [vmem:[%s935 + $0x1c] sm:$0xf]
  %v944 = vld [vmem:[%s935 + $0x20] sm:$0xf]
  %v945 = vld [vmem:[%s935 + $0x24] sm:$0xf]
  %v946 = vld [vmem:[%s935 + $0x28] sm:$0xf]
  %v947 = vld [vmem:[%s935 + $0x2c] sm:$0xf]
  %v948 = vld [vmem:[%s935 + $0x30] sm:$0xf]
  %v949 = vld [vmem:[%s935 + $0x34] sm:$0xf]
  %v950 = vld [vmem:[%s935 + $0x38] sm:$0xf]
  %v951 = vld [vmem:[%s935 + $0x3c] sm:$0xf]
  %v968 = vunpack.c.l.b16 %v693
  %v969 = vunpack.c.l.b16 %v694
  %v970 = vunpack.c.l.b16 %v695
  %v971 = vunpack.c.l.b16 %v696
  %v972 = vunpack.c.l.b16 %v697
  %v973 = vunpack.c.l.b16 %v698
  %v974 = vunpack.c.l.b16 %v699
  %v975 = vunpack.c.l.b16 %v700
  %v976 = vunpack.c.l.b16 %v701
  %v977 = vunpack.c.l.b16 %v702
  %v978 = vunpack.c.l.b16 %v703
  %v979 = vunpack.c.l.b16 %v704
  %v980 = vunpack.c.l.b16 %v705
  %v981 = vunpack.c.l.b16 %v706
  %v982 = vunpack.c.l.b16 %v707
  %v983 = vunpack.c.l.b16 %v708
  %v984 = vpack.c.b16 %v969, %v968
  %v985 = vpack.c.b16 %v971, %v970
  %v986 = vpack.c.b16 %v973, %v972
  %v987 = vpack.c.b16 %v975, %v974
  %v988 = vpack.c.b16 %v977, %v976
  %v989 = vpack.c.b16 %v979, %v978
  %v990 = vpack.c.b16 %v981, %v980
  %v991 = vpack.c.b16 %v983, %v982
  %v1016 = vunpack.c.l.b16 %v936
  %v1017 = vunpack.c.l.b16 %v937
  %v1018 = vunpack.c.l.b16 %v938
  %v1019 = vunpack.c.l.b16 %v939
  %v1020 = vunpack.c.l.b16 %v940
  %v1021 = vunpack.c.l.b16 %v941
  %v1022 = vunpack.c.l.b16 %v942
  %v1023 = vunpack.c.l.b16 %v943
  %v1024 = vunpack.c.l.b16 %v944
  %v1025 = vunpack.c.l.b16 %v945
  %v1026 = vunpack.c.l.b16 %v946
  %v1027 = vunpack.c.l.b16 %v947
  %v1028 = vunpack.c.l.b16 %v948
  %v1029 = vunpack.c.l.b16 %v949
  %v1030 = vunpack.c.l.b16 %v950
  %v1031 = vunpack.c.l.b16 %v951
  %v1032 = vpack.c.b16 %v1017, %v1016
  %v1033 = vpack.c.b16 %v1019, %v1018
  %v1034 = vpack.c.b16 %v1021, %v1020
  %v1035 = vpack.c.b16 %v1023, %v1022
  %v1036 = vpack.c.b16 %v1025, %v1024
  %v1037 = vpack.c.b16 %v1027, %v1026
  %v1038 = vpack.c.b16 %v1029, %v1028
  %v1039 = vpack.c.b16 %v1031, %v1030
  %1048 = vmatprep.subr.bf16.mxu0 0
  %1049 = vmatpush1.bf16.msra.mxu0 %v1039
  %1050 = vmatprep.subr.bf16.mxu0 0
  %1051 = vmatpush1.bf16.msra.mxu0 %v1038
  %1052 = vmatprep.subr.bf16.mxu0 0
  %1053 = vmatpush1.bf16.msra.mxu0 %v1037
  %1054 = vmatprep.subr.bf16.mxu0 0
  %1055 = vmatpush1.bf16.msra.mxu0 %v1036
  %1056 = vmatprep.subr.bf16.mxu0 0
  %1057 = vmatpush1.bf16.msra.mxu0 %v1035
  %1058 = vmatprep.subr.bf16.mxu0 0
  %1059 = vmatpush1.bf16.msra.mxu0 %v1034
  %1060 = vmatprep.subr.bf16.mxu0 0
  %1061 = vmatpush1.bf16.msra.mxu0 %v1033
  %1062 = vmatprep.subr.bf16.mxu0 0
  %1063 = vmatpush1.bf16.msra.mxu0 %v1032
  %1064 = vmatprep.subr.bf16.mxu0 0
  %1065 = vmatpush2.bf16.msra.mxu0 0
  %1066 = vmatprep.subr.bf16.mxu0 0
  %1067 = vmatpush2.bf16.msra.mxu0 0
  %1068 = vmatprep.subr.bf16.mxu0 0
  %1069 = vmatpush2.bf16.msra.mxu0 0
  %1070 = vmatprep.subr.bf16.mxu0 0
  %1071 = vmatpush2.bf16.msra.mxu0 0
  %1072 = vmatprep.subr.bf16.mxu0 0
  %1073 = vmatpush2.bf16.msra.mxu0 0
  %1074 = vmatprep.subr.bf16.mxu0 0
  %1075 = vmatpush2.bf16.msra.mxu0 0
  %1076 = vmatprep.subr.bf16.mxu0 0
  %1077 = vmatpush2.bf16.msra.mxu0 0
  %1078 = vmatprep.subr.bf16.mxu0 0
  %1079 = vmatpush2.bf16.msra.mxu0 0
  %1080 = vmatprep.mubr.bf16.mxu0 0
  %1081 = vmatmul.mubr.bf16.gmra.mxu0 %v984
  %v1082 = vpop.f32.mrf.mxu0
  %v1083 = vadd.f32 0.0, %v1082
  %v1084 = vpop.f32.mrf.mxu0
  %v1085 = vpop.f32.mrf.mxu0
  %v1086 = vadd.f32 0.0, %v1085
  %v1087 = vpop.f32.mrf.mxu0
  %1088 = vmatprep.mubr.bf16.mxu0 0
  %1089 = vmatmul.mubr.bf16.gmra.mxu0 %v985
  %v1090 = vpop.f32.mrf.mxu0
  %v1091 = vadd.f32 0.0, %v1090
  %v1092 = vpop.f32.mrf.mxu0
  %v1093 = vpop.f32.mrf.mxu0
  %v1094 = vadd.f32 0.0, %v1093
  %v1095 = vpop.f32.mrf.mxu0
  %1096 = vmatprep.mubr.bf16.mxu0 0
  %1097 = vmatmul.mubr.bf16.gmra.mxu0 %v986
  %v1098 = vpop.f32.mrf.mxu0
  %v1099 = vadd.f32 0.0, %v1098
  %v1100 = vpop.f32.mrf.mxu0
  %v1101 = vpop.f32.mrf.mxu0
  %v1102 = vadd.f32 0.0, %v1101
  %v1103 = vpop.f32.mrf.mxu0
  %1104 = vmatprep.mubr.bf16.mxu0 0
  %1105 = vmatmul.mubr.bf16.gmra.mxu0 %v987
  %v1106 = vpop.f32.mrf.mxu0
  %v1107 = vadd.f32 0.0, %v1106
  %v1108 = vpop.f32.mrf.mxu0
  %v1109 = vpop.f32.mrf.mxu0
  %v1110 = vadd.f32 0.0, %v1109
  %v1111 = vpop.f32.mrf.mxu0
  %1112 = vmatprep.mubr.bf16.mxu0 0
  %1113 = vmatmul.mubr.bf16.gmra.mxu0 %v988
  %v1114 = vpop.f32.mrf.mxu0
  %v1115 = vadd.f32 0.0, %v1114
  %v1116 = vpop.f32.mrf.mxu0
  %v1117 = vpop.f32.mrf.mxu0
  %v1118 = vadd.f32 0.0, %v1117
  %v1119 = vpop.f32.mrf.mxu0
  %1120 = vmatprep.mubr.bf16.mxu0 0
  %1121 = vmatmul.mubr.bf16.gmra.mxu0 %v989
  %v1122 = vpop.f32.mrf.mxu0
  %v1123 = vadd.f32 0.0, %v1122
  %v1124 = vpop.f32.mrf.mxu0
  %v1125 = vpop.f32.mrf.mxu0
  %v1126 = vadd.f32 0.0, %v1125
  %v1127 = vpop.f32.mrf.mxu0
  %1128 = vmatprep.mubr.bf16.mxu0 0
  %1129 = vmatmul.mubr.bf16.gmra.mxu0 %v990
  %v1130 = vpop.f32.mrf.mxu0
  %v1131 = vadd.f32 0.0, %v1130
  %v1132 = vpop.f32.mrf.mxu0
  %v1133 = vpop.f32.mrf.mxu0
  %v1134 = vadd.f32 0.0, %v1133
  %v1135 = vpop.f32.mrf.mxu0
  %1136 = vmatprep.mubr.bf16.mxu0 0
  %1137 = vmatmul.mubr.bf16.gmra.mxu0 %v991
  %v1138 = vpop.f32.mrf.mxu0
  %v1139 = vadd.f32 0.0, %v1138
  %v1140 = vpop.f32.mrf.mxu0
  %v1141 = vpop.f32.mrf.mxu0
  %v1142 = vadd.f32 0.0, %v1141
  %v1143 = vpop.f32.mrf.mxu0
  %1144 = vdwg.mxu0
  %v1145 = vadd.f32 %v919, %v1083
  %v1146 = vadd.f32 %v920, %v1086
  %v1147 = vadd.f32 %v921, %v1091
  %v1148 = vadd.f32 %v922, %v1094
  %v1149 = vadd.f32 %v923, %v1099
  %v1150 = vadd.f32 %v924, %v1102
  %v1151 = vadd.f32 %v925, %v1107
  %v1152 = vadd.f32 %v926, %v1110
  %v1153 = vadd.f32 %v927, %v1115
  %v1154 = vadd.f32 %v928, %v1118
  %v1155 = vadd.f32 %v929, %v1123
  %v1156 = vadd.f32 %v930, %v1126
  %v1157 = vadd.f32 %v931, %v1131
  %v1158 = vadd.f32 %v932, %v1134
  %v1159 = vadd.f32 %v933, %v1139
  %v1160 = vadd.f32 %v934, %v1142
  %s1161 = scalar_lea.vmem %s4, 448
  %v1162 = vld [vmem:[%s1161] sm:$0xf]
  %v1163 = vld [vmem:[%s1161 + $0x4] sm:$0xf]
  %v1164 = vld [vmem:[%s1161 + $0x8] sm:$0xf]
  %v1165 = vld [vmem:[%s1161 + $0xc] sm:$0xf]
  %v1166 = vld [vmem:[%s1161 + $0x10] sm:$0xf]
  %v1167 = vld [vmem:[%s1161 + $0x14] sm:$0xf]
  %v1168 = vld [vmem:[%s1161 + $0x18] sm:$0xf]
  %v1169 = vld [vmem:[%s1161 + $0x1c] sm:$0xf]
  %v1170 = vld [vmem:[%s1161 + $0x20] sm:$0xf]
  %v1171 = vld [vmem:[%s1161 + $0x24] sm:$0xf]
  %v1172 = vld [vmem:[%s1161 + $0x28] sm:$0xf]
  %v1173 = vld [vmem:[%s1161 + $0x2c] sm:$0xf]
  %v1174 = vld [vmem:[%s1161 + $0x30] sm:$0xf]
  %v1175 = vld [vmem:[%s1161 + $0x34] sm:$0xf]
  %v1176 = vld [vmem:[%s1161 + $0x38] sm:$0xf]
  %v1177 = vld [vmem:[%s1161 + $0x3c] sm:$0xf]
  %v1180 = vunpack.c.l.b16 %v683
  %v1181 = vunpack.c.l.b16 %v692
  %v1182 = vpack.c.b16 %v744, %v743
  %v1183 = vpack.c.b16 %v746, %v745
  %v1184 = vpack.c.b16 %v748, %v747
  %v1185 = vpack.c.b16 %v1180, %v749
  %v1186 = vpack.c.b16 %v752, %v751
  %v1187 = vpack.c.b16 %v754, %v753
  %v1188 = vpack.c.b16 %v756, %v755
  %v1189 = vpack.c.b16 %v1181, %v757
  %v1214 = vunpack.c.l.b16 %v1162
  %v1215 = vunpack.c.l.b16 %v1163
  %v1216 = vunpack.c.l.b16 %v1164
  %v1217 = vunpack.c.l.b16 %v1165
  %v1218 = vunpack.c.l.b16 %v1166
  %v1219 = vunpack.c.l.b16 %v1167
  %v1220 = vunpack.c.l.b16 %v1168
  %v1221 = vunpack.c.l.b16 %v1169
  %v1222 = vunpack.c.l.b16 %v1170
  %v1223 = vunpack.c.l.b16 %v1171
  %v1224 = vunpack.c.l.b16 %v1172
  %v1225 = vunpack.c.l.b16 %v1173
  %v1226 = vunpack.c.l.b16 %v1174
  %v1227 = vunpack.c.l.b16 %v1175
  %v1228 = vunpack.c.l.b16 %v1176
  %v1229 = vunpack.c.l.b16 %v1177
  %v1230 = vpack.c.b16 %v1215, %v1214
  %v1231 = vpack.c.b16 %v1217, %v1216
  %v1232 = vpack.c.b16 %v1219, %v1218
  %v1233 = vpack.c.b16 %v1221, %v1220
  %v1234 = vpack.c.b16 %v1223, %v1222
  %v1235 = vpack.c.b16 %v1225, %v1224
  %v1236 = vpack.c.b16 %v1227, %v1226
  %v1237 = vpack.c.b16 %v1229, %v1228
  %1246 = vmatprep.subr.bf16.mxu0 0
  %1247 = vmatpush1.bf16.msra.mxu0 %v1237
  %1248 = vmatprep.subr.bf16.mxu0 0
  %1249 = vmatpush1.bf16.msra.mxu0 %v1236
  %1250 = vmatprep.subr.bf16.mxu0 0
  %1251 = vmatpush1.bf16.msra.mxu0 %v1235
  %1252 = vmatprep.subr.bf16.mxu0 0
  %1253 = vmatpush1.bf16.msra.mxu0 %v1234
  %1254 = vmatprep.subr.bf16.mxu0 0
  %1255 = vmatpush1.bf16.msra.mxu0 %v1233
  %1256 = vmatprep.subr.bf16.mxu0 0
  %1257 = vmatpush1.bf16.msra.mxu0 %v1232
  %1258 = vmatprep.subr.bf16.mxu0 0
  %1259 = vmatpush1.bf16.msra.mxu0 %v1231
  %1260 = vmatprep.subr.bf16.mxu0 0
  %1261 = vmatpush1.bf16.msra.mxu0 %v1230
  %1262 = vmatprep.subr.bf16.mxu0 0
  %1263 = vmatpush2.bf16.msra.mxu0 0
  %1264 = vmatprep.subr.bf16.mxu0 0
  %1265 = vmatpush2.bf16.msra.mxu0 0
  %1266 = vmatprep.subr.bf16.mxu0 0
  %1267 = vmatpush2.bf16.msra.mxu0 0
  %1268 = vmatprep.subr.bf16.mxu0 0
  %1269 = vmatpush2.bf16.msra.mxu0 0
  %1270 = vmatprep.subr.bf16.mxu0 0
  %1271 = vmatpush2.bf16.msra.mxu0 0
  %1272 = vmatprep.subr.bf16.mxu0 0
  %1273 = vmatpush2.bf16.msra.mxu0 0
  %1274 = vmatprep.subr.bf16.mxu0 0
  %1275 = vmatpush2.bf16.msra.mxu0 0
  %1276 = vmatprep.subr.bf16.mxu0 0
  %1277 = vmatpush2.bf16.msra.mxu0 0
  %1278 = vmatprep.mubr.bf16.mxu0 0
  %1279 = vmatmul.mubr.bf16.gmra.mxu0 %v1182
  %v1280 = vpop.f32.mrf.mxu0
  %v1281 = vadd.f32 0.0, %v1280
  %v1282 = vpop.f32.mrf.mxu0
  %v1283 = vpop.f32.mrf.mxu0
  %v1284 = vadd.f32 0.0, %v1283
  %v1285 = vpop.f32.mrf.mxu0
  %1286 = vmatprep.mubr.bf16.mxu0 0
  %1287 = vmatmul.mubr.bf16.gmra.mxu0 %v1183
  %v1288 = vpop.f32.mrf.mxu0
  %v1289 = vadd.f32 0.0, %v1288
  %v1290 = vpop.f32.mrf.mxu0
  %v1291 = vpop.f32.mrf.mxu0
  %v1292 = vadd.f32 0.0, %v1291
  %v1293 = vpop.f32.mrf.mxu0
  %1294 = vmatprep.mubr.bf16.mxu0 0
  %1295 = vmatmul.mubr.bf16.gmra.mxu0 %v1184
  %v1296 = vpop.f32.mrf.mxu0
  %v1297 = vadd.f32 0.0, %v1296
  %v1298 = vpop.f32.mrf.mxu0
  %v1299 = vpop.f32.mrf.mxu0
  %v1300 = vadd.f32 0.0, %v1299
  %v1301 = vpop.f32.mrf.mxu0
  %1302 = vmatprep.mubr.bf16.mxu0 0
  %1303 = vmatmul.mubr.bf16.gmra.mxu0 %v1185
  %v1304 = vpop.f32.mrf.mxu0
  %v1305 = vadd.f32 0.0, %v1304
  %v1306 = vpop.f32.mrf.mxu0
  %v1307 = vpop.f32.mrf.mxu0
  %v1308 = vadd.f32 0.0, %v1307
  %v1309 = vpop.f32.mrf.mxu0
  %1310 = vmatprep.mubr.bf16.mxu0 0
  %1311 = vmatmul.mubr.bf16.gmra.mxu0 %v1186
  %v1312 = vpop.f32.mrf.mxu0
  %v1313 = vadd.f32 0.0, %v1312
  %v1314 = vpop.f32.mrf.mxu0
  %v1315 = vpop.f32.mrf.mxu0
  %v1316 = vadd.f32 0.0, %v1315
  %v1317 = vpop.f32.mrf.mxu0
  %1318 = vmatprep.mubr.bf16.mxu0 0
  %1319 = vmatmul.mubr.bf16.gmra.mxu0 %v1187
  %v1320 = vpop.f32.mrf.mxu0
  %v1321 = vadd.f32 0.0, %v1320
  %v1322 = vpop.f32.mrf.mxu0
  %v1323 = vpop.f32.mrf.mxu0
  %v1324 = vadd.f32 0.0, %v1323
  %v1325 = vpop.f32.mrf.mxu0
  %1326 = vmatprep.mubr.bf16.mxu0 0
  %1327 = vmatmul.mubr.bf16.gmra.mxu0 %v1188
  %v1328 = vpop.f32.mrf.mxu0
  %v1329 = vadd.f32 0.0, %v1328
  %v1330 = vpop.f32.mrf.mxu0
  %v1331 = vpop.f32.mrf.mxu0
  %v1332 = vadd.f32 0.0, %v1331
  %v1333 = vpop.f32.mrf.mxu0
  %1334 = vmatprep.mubr.bf16.mxu0 0
  %1335 = vmatmul.mubr.bf16.gmra.mxu0 %v1189
  %v1336 = vpop.f32.mrf.mxu0
  %v1337 = vadd.f32 0.0, %v1336
  %v1338 = vpop.f32.mrf.mxu0
  %v1339 = vpop.f32.mrf.mxu0
  %v1340 = vadd.f32 0.0, %v1339
  %v1341 = vpop.f32.mrf.mxu0
  %1342 = vdwg.mxu0
  %v1343 = vadd.f32 %v1145, %v1281
  %v1344 = vadd.f32 %v1146, %v1284
  %v1345 = vadd.f32 %v1147, %v1289
  %v1346 = vadd.f32 %v1148, %v1292
  %v1347 = vadd.f32 %v1149, %v1297
  %v1348 = vadd.f32 %v1150, %v1300
  %v1349 = vadd.f32 %v1151, %v1305
  %v1350 = vadd.f32 %v1152, %v1308
  %v1351 = vadd.f32 %v1153, %v1313
  %v1352 = vadd.f32 %v1154, %v1316
  %v1353 = vadd.f32 %v1155, %v1321
  %v1354 = vadd.f32 %v1156, %v1324
  %v1355 = vadd.f32 %v1157, %v1329
  %v1356 = vadd.f32 %v1158, %v1332
  %v1357 = vadd.f32 %v1159, %v1337
  %v1358 = vadd.f32 %v1160, %v1340
  %v1359 = vld [vmem:[%s0] sm:$0xf]
  %v1360 = vld [vmem:[%s0 + $0x4] sm:$0x1]
  %v1361 = vld [vmem:[%s0 + $0x8] sm:$0xf]
  %v1362 = vld [vmem:[%s0 + $0xc] sm:$0x1]
  %v1363 = vld [vmem:[%s0 + $0x10] sm:$0xf]
  %v1364 = vld [vmem:[%s0 + $0x14] sm:$0x1]
  %v1365 = vld [vmem:[%s0 + $0x18] sm:$0xf]
  %v1366 = vld [vmem:[%s0 + $0x1c] sm:$0x1]
  %v1367 = vld [vmem:[%s0 + $0x20] sm:$0xf]
  %v1368 = vld [vmem:[%s0 + $0x24] sm:$0x1]
  %v1369 = vld [vmem:[%s0 + $0x28] sm:$0xf]
  %v1370 = vld [vmem:[%s0 + $0x2c] sm:$0x1]
  %v1371 = vld [vmem:[%s0 + $0x30] sm:$0xf]
  %v1372 = vld [vmem:[%s0 + $0x34] sm:$0x1]
  %v1373 = vld [vmem:[%s0 + $0x38] sm:$0xf]
  %v1374 = vld [vmem:[%s0 + $0x3c] sm:$0x1]
  %v1375 = vld [vmem:[%s0 + $0x40] sm:$0xf]
  %v1376 = vld [vmem:[%s0 + $0x44] sm:$0x1]
  %v1377 = vld [vmem:[%s0 + $0x48] sm:$0xf]
  %v1378 = vld [vmem:[%s0 + $0x4c] sm:$0x1]
  %v1379 = vld [vmem:[%s0 + $0x50] sm:$0xf]
  %v1380 = vld [vmem:[%s0 + $0x54] sm:$0x1]
  %v1381 = vld [vmem:[%s0 + $0x58] sm:$0xf]
  %v1382 = vld [vmem:[%s0 + $0x5c] sm:$0x1]
  %v1383 = vld [vmem:[%s0 + $0x60] sm:$0xf]
  %v1384 = vld [vmem:[%s0 + $0x64] sm:$0x1]
  %v1385 = vld [vmem:[%s0 + $0x68] sm:$0xf]
  %v1386 = vld [vmem:[%s0 + $0x6c] sm:$0x1]
  %v1387 = vld [vmem:[%s0 + $0x70] sm:$0xf]
  %v1388 = vld [vmem:[%s0 + $0x74] sm:$0x1]
  %v1389 = vld [vmem:[%s0 + $0x78] sm:$0xf]
  %v1390 = vld [vmem:[%s0 + $0x7c] sm:$0x1]
  %v1391 = vld [vmem:[%s0 + $0x80] sm:$0xf]
  %v1392 = vld [vmem:[%s0 + $0x84] sm:$0x1]
  %v1393 = vld [vmem:[%s0 + $0x88] sm:$0xf]
  %v1394 = vld [vmem:[%s0 + $0x8c] sm:$0x1]
  %v1395 = vld [vmem:[%s2] sm:$0xf]
  %v1396 = vld [vmem:[%s2 + $0x4] sm:$0x1]
  %v1397 = vld [vmem:[%s2 + $0x8] sm:$0xf]
  %v1398 = vld [vmem:[%s2 + $0xc] sm:$0x1]
  %v1399 = vld [vmem:[%s2 + $0x10] sm:$0xf]
  %v1400 = vld [vmem:[%s2 + $0x14] sm:$0x1]
  %v1401 = vld [vmem:[%s2 + $0x18] sm:$0xf]
  %v1402 = vld [vmem:[%s2 + $0x1c] sm:$0x1]
  %v1403 = vld [vmem:[%s2 + $0x20] sm:$0xf]
  %v1404 = vld [vmem:[%s2 + $0x24] sm:$0x1]
  %v1405 = vld [vmem:[%s2 + $0x28] sm:$0xf]
  %v1406 = vld [vmem:[%s2 + $0x2c] sm:$0x1]
  %v1407 = vld [vmem:[%s2 + $0x30] sm:$0xf]
  %v1408 = vld [vmem:[%s2 + $0x34] sm:$0x1]
  %v1409 = vld [vmem:[%s2 + $0x38] sm:$0xf]
  %v1410 = vld [vmem:[%s2 + $0x3c] sm:$0x1]
  %v1411 = vld [vmem:[%s2 + $0x48] sm:$0xf]
  %v1412 = vld [vmem:[%s2 + $0x4c] sm:$0x1]
  %v1413 = vld [vmem:[%s2 + $0x50] sm:$0xf]
  %v1414 = vld [vmem:[%s2 + $0x54] sm:$0x1]
  %v1415 = vld [vmem:[%s2 + $0x58] sm:$0xf]
  %v1416 = vld [vmem:[%s2 + $0x5c] sm:$0x1]
  %v1417 = vld [vmem:[%s2 + $0x60] sm:$0xf]
  %v1418 = vld [vmem:[%s2 + $0x64] sm:$0x1]
  %v1419 = vld [vmem:[%s2 + $0x68] sm:$0xf]
  %v1420 = vld [vmem:[%s2 + $0x6c] sm:$0x1]
  %v1421 = vld [vmem:[%s2 + $0x70] sm:$0xf]
  %v1422 = vld [vmem:[%s2 + $0x74] sm:$0x1]
  %v1423 = vld [vmem:[%s2 + $0x78] sm:$0xf]
  %v1424 = vld [vmem:[%s2 + $0x7c] sm:$0x1]
  %v1425 = vld [vmem:[%s2 + $0x80] sm:$0xf]
  %v1426 = vld [vmem:[%s2 + $0x84] sm:$0x1]
  %vm1427 = vsmask.f32 3328
  %vm1428 = vsmask.f32 7440
  %vm1429 = vmor %vm1427, %vm1428
  %v1431 = vshrl.u32 %v1359, 16
  %v1433 = vrot.slane %v1431, 4
  %v1434 = vshll.u32 %v1359, 16
  %v1436 = vrot.slane %v1434, 5
  %v1437 = vor.u32 %v1433, %v1436
  %v1438 = vrot.slane %v1437, 4
  %v1440 = vshll.u32 %v1360, 16
  %v1442 = vrot.slane %v1440, 5
  %v1443 = vsel %vm1429, %v1438, %v1442
  %v1445 = vshrl.u32 %v1361, 16
  %v1447 = vrot.slane %v1445, 4
  %v1448 = vshll.u32 %v1361, 16
  %v1450 = vrot.slane %v1448, 5
  %v1451 = vor.u32 %v1447, %v1450
  %v1452 = vrot.slane %v1451, 4
  %v1454 = vshll.u32 %v1362, 16
  %v1456 = vrot.slane %v1454, 5
  %v1457 = vsel %vm1429, %v1452, %v1456
  %v1459 = vshrl.u32 %v1363, 16
  %v1461 = vrot.slane %v1459, 4
  %v1462 = vshll.u32 %v1363, 16
  %v1464 = vrot.slane %v1462, 5
  %v1465 = vor.u32 %v1461, %v1464
  %v1466 = vrot.slane %v1465, 4
  %v1468 = vshll.u32 %v1364, 16
  %v1470 = vrot.slane %v1468, 5
  %v1471 = vsel %vm1429, %v1466, %v1470
  %v1473 = vshrl.u32 %v1365, 16
  %v1475 = vrot.slane %v1473, 4
  %v1476 = vshll.u32 %v1365, 16
  %v1478 = vrot.slane %v1476, 5
  %v1479 = vor.u32 %v1475, %v1478
  %v1480 = vrot.slane %v1479, 4
  %v1482 = vshll.u32 %v1366, 16
  %v1484 = vrot.slane %v1482, 5
  %v1485 = vsel %vm1429, %v1480, %v1484
  %v1487 = vshrl.u32 %v1367, 16
  %v1489 = vrot.slane %v1487, 4
  %v1490 = vshll.u32 %v1367, 16
  %v1492 = vrot.slane %v1490, 5
  %v1493 = vor.u32 %v1489, %v1492
  %v1494 = vrot.slane %v1493, 4
  %v1496 = vshll.u32 %v1368, 16
  %v1498 = vrot.slane %v1496, 5
  %v1499 = vsel %vm1429, %v1494, %v1498
  %v1501 = vshrl.u32 %v1369, 16
  %v1503 = vrot.slane %v1501, 4
  %v1504 = vshll.u32 %v1369, 16
  %v1506 = vrot.slane %v1504, 5
  %v1507 = vor.u32 %v1503, %v1506
  %v1508 = vrot.slane %v1507, 4
  %v1510 = vshll.u32 %v1370, 16
  %v1512 = vrot.slane %v1510, 5
  %v1513 = vsel %vm1429, %v1508, %v1512
  %v1515 = vshrl.u32 %v1371, 16
  %v1517 = vrot.slane %v1515, 4
  %v1518 = vshll.u32 %v1371, 16
  %v1520 = vrot.slane %v1518, 5
  %v1521 = vor.u32 %v1517, %v1520
  %v1522 = vrot.slane %v1521, 4
  %v1524 = vshll.u32 %v1372, 16
  %v1526 = vrot.slane %v1524, 5
  %v1527 = vsel %vm1429, %v1522, %v1526
  %v1529 = vshrl.u32 %v1373, 16
  %v1531 = vrot.slane %v1529, 4
  %v1532 = vshll.u32 %v1373, 16
  %v1534 = vrot.slane %v1532, 5
  %v1535 = vor.u32 %v1531, %v1534
  %v1536 = vrot.slane %v1535, 4
  %v1538 = vshll.u32 %v1374, 16
  %v1540 = vrot.slane %v1538, 5
  %v1541 = vsel %vm1429, %v1536, %v1540
  %v1543 = vshrl.u32 %v1377, 16
  %v1545 = vrot.slane %v1543, 4
  %v1546 = vshll.u32 %v1377, 16
  %v1548 = vrot.slane %v1546, 5
  %v1549 = vor.u32 %v1545, %v1548
  %v1550 = vrot.slane %v1549, 4
  %v1552 = vshll.u32 %v1378, 16
  %v1554 = vrot.slane %v1552, 5
  %v1555 = vsel %vm1429, %v1550, %v1554
  %v1557 = vshrl.u32 %v1379, 16
  %v1559 = vrot.slane %v1557, 4
  %v1560 = vshll.u32 %v1379, 16
  %v1562 = vrot.slane %v1560, 5
  %v1563 = vor.u32 %v1559, %v1562
  %v1564 = vrot.slane %v1563, 4
  %v1566 = vshll.u32 %v1380, 16
  %v1568 = vrot.slane %v1566, 5
  %v1569 = vsel %vm1429, %v1564, %v1568
  %v1571 = vshrl.u32 %v1381, 16
  %v1573 = vrot.slane %v1571, 4
  %v1574 = vshll.u32 %v1381, 16
  %v1576 = vrot.slane %v1574, 5
  %v1577 = vor.u32 %v1573, %v1576
  %v1578 = vrot.slane %v1577, 4
  %v1580 = vshll.u32 %v1382, 16
  %v1582 = vrot.slane %v1580, 5
  %v1583 = vsel %vm1429, %v1578, %v1582
  %v1585 = vshrl.u32 %v1383, 16
  %v1587 = vrot.slane %v1585, 4
  %v1588 = vshll.u32 %v1383, 16
  %v1590 = vrot.slane %v1588, 5
  %v1591 = vor.u32 %v1587, %v1590
  %v1592 = vrot.slane %v1591, 4
  %v1594 = vshll.u32 %v1384, 16
  %v1596 = vrot.slane %v1594, 5
  %v1597 = vsel %vm1429, %v1592, %v1596
  %v1599 = vshrl.u32 %v1385, 16
  %v1601 = vrot.slane %v1599, 4
  %v1602 = vshll.u32 %v1385, 16
  %v1604 = vrot.slane %v1602, 5
  %v1605 = vor.u32 %v1601, %v1604
  %v1606 = vrot.slane %v1605, 4
  %v1608 = vshll.u32 %v1386, 16
  %v1610 = vrot.slane %v1608, 5
  %v1611 = vsel %vm1429, %v1606, %v1610
  %v1613 = vshrl.u32 %v1387, 16
  %v1615 = vrot.slane %v1613, 4
  %v1616 = vshll.u32 %v1387, 16
  %v1618 = vrot.slane %v1616, 5
  %v1619 = vor.u32 %v1615, %v1618
  %v1620 = vrot.slane %v1619, 4
  %v1622 = vshll.u32 %v1388, 16
  %v1624 = vrot.slane %v1622, 5
  %v1625 = vsel %vm1429, %v1620, %v1624
  %v1627 = vshrl.u32 %v1389, 16
  %v1629 = vrot.slane %v1627, 4
  %v1630 = vshll.u32 %v1389, 16
  %v1632 = vrot.slane %v1630, 5
  %v1633 = vor.u32 %v1629, %v1632
  %v1634 = vrot.slane %v1633, 4
  %v1636 = vshll.u32 %v1390, 16
  %v1638 = vrot.slane %v1636, 5
  %v1639 = vsel %vm1429, %v1634, %v1638
  %v1641 = vshrl.u32 %v1391, 16
  %v1643 = vrot.slane %v1641, 4
  %v1644 = vshll.u32 %v1391, 16
  %v1646 = vrot.slane %v1644, 5
  %v1647 = vor.u32 %v1643, %v1646
  %v1648 = vrot.slane %v1647, 4
  %v1650 = vshll.u32 %v1392, 16
  %v1652 = vrot.slane %v1650, 5
  %v1653 = vsel %vm1429, %v1648, %v1652
  %s1654 = scalar_lea.vmem %s4, 128
  %v1655 = vld [vmem:[%s1654] sm:$0xf]
  %v1656 = vld [vmem:[%s1654 + $0x4] sm:$0xf]
  %v1657 = vld [vmem:[%s1654 + $0x8] sm:$0xf]
  %v1658 = vld [vmem:[%s1654 + $0xc] sm:$0xf]
  %v1659 = vld [vmem:[%s1654 + $0x10] sm:$0xf]
  %v1660 = vld [vmem:[%s1654 + $0x14] sm:$0xf]
  %v1661 = vld [vmem:[%s1654 + $0x18] sm:$0xf]
  %v1662 = vld [vmem:[%s1654 + $0x1c] sm:$0xf]
  %v1663 = vld [vmem:[%s1654 + $0x20] sm:$0xf]
  %v1664 = vld [vmem:[%s1654 + $0x24] sm:$0xf]
  %v1665 = vld [vmem:[%s1654 + $0x28] sm:$0xf]
  %v1666 = vld [vmem:[%s1654 + $0x2c] sm:$0xf]
  %v1667 = vld [vmem:[%s1654 + $0x30] sm:$0xf]
  %v1668 = vld [vmem:[%s1654 + $0x34] sm:$0xf]
  %v1669 = vld [vmem:[%s1654 + $0x38] sm:$0xf]
  %v1670 = vld [vmem:[%s1654 + $0x3c] sm:$0xf]
  %v1671 = vunpack.c.l.b16 %v1443
  %v1672 = vunpack.c.l.b16 %v1457
  %v1673 = vunpack.c.l.b16 %v1471
  %v1674 = vunpack.c.l.b16 %v1485
  %v1675 = vunpack.c.l.b16 %v1499
  %v1676 = vunpack.c.l.b16 %v1513
  %v1677 = vunpack.c.l.b16 %v1527
  %v1678 = vunpack.c.l.b16 %v1541
  %v1679 = vunpack.c.l.b16 %v1555
  %v1680 = vunpack.c.l.b16 %v1569
  %v1681 = vunpack.c.l.b16 %v1583
  %v1682 = vunpack.c.l.b16 %v1597
  %v1683 = vunpack.c.l.b16 %v1611
  %v1684 = vunpack.c.l.b16 %v1625
  %v1685 = vunpack.c.l.b16 %v1639
  %v1686 = vunpack.c.l.b16 %v1653
  %v1687 = vpack.c.b16 %v1672, %v1671
  %v1688 = vpack.c.b16 %v1674, %v1673
  %v1689 = vpack.c.b16 %v1676, %v1675
  %v1690 = vpack.c.b16 %v1678, %v1677
  %v1691 = vpack.c.b16 %v1680, %v1679
  %v1692 = vpack.c.b16 %v1682, %v1681
  %v1693 = vpack.c.b16 %v1684, %v1683
  %v1694 = vpack.c.b16 %v1686, %v1685
  %v1719 = vunpack.c.l.b16 %v1655
  %v1720 = vunpack.c.l.b16 %v1656
  %v1721 = vunpack.c.l.b16 %v1657
  %v1722 = vunpack.c.l.b16 %v1658
  %v1723 = vunpack.c.l.b16 %v1659
  %v1724 = vunpack.c.l.b16 %v1660
  %v1725 = vunpack.c.l.b16 %v1661
  %v1726 = vunpack.c.l.b16 %v1662
  %v1727 = vunpack.c.l.b16 %v1663
  %v1728 = vunpack.c.l.b16 %v1664
  %v1729 = vunpack.c.l.b16 %v1665
  %v1730 = vunpack.c.l.b16 %v1666
  %v1731 = vunpack.c.l.b16 %v1667
  %v1732 = vunpack.c.l.b16 %v1668
  %v1733 = vunpack.c.l.b16 %v1669
  %v1734 = vunpack.c.l.b16 %v1670
  %v1735 = vpack.c.b16 %v1720, %v1719
  %v1736 = vpack.c.b16 %v1722, %v1721
  %v1737 = vpack.c.b16 %v1724, %v1723
  %v1738 = vpack.c.b16 %v1726, %v1725
  %v1739 = vpack.c.b16 %v1728, %v1727
  %v1740 = vpack.c.b16 %v1730, %v1729
  %v1741 = vpack.c.b16 %v1732, %v1731
  %v1742 = vpack.c.b16 %v1734, %v1733
  %1751 = vmatprep.subr.bf16.mxu0 0
  %1752 = vmatpush1.bf16.msra.mxu0 %v1742
  %1753 = vmatprep.subr.bf16.mxu0 0
  %1754 = vmatpush1.bf16.msra.mxu0 %v1741
  %1755 = vmatprep.subr.bf16.mxu0 0
  %1756 = vmatpush1.bf16.msra.mxu0 %v1740
  %1757 = vmatprep.subr.bf16.mxu0 0
  %1758 = vmatpush1.bf16.msra.mxu0 %v1739
  %1759 = vmatprep.subr.bf16.mxu0 0
  %1760 = vmatpush1.bf16.msra.mxu0 %v1738
  %1761 = vmatprep.subr.bf16.mxu0 0
  %1762 = vmatpush1.bf16.msra.mxu0 %v1737
  %1763 = vmatprep.subr.bf16.mxu0 0
  %1764 = vmatpush1.bf16.msra.mxu0 %v1736
  %1765 = vmatprep.subr.bf16.mxu0 0
  %1766 = vmatpush1.bf16.msra.mxu0 %v1735
  %1767 = vmatprep.subr.bf16.mxu0 0
  %1768 = vmatpush2.bf16.msra.mxu0 0
  %1769 = vmatprep.subr.bf16.mxu0 0
  %1770 = vmatpush2.bf16.msra.mxu0 0
  %1771 = vmatprep.subr.bf16.mxu0 0
  %1772 = vmatpush2.bf16.msra.mxu0 0
  %1773 = vmatprep.subr.bf16.mxu0 0
  %1774 = vmatpush2.bf16.msra.mxu0 0
  %1775 = vmatprep.subr.bf16.mxu0 0
  %1776 = vmatpush2.bf16.msra.mxu0 0
  %1777 = vmatprep.subr.bf16.mxu0 0
  %1778 = vmatpush2.bf16.msra.mxu0 0
  %1779 = vmatprep.subr.bf16.mxu0 0
  %1780 = vmatpush2.bf16.msra.mxu0 0
  %1781 = vmatprep.subr.bf16.mxu0 0
  %1782 = vmatpush2.bf16.msra.mxu0 0
  %1783 = vmatprep.mubr.bf16.mxu0 0
  %1784 = vmatmul.mubr.bf16.gmra.mxu0 %v1687
  %v1785 = vpop.f32.mrf.mxu0
  %v1786 = vadd.f32 0.0, %v1785
  %v1787 = vpop.f32.mrf.mxu0
  %v1788 = vpop.f32.mrf.mxu0
  %v1789 = vadd.f32 0.0, %v1788
  %v1790 = vpop.f32.mrf.mxu0
  %1791 = vmatprep.mubr.bf16.mxu0 0
  %1792 = vmatmul.mubr.bf16.gmra.mxu0 %v1688
  %v1793 = vpop.f32.mrf.mxu0
  %v1794 = vadd.f32 0.0, %v1793
  %v1795 = vpop.f32.mrf.mxu0
  %v1796 = vpop.f32.mrf.mxu0
  %v1797 = vadd.f32 0.0, %v1796
  %v1798 = vpop.f32.mrf.mxu0
  %1799 = vmatprep.mubr.bf16.mxu0 0
  %1800 = vmatmul.mubr.bf16.gmra.mxu0 %v1689
  %v1801 = vpop.f32.mrf.mxu0
  %v1802 = vadd.f32 0.0, %v1801
  %v1803 = vpop.f32.mrf.mxu0
  %v1804 = vpop.f32.mrf.mxu0
  %v1805 = vadd.f32 0.0, %v1804
  %v1806 = vpop.f32.mrf.mxu0
  %1807 = vmatprep.mubr.bf16.mxu0 0
  %1808 = vmatmul.mubr.bf16.gmra.mxu0 %v1690
  %v1809 = vpop.f32.mrf.mxu0
  %v1810 = vadd.f32 0.0, %v1809
  %v1811 = vpop.f32.mrf.mxu0
  %v1812 = vpop.f32.mrf.mxu0
  %v1813 = vadd.f32 0.0, %v1812
  %v1814 = vpop.f32.mrf.mxu0
  %1815 = vmatprep.mubr.bf16.mxu0 0
  %1816 = vmatmul.mubr.bf16.gmra.mxu0 %v1691
  %v1817 = vpop.f32.mrf.mxu0
  %v1818 = vadd.f32 0.0, %v1817
  %v1819 = vpop.f32.mrf.mxu0
  %v1820 = vpop.f32.mrf.mxu0
  %v1821 = vadd.f32 0.0, %v1820
  %v1822 = vpop.f32.mrf.mxu0
  %1823 = vmatprep.mubr.bf16.mxu0 0
  %1824 = vmatmul.mubr.bf16.gmra.mxu0 %v1692
  %v1825 = vpop.f32.mrf.mxu0
  %v1826 = vadd.f32 0.0, %v1825
  %v1827 = vpop.f32.mrf.mxu0
  %v1828 = vpop.f32.mrf.mxu0
  %v1829 = vadd.f32 0.0, %v1828
  %v1830 = vpop.f32.mrf.mxu0
  %1831 = vmatprep.mubr.bf16.mxu0 0
  %1832 = vmatmul.mubr.bf16.gmra.mxu0 %v1693
  %v1833 = vpop.f32.mrf.mxu0
  %v1834 = vadd.f32 0.0, %v1833
  %v1835 = vpop.f32.mrf.mxu0
  %v1836 = vpop.f32.mrf.mxu0
  %v1837 = vadd.f32 0.0, %v1836
  %v1838 = vpop.f32.mrf.mxu0
  %1839 = vmatprep.mubr.bf16.mxu0 0
  %1840 = vmatmul.mubr.bf16.gmra.mxu0 %v1694
  %v1841 = vpop.f32.mrf.mxu0
  %v1842 = vadd.f32 0.0, %v1841
  %v1843 = vpop.f32.mrf.mxu0
  %v1844 = vpop.f32.mrf.mxu0
  %v1845 = vadd.f32 0.0, %v1844
  %v1846 = vpop.f32.mrf.mxu0
  %1847 = vdwg.mxu0
  %v1848 = vadd.f32 %v1343, %v1786
  %v1849 = vadd.f32 %v1344, %v1789
  %v1850 = vadd.f32 %v1345, %v1794
  %v1851 = vadd.f32 %v1346, %v1797
  %v1852 = vadd.f32 %v1347, %v1802
  %v1853 = vadd.f32 %v1348, %v1805
  %v1854 = vadd.f32 %v1349, %v1810
  %v1855 = vadd.f32 %v1350, %v1813
  %v1856 = vadd.f32 %v1351, %v1818
  %v1857 = vadd.f32 %v1352, %v1821
  %v1858 = vadd.f32 %v1353, %v1826
  %v1859 = vadd.f32 %v1354, %v1829
  %v1860 = vadd.f32 %v1355, %v1834
  %v1861 = vadd.f32 %v1356, %v1837
  %v1862 = vadd.f32 %v1357, %v1842
  %v1863 = vadd.f32 %v1358, %v1845
  %v1865 = vshrl.u32 %v1395, 16
  %v1867 = vrot.slane %v1865, 4
  %v1868 = vshll.u32 %v1395, 16
  %v1870 = vrot.slane %v1868, 5
  %v1871 = vor.u32 %v1867, %v1870
  %v1872 = vrot.slane %v1871, 4
  %v1874 = vshll.u32 %v1396, 16
  %v1876 = vrot.slane %v1874, 5
  %v1877 = vsel %vm1429, %v1872, %v1876
  %v1879 = vshrl.u32 %v1397, 16
  %v1881 = vrot.slane %v1879, 4
  %v1882 = vshll.u32 %v1397, 16
  %v1884 = vrot.slane %v1882, 5
  %v1885 = vor.u32 %v1881, %v1884
  %v1886 = vrot.slane %v1885, 4
  %v1888 = vshll.u32 %v1398, 16
  %v1890 = vrot.slane %v1888, 5
  %v1891 = vsel %vm1429, %v1886, %v1890
  %v1893 = vshrl.u32 %v1399, 16
  %v1895 = vrot.slane %v1893, 4
  %v1896 = vshll.u32 %v1399, 16
  %v1898 = vrot.slane %v1896, 5
  %v1899 = vor.u32 %v1895, %v1898
  %v1900 = vrot.slane %v1899, 4
  %v1902 = vshll.u32 %v1400, 16
  %v1904 = vrot.slane %v1902, 5
  %v1905 = vsel %vm1429, %v1900, %v1904
  %v1907 = vshrl.u32 %v1401, 16
  %v1909 = vrot.slane %v1907, 4
  %v1910 = vshll.u32 %v1401, 16
  %v1912 = vrot.slane %v1910, 5
  %v1913 = vor.u32 %v1909, %v1912
  %v1914 = vrot.slane %v1913, 4
  %v1916 = vshll.u32 %v1402, 16
  %v1918 = vrot.slane %v1916, 5
  %v1919 = vsel %vm1429, %v1914, %v1918
  %v1921 = vshrl.u32 %v1403, 16
  %v1923 = vrot.slane %v1921, 4
  %v1924 = vshll.u32 %v1403, 16
  %v1926 = vrot.slane %v1924, 5
  %v1927 = vor.u32 %v1923, %v1926
  %v1928 = vrot.slane %v1927, 4
  %v1930 = vshll.u32 %v1404, 16
  %v1932 = vrot.slane %v1930, 5
  %v1933 = vsel %vm1429, %v1928, %v1932
  %v1935 = vshrl.u32 %v1405, 16
  %v1937 = vrot.slane %v1935, 4
  %v1938 = vshll.u32 %v1405, 16
  %v1940 = vrot.slane %v1938, 5
  %v1941 = vor.u32 %v1937, %v1940
  %v1942 = vrot.slane %v1941, 4
  %v1944 = vshll.u32 %v1406, 16
  %v1946 = vrot.slane %v1944, 5
  %v1947 = vsel %vm1429, %v1942, %v1946
  %v1949 = vshrl.u32 %v1407, 16
  %v1951 = vrot.slane %v1949, 4
  %v1952 = vshll.u32 %v1407, 16
  %v1954 = vrot.slane %v1952, 5
  %v1955 = vor.u32 %v1951, %v1954
  %v1956 = vrot.slane %v1955, 4
  %v1958 = vshll.u32 %v1408, 16
  %v1960 = vrot.slane %v1958, 5
  %v1961 = vsel %vm1429, %v1956, %v1960
  %v1963 = vshrl.u32 %v1409, 16
  %v1965 = vrot.slane %v1963, 4
  %v1966 = vshll.u32 %v1409, 16
  %v1968 = vrot.slane %v1966, 5
  %v1969 = vor.u32 %v1965, %v1968
  %v1970 = vrot.slane %v1969, 4
  %v1972 = vshll.u32 %v1410, 16
  %v1974 = vrot.slane %v1972, 5
  %v1975 = vsel %vm1429, %v1970, %v1974
  %v1977 = vshrl.u32 %v1411, 16
  %v1979 = vrot.slane %v1977, 4
  %v1980 = vshll.u32 %v1411, 16
  %v1982 = vrot.slane %v1980, 5
  %v1983 = vor.u32 %v1979, %v1982
  %v1984 = vrot.slane %v1983, 4
  %v1986 = vshll.u32 %v1412, 16
  %v1988 = vrot.slane %v1986, 5
  %v1989 = vsel %vm1429, %v1984, %v1988
  %v1991 = vshrl.u32 %v1413, 16
  %v1993 = vrot.slane %v1991, 4
  %v1994 = vshll.u32 %v1413, 16
  %v1996 = vrot.slane %v1994, 5
  %v1997 = vor.u32 %v1993, %v1996
  %v1998 = vrot.slane %v1997, 4
  %v2000 = vshll.u32 %v1414, 16
  %v2002 = vrot.slane %v2000, 5
  %v2003 = vsel %vm1429, %v1998, %v2002
  %v2005 = vshrl.u32 %v1415, 16
  %v2007 = vrot.slane %v2005, 4
  %v2008 = vshll.u32 %v1415, 16
  %v2010 = vrot.slane %v2008, 5
  %v2011 = vor.u32 %v2007, %v2010
  %v2012 = vrot.slane %v2011, 4
  %v2014 = vshll.u32 %v1416, 16
  %v2016 = vrot.slane %v2014, 5
  %v2017 = vsel %vm1429, %v2012, %v2016
  %v2019 = vshrl.u32 %v1417, 16
  %v2021 = vrot.slane %v2019, 4
  %v2022 = vshll.u32 %v1417, 16
  %v2024 = vrot.slane %v2022, 5
  %v2025 = vor.u32 %v2021, %v2024
  %v2026 = vrot.slane %v2025, 4
  %v2028 = vshll.u32 %v1418, 16
  %v2030 = vrot.slane %v2028, 5
  %v2031 = vsel %vm1429, %v2026, %v2030
  %v2033 = vshrl.u32 %v1419, 16
  %v2035 = vrot.slane %v2033, 4
  %v2036 = vshll.u32 %v1419, 16
  %v2038 = vrot.slane %v2036, 5
  %v2039 = vor.u32 %v2035, %v2038
  %v2040 = vrot.slane %v2039, 4
  %v2042 = vshll.u32 %v1420, 16
  %v2044 = vrot.slane %v2042, 5
  %v2045 = vsel %vm1429, %v2040, %v2044
  %v2047 = vshrl.u32 %v1421, 16
  %v2049 = vrot.slane %v2047, 4
  %v2050 = vshll.u32 %v1421, 16
  %v2052 = vrot.slane %v2050, 5
  %v2053 = vor.u32 %v2049, %v2052
  %v2054 = vrot.slane %v2053, 4
  %v2056 = vshll.u32 %v1422, 16
  %v2058 = vrot.slane %v2056, 5
  %v2059 = vsel %vm1429, %v2054, %v2058
  %v2061 = vshrl.u32 %v1423, 16
  %v2063 = vrot.slane %v2061, 4
  %v2064 = vshll.u32 %v1423, 16
  %v2066 = vrot.slane %v2064, 5
  %v2067 = vor.u32 %v2063, %v2066
  %v2068 = vrot.slane %v2067, 4
  %v2070 = vshll.u32 %v1424, 16
  %v2072 = vrot.slane %v2070, 5
  %v2073 = vsel %vm1429, %v2068, %v2072
  %v2075 = vshrl.u32 %v1425, 16
  %v2077 = vrot.slane %v2075, 4
  %v2078 = vshll.u32 %v1425, 16
  %v2080 = vrot.slane %v2078, 5
  %v2081 = vor.u32 %v2077, %v2080
  %v2082 = vrot.slane %v2081, 4
  %v2084 = vshll.u32 %v1426, 16
  %v2086 = vrot.slane %v2084, 5
  %v2087 = vsel %vm1429, %v2082, %v2086
  %s2088 = scalar_lea.vmem %s4, 320
  %v2089 = vld [vmem:[%s2088] sm:$0xf]
  %v2090 = vld [vmem:[%s2088 + $0x4] sm:$0xf]
  %v2091 = vld [vmem:[%s2088 + $0x8] sm:$0xf]
  %v2092 = vld [vmem:[%s2088 + $0xc] sm:$0xf]
  %v2093 = vld [vmem:[%s2088 + $0x10] sm:$0xf]
  %v2094 = vld [vmem:[%s2088 + $0x14] sm:$0xf]
  %v2095 = vld [vmem:[%s2088 + $0x18] sm:$0xf]
  %v2096 = vld [vmem:[%s2088 + $0x1c] sm:$0xf]
  %v2097 = vld [vmem:[%s2088 + $0x20] sm:$0xf]
  %v2098 = vld [vmem:[%s2088 + $0x24] sm:$0xf]
  %v2099 = vld [vmem:[%s2088 + $0x28] sm:$0xf]
  %v2100 = vld [vmem:[%s2088 + $0x2c] sm:$0xf]
  %v2101 = vld [vmem:[%s2088 + $0x30] sm:$0xf]
  %v2102 = vld [vmem:[%s2088 + $0x34] sm:$0xf]
  %v2103 = vld [vmem:[%s2088 + $0x38] sm:$0xf]
  %v2104 = vld [vmem:[%s2088 + $0x3c] sm:$0xf]
  %v2105 = vunpack.c.l.b16 %v1877
  %v2106 = vunpack.c.l.b16 %v1891
  %v2107 = vunpack.c.l.b16 %v1905
  %v2108 = vunpack.c.l.b16 %v1919
  %v2109 = vunpack.c.l.b16 %v1933
  %v2110 = vunpack.c.l.b16 %v1947
  %v2111 = vunpack.c.l.b16 %v1961
  %v2112 = vunpack.c.l.b16 %v1975
  %v2113 = vunpack.c.l.b16 %v1989
  %v2114 = vunpack.c.l.b16 %v2003
  %v2115 = vunpack.c.l.b16 %v2017
  %v2116 = vunpack.c.l.b16 %v2031
  %v2117 = vunpack.c.l.b16 %v2045
  %v2118 = vunpack.c.l.b16 %v2059
  %v2119 = vunpack.c.l.b16 %v2073
  %v2120 = vunpack.c.l.b16 %v2087
  %v2121 = vpack.c.b16 %v2106, %v2105
  %v2122 = vpack.c.b16 %v2108, %v2107
  %v2123 = vpack.c.b16 %v2110, %v2109
  %v2124 = vpack.c.b16 %v2112, %v2111
  %v2125 = vpack.c.b16 %v2114, %v2113
  %v2126 = vpack.c.b16 %v2116, %v2115
  %v2127 = vpack.c.b16 %v2118, %v2117
  %v2128 = vpack.c.b16 %v2120, %v2119
  %v2153 = vunpack.c.l.b16 %v2089
  %v2154 = vunpack.c.l.b16 %v2090
  %v2155 = vunpack.c.l.b16 %v2091
  %v2156 = vunpack.c.l.b16 %v2092
  %v2157 = vunpack.c.l.b16 %v2093
  %v2158 = vunpack.c.l.b16 %v2094
  %v2159 = vunpack.c.l.b16 %v2095
  %v2160 = vunpack.c.l.b16 %v2096
  %v2161 = vunpack.c.l.b16 %v2097
  %v2162 = vunpack.c.l.b16 %v2098
  %v2163 = vunpack.c.l.b16 %v2099
  %v2164 = vunpack.c.l.b16 %v2100
  %v2165 = vunpack.c.l.b16 %v2101
  %v2166 = vunpack.c.l.b16 %v2102
  %v2167 = vunpack.c.l.b16 %v2103
  %v2168 = vunpack.c.l.b16 %v2104
  %v2169 = vpack.c.b16 %v2154, %v2153
  %v2170 = vpack.c.b16 %v2156, %v2155
  %v2171 = vpack.c.b16 %v2158, %v2157
  %v2172 = vpack.c.b16 %v2160, %v2159
  %v2173 = vpack.c.b16 %v2162, %v2161
  %v2174 = vpack.c.b16 %v2164, %v2163
  %v2175 = vpack.c.b16 %v2166, %v2165
  %v2176 = vpack.c.b16 %v2168, %v2167
  %2185 = vmatprep.subr.bf16.mxu0 0
  %2186 = vmatpush1.bf16.msra.mxu0 %v2176
  %2187 = vmatprep.subr.bf16.mxu0 0
  %2188 = vmatpush1.bf16.msra.mxu0 %v2175
  %2189 = vmatprep.subr.bf16.mxu0 0
  %2190 = vmatpush1.bf16.msra.mxu0 %v2174
  %2191 = vmatprep.subr.bf16.mxu0 0
  %2192 = vmatpush1.bf16.msra.mxu0 %v2173
  %2193 = vmatprep.subr.bf16.mxu0 0
  %2194 = vmatpush1.bf16.msra.mxu0 %v2172
  %2195 = vmatprep.subr.bf16.mxu0 0
  %2196 = vmatpush1.bf16.msra.mxu0 %v2171
  %2197 = vmatprep.subr.bf16.mxu0 0
  %2198 = vmatpush1.bf16.msra.mxu0 %v2170
  %2199 = vmatprep.subr.bf16.mxu0 0
  %2200 = vmatpush1.bf16.msra.mxu0 %v2169
  %2201 = vmatprep.subr.bf16.mxu0 0
  %2202 = vmatpush2.bf16.msra.mxu0 0
  %2203 = vmatprep.subr.bf16.mxu0 0
  %2204 = vmatpush2.bf16.msra.mxu0 0
  %2205 = vmatprep.subr.bf16.mxu0 0
  %2206 = vmatpush2.bf16.msra.mxu0 0
  %2207 = vmatprep.subr.bf16.mxu0 0
  %2208 = vmatpush2.bf16.msra.mxu0 0
  %2209 = vmatprep.subr.bf16.mxu0 0
  %2210 = vmatpush2.bf16.msra.mxu0 0
  %2211 = vmatprep.subr.bf16.mxu0 0
  %2212 = vmatpush2.bf16.msra.mxu0 0
  %2213 = vmatprep.subr.bf16.mxu0 0
  %2214 = vmatpush2.bf16.msra.mxu0 0
  %2215 = vmatprep.subr.bf16.mxu0 0
  %2216 = vmatpush2.bf16.msra.mxu0 0
  %2217 = vmatprep.mubr.bf16.mxu0 0
  %2218 = vmatmul.mubr.bf16.gmra.mxu0 %v2121
  %v2219 = vpop.f32.mrf.mxu0
  %v2220 = vadd.f32 0.0, %v2219
  %v2221 = vpop.f32.mrf.mxu0
  %v2222 = vpop.f32.mrf.mxu0
  %v2223 = vadd.f32 0.0, %v2222
  %v2224 = vpop.f32.mrf.mxu0
  %2225 = vmatprep.mubr.bf16.mxu0 0
  %2226 = vmatmul.mubr.bf16.gmra.mxu0 %v2122
  %v2227 = vpop.f32.mrf.mxu0
  %v2228 = vadd.f32 0.0, %v2227
  %v2229 = vpop.f32.mrf.mxu0
  %v2230 = vpop.f32.mrf.mxu0
  %v2231 = vadd.f32 0.0, %v2230
  %v2232 = vpop.f32.mrf.mxu0
  %2233 = vmatprep.mubr.bf16.mxu0 0
  %2234 = vmatmul.mubr.bf16.gmra.mxu0 %v2123
  %v2235 = vpop.f32.mrf.mxu0
  %v2236 = vadd.f32 0.0, %v2235
  %v2237 = vpop.f32.mrf.mxu0
  %v2238 = vpop.f32.mrf.mxu0
  %v2239 = vadd.f32 0.0, %v2238
  %v2240 = vpop.f32.mrf.mxu0
  %2241 = vmatprep.mubr.bf16.mxu0 0
  %2242 = vmatmul.mubr.bf16.gmra.mxu0 %v2124
  %v2243 = vpop.f32.mrf.mxu0
  %v2244 = vadd.f32 0.0, %v2243
  %v2245 = vpop.f32.mrf.mxu0
  %v2246 = vpop.f32.mrf.mxu0
  %v2247 = vadd.f32 0.0, %v2246
  %v2248 = vpop.f32.mrf.mxu0
  %2249 = vmatprep.mubr.bf16.mxu0 0
  %2250 = vmatmul.mubr.bf16.gmra.mxu0 %v2125
  %v2251 = vpop.f32.mrf.mxu0
  %v2252 = vadd.f32 0.0, %v2251
  %v2253 = vpop.f32.mrf.mxu0
  %v2254 = vpop.f32.mrf.mxu0
  %v2255 = vadd.f32 0.0, %v2254
  %v2256 = vpop.f32.mrf.mxu0
  %2257 = vmatprep.mubr.bf16.mxu0 0
  %2258 = vmatmul.mubr.bf16.gmra.mxu0 %v2126
  %v2259 = vpop.f32.mrf.mxu0
  %v2260 = vadd.f32 0.0, %v2259
  %v2261 = vpop.f32.mrf.mxu0
  %v2262 = vpop.f32.mrf.mxu0
  %v2263 = vadd.f32 0.0, %v2262
  %v2264 = vpop.f32.mrf.mxu0
  %2265 = vmatprep.mubr.bf16.mxu0 0
  %2266 = vmatmul.mubr.bf16.gmra.mxu0 %v2127
  %v2267 = vpop.f32.mrf.mxu0
  %v2268 = vadd.f32 0.0, %v2267
  %v2269 = vpop.f32.mrf.mxu0
  %v2270 = vpop.f32.mrf.mxu0
  %v2271 = vadd.f32 0.0, %v2270
  %v2272 = vpop.f32.mrf.mxu0
  %2273 = vmatprep.mubr.bf16.mxu0 0
  %2274 = vmatmul.mubr.bf16.gmra.mxu0 %v2128
  %v2275 = vpop.f32.mrf.mxu0
  %v2276 = vadd.f32 0.0, %v2275
  %v2277 = vpop.f32.mrf.mxu0
  %v2278 = vpop.f32.mrf.mxu0
  %v2279 = vadd.f32 0.0, %v2278
  %v2280 = vpop.f32.mrf.mxu0
  %2281 = vdwg.mxu0
  %v2282 = vadd.f32 %v1848, %v2220
  %v2283 = vadd.f32 %v1849, %v2223
  %v2284 = vadd.f32 %v1850, %v2228
  %v2285 = vadd.f32 %v1851, %v2231
  %v2286 = vadd.f32 %v1852, %v2236
  %v2287 = vadd.f32 %v1853, %v2239
  %v2288 = vadd.f32 %v1854, %v2244
  %v2289 = vadd.f32 %v1855, %v2247
  %v2290 = vadd.f32 %v1856, %v2252
  %v2291 = vadd.f32 %v1857, %v2255
  %v2292 = vadd.f32 %v1858, %v2260
  %v2293 = vadd.f32 %v1859, %v2263
  %v2294 = vadd.f32 %v1860, %v2268
  %v2295 = vadd.f32 %v1861, %v2271
  %v2296 = vadd.f32 %v1862, %v2276
  %v2297 = vadd.f32 %v1863, %v2279
  %v2299 = vshrl.u32 %v1375, 16
  %v2301 = vrot.slane %v2299, 4
  %v2302 = vshll.u32 %v1375, 16
  %v2304 = vrot.slane %v2302, 5
  %v2305 = vor.u32 %v2301, %v2304
  %v2306 = vrot.slane %v2305, 4
  %v2308 = vshll.u32 %v1376, 16
  %v2310 = vrot.slane %v2308, 5
  %v2311 = vsel %vm1429, %v2306, %v2310
  %v2313 = vshrl.u32 %v1393, 16
  %v2315 = vrot.slane %v2313, 4
  %v2316 = vshll.u32 %v1393, 16
  %v2318 = vrot.slane %v2316, 5
  %v2319 = vor.u32 %v2315, %v2318
  %v2320 = vrot.slane %v2319, 4
  %v2322 = vshll.u32 %v1394, 16
  %v2324 = vrot.slane %v2322, 5
  %v2325 = vsel %vm1429, %v2320, %v2324
  %s2326 = scalar_lea.vmem %s4, 512
  %v2327 = vld [vmem:[%s2326] sm:$0xf]
  %v2328 = vld [vmem:[%s2326 + $0x4] sm:$0xf]
  %v2329 = vld [vmem:[%s2326 + $0x8] sm:$0xf]
  %v2330 = vld [vmem:[%s2326 + $0xc] sm:$0xf]
  %v2331 = vld [vmem:[%s2326 + $0x10] sm:$0xf]
  %v2332 = vld [vmem:[%s2326 + $0x14] sm:$0xf]
  %v2333 = vld [vmem:[%s2326 + $0x18] sm:$0xf]
  %v2334 = vld [vmem:[%s2326 + $0x1c] sm:$0xf]
  %v2335 = vld [vmem:[%s2326 + $0x20] sm:$0xf]
  %v2336 = vld [vmem:[%s2326 + $0x24] sm:$0xf]
  %v2337 = vld [vmem:[%s2326 + $0x28] sm:$0xf]
  %v2338 = vld [vmem:[%s2326 + $0x2c] sm:$0xf]
  %v2339 = vld [vmem:[%s2326 + $0x30] sm:$0xf]
  %v2340 = vld [vmem:[%s2326 + $0x34] sm:$0xf]
  %v2341 = vld [vmem:[%s2326 + $0x38] sm:$0xf]
  %v2342 = vld [vmem:[%s2326 + $0x3c] sm:$0xf]
  %v2343 = vunpack.c.l.b16 %v2311
  %v2344 = vunpack.c.l.b16 %v2325
  %v2345 = vpack.c.b16 %v1673, %v1672
  %v2346 = vpack.c.b16 %v1675, %v1674
  %v2347 = vpack.c.b16 %v1677, %v1676
  %v2348 = vpack.c.b16 %v2343, %v1678
  %v2349 = vpack.c.b16 %v1681, %v1680
  %v2350 = vpack.c.b16 %v1683, %v1682
  %v2351 = vpack.c.b16 %v1685, %v1684
  %v2352 = vpack.c.b16 %v2344, %v1686
  %v2377 = vunpack.c.l.b16 %v2327
  %v2378 = vunpack.c.l.b16 %v2328
  %v2379 = vunpack.c.l.b16 %v2329
  %v2380 = vunpack.c.l.b16 %v2330
  %v2381 = vunpack.c.l.b16 %v2331
  %v2382 = vunpack.c.l.b16 %v2332
  %v2383 = vunpack.c.l.b16 %v2333
  %v2384 = vunpack.c.l.b16 %v2334
  %v2385 = vunpack.c.l.b16 %v2335
  %v2386 = vunpack.c.l.b16 %v2336
  %v2387 = vunpack.c.l.b16 %v2337
  %v2388 = vunpack.c.l.b16 %v2338
  %v2389 = vunpack.c.l.b16 %v2339
  %v2390 = vunpack.c.l.b16 %v2340
  %v2391 = vunpack.c.l.b16 %v2341
  %v2392 = vunpack.c.l.b16 %v2342
  %v2393 = vpack.c.b16 %v2378, %v2377
  %v2394 = vpack.c.b16 %v2380, %v2379
  %v2395 = vpack.c.b16 %v2382, %v2381
  %v2396 = vpack.c.b16 %v2384, %v2383
  %v2397 = vpack.c.b16 %v2386, %v2385
  %v2398 = vpack.c.b16 %v2388, %v2387
  %v2399 = vpack.c.b16 %v2390, %v2389
  %v2400 = vpack.c.b16 %v2392, %v2391
  %2409 = vmatprep.subr.bf16.mxu0 0
  %2410 = vmatpush1.bf16.msra.mxu0 %v2400
  %2411 = vmatprep.subr.bf16.mxu0 0
  %2412 = vmatpush1.bf16.msra.mxu0 %v2399
  %2413 = vmatprep.subr.bf16.mxu0 0
  %2414 = vmatpush1.bf16.msra.mxu0 %v2398
  %2415 = vmatprep.subr.bf16.mxu0 0
  %2416 = vmatpush1.bf16.msra.mxu0 %v2397
  %2417 = vmatprep.subr.bf16.mxu0 0
  %2418 = vmatpush1.bf16.msra.mxu0 %v2396
  %2419 = vmatprep.subr.bf16.mxu0 0
  %2420 = vmatpush1.bf16.msra.mxu0 %v2395
  %2421 = vmatprep.subr.bf16.mxu0 0
  %2422 = vmatpush1.bf16.msra.mxu0 %v2394
  %2423 = vmatprep.subr.bf16.mxu0 0
  %2424 = vmatpush1.bf16.msra.mxu0 %v2393
  %2425 = vmatprep.subr.bf16.mxu0 0
  %2426 = vmatpush2.bf16.msra.mxu0 0
  %2427 = vmatprep.subr.bf16.mxu0 0
  %2428 = vmatpush2.bf16.msra.mxu0 0
  %2429 = vmatprep.subr.bf16.mxu0 0
  %2430 = vmatpush2.bf16.msra.mxu0 0
  %2431 = vmatprep.subr.bf16.mxu0 0
  %2432 = vmatpush2.bf16.msra.mxu0 0
  %2433 = vmatprep.subr.bf16.mxu0 0
  %2434 = vmatpush2.bf16.msra.mxu0 0
  %2435 = vmatprep.subr.bf16.mxu0 0
  %2436 = vmatpush2.bf16.msra.mxu0 0
  %2437 = vmatprep.subr.bf16.mxu0 0
  %2438 = vmatpush2.bf16.msra.mxu0 0
  %2439 = vmatprep.subr.bf16.mxu0 0
  %2440 = vmatpush2.bf16.msra.mxu0 0
  %2441 = vmatprep.mubr.bf16.mxu0 0
  %2442 = vmatmul.mubr.bf16.gmra.mxu0 %v2345
  %v2443 = vpop.f32.mrf.mxu0
  %v2444 = vadd.f32 0.0, %v2443
  %v2445 = vpop.f32.mrf.mxu0
  %v2446 = vpop.f32.mrf.mxu0
  %v2447 = vadd.f32 0.0, %v2446
  %v2448 = vpop.f32.mrf.mxu0
  %2449 = vmatprep.mubr.bf16.mxu0 0
  %2450 = vmatmul.mubr.bf16.gmra.mxu0 %v2346
  %v2451 = vpop.f32.mrf.mxu0
  %v2452 = vadd.f32 0.0, %v2451
  %v2453 = vpop.f32.mrf.mxu0
  %v2454 = vpop.f32.mrf.mxu0
  %v2455 = vadd.f32 0.0, %v2454
  %v2456 = vpop.f32.mrf.mxu0
  %2457 = vmatprep.mubr.bf16.mxu0 0
  %2458 = vmatmul.mubr.bf16.gmra.mxu0 %v2347
  %v2459 = vpop.f32.mrf.mxu0
  %v2460 = vadd.f32 0.0, %v2459
  %v2461 = vpop.f32.mrf.mxu0
  %v2462 = vpop.f32.mrf.mxu0
  %v2463 = vadd.f32 0.0, %v2462
  %v2464 = vpop.f32.mrf.mxu0
  %2465 = vmatprep.mubr.bf16.mxu0 0
  %2466 = vmatmul.mubr.bf16.gmra.mxu0 %v2348
  %v2467 = vpop.f32.mrf.mxu0
  %v2468 = vadd.f32 0.0, %v2467
  %v2469 = vpop.f32.mrf.mxu0
  %v2470 = vpop.f32.mrf.mxu0
  %v2471 = vadd.f32 0.0, %v2470
  %v2472 = vpop.f32.mrf.mxu0
  %2473 = vmatprep.mubr.bf16.mxu0 0
  %2474 = vmatmul.mubr.bf16.gmra.mxu0 %v2349
  %v2475 = vpop.f32.mrf.mxu0
  %v2476 = vadd.f32 0.0, %v2475
  %v2477 = vpop.f32.mrf.mxu0
  %v2478 = vpop.f32.mrf.mxu0
  %v2479 = vadd.f32 0.0, %v2478
  %v2480 = vpop.f32.mrf.mxu0
  %2481 = vmatprep.mubr.bf16.mxu0 0
  %2482 = vmatmul.mubr.bf16.gmra.mxu0 %v2350
  %v2483 = vpop.f32.mrf.mxu0
  %v2484 = vadd.f32 0.0, %v2483
  %v2485 = vpop.f32.mrf.mxu0
  %v2486 = vpop.f32.mrf.mxu0
  %v2487 = vadd.f32 0.0, %v2486
  %v2488 = vpop.f32.mrf.mxu0
  %2489 = vmatprep.mubr.bf16.mxu0 0
  %2490 = vmatmul.mubr.bf16.gmra.mxu0 %v2351
  %v2491 = vpop.f32.mrf.mxu0
  %v2492 = vadd.f32 0.0, %v2491
  %v2493 = vpop.f32.mrf.mxu0
  %v2494 = vpop.f32.mrf.mxu0
  %v2495 = vadd.f32 0.0, %v2494
  %v2496 = vpop.f32.mrf.mxu0
  %2497 = vmatprep.mubr.bf16.mxu0 0
  %2498 = vmatmul.mubr.bf16.gmra.mxu0 %v2352
  %v2499 = vpop.f32.mrf.mxu0
  %v2500 = vadd.f32 0.0, %v2499
  %v2501 = vpop.f32.mrf.mxu0
  %v2502 = vpop.f32.mrf.mxu0
  %v2503 = vadd.f32 0.0, %v2502
  %v2504 = vpop.f32.mrf.mxu0
  %2505 = vdwg.mxu0
  %v2506 = vadd.f32 %v2282, %v2444
  %v2507 = vadd.f32 %v2283, %v2447
  %v2508 = vadd.f32 %v2284, %v2452
  %v2509 = vadd.f32 %v2285, %v2455
  %v2510 = vadd.f32 %v2286, %v2460
  %v2511 = vadd.f32 %v2287, %v2463
  %v2512 = vadd.f32 %v2288, %v2468
  %v2513 = vadd.f32 %v2289, %v2471
  %v2514 = vadd.f32 %v2290, %v2476
  %v2515 = vadd.f32 %v2291, %v2479
  %v2516 = vadd.f32 %v2292, %v2484
  %v2517 = vadd.f32 %v2293, %v2487
  %v2518 = vadd.f32 %v2294, %v2492
  %v2519 = vadd.f32 %v2295, %v2495
  %v2520 = vadd.f32 %v2296, %v2500
  %v2521 = vadd.f32 %v2297, %v2503
  %v2522 = vpack.c.bf16 %v2506, %v2506
  %v2523 = vpack.c.bf16 %v2507, %v2507
  %v2524 = vpack.c.bf16 %v2508, %v2508
  %v2525 = vpack.c.bf16 %v2509, %v2509
  %v2526 = vpack.c.bf16 %v2510, %v2510
  %v2527 = vpack.c.bf16 %v2511, %v2511
  %v2528 = vpack.c.bf16 %v2512, %v2512
  %v2529 = vpack.c.bf16 %v2513, %v2513
  %v2530 = vpack.c.bf16 %v2514, %v2514
  %v2531 = vpack.c.bf16 %v2515, %v2515
  %v2532 = vpack.c.bf16 %v2516, %v2516
  %v2533 = vpack.c.bf16 %v2517, %v2517
  %v2534 = vpack.c.bf16 %v2518, %v2518
  %v2535 = vpack.c.bf16 %v2519, %v2519
  %v2536 = vpack.c.bf16 %v2520, %v2520
  %v2537 = vpack.c.bf16 %v2521, %v2521
  %2538 = vst [vmem:[%s5] sm:$0xf] %v2522
  %2539 = vst [vmem:[%s5 + $0x4] sm:$0xf] %v2523
  %2540 = vst [vmem:[%s5 + $0x8] sm:$0xf] %v2524
  %2541 = vst [vmem:[%s5 + $0xc] sm:$0xf] %v2525
  %2542 = vst [vmem:[%s5 + $0x10] sm:$0xf] %v2526
  %2543 = vst [vmem:[%s5 + $0x14] sm:$0xf] %v2527
  %2544 = vst [vmem:[%s5 + $0x18] sm:$0xf] %v2528
  %2545 = vst [vmem:[%s5 + $0x1c] sm:$0xf] %v2529
  %2546 = vst [vmem:[%s5 + $0x20] sm:$0xf] %v2530
  %2547 = vst [vmem:[%s5 + $0x24] sm:$0xf] %v2531
  %2548 = vst [vmem:[%s5 + $0x28] sm:$0xf] %v2532
  %2549 = vst [vmem:[%s5 + $0x2c] sm:$0xf] %v2533
  %2550 = vst [vmem:[%s5 + $0x30] sm:$0xf] %v2534
  %2551 = vst [vmem:[%s5 + $0x34] sm:$0xf] %v2535
  %2552 = vst [vmem:[%s5 + $0x38] sm:$0xf] %v2536
  %2553 = vst [vmem:[%s5 + $0x3c] sm:$0xf] %v2537
  %v2554 = vadd.f32 %v2506, %v2507
  %v2555 = vadd.f32 %v2554, %v2508
  %v2556 = vadd.f32 %v2555, %v2509
  %v2557 = vadd.f32 %v2556, %v2510
  %v2558 = vadd.f32 %v2557, %v2511
  %v2559 = vadd.f32 %v2558, %v2512
  %v2560 = vadd.f32 %v2559, %v2513
  %v2561 = vadd.f32 %v2560, %v2514
  %v2562 = vadd.f32 %v2561, %v2515
  %v2563 = vadd.f32 %v2562, %v2516
  %v2564 = vadd.f32 %v2563, %v2517
  %v2565 = vadd.f32 %v2564, %v2518
  %v2566 = vadd.f32 %v2565, %v2519
  %v2567 = vadd.f32 %v2566, %v2520
  %v2568 = vadd.f32 %v2567, %v2521
  %v2569 = vrot.slane %v2568, 4
  %v2570 = vadd.f32 %v2568, %v2569
  %v2571 = vrot.slane %v2570, 2
  %v2572 = vadd.f32 %v2570, %v2571
  %v2573 = vrot.slane %v2572, 1
  %v2574 = vadd.f32 %v2572, %v2573
  %2575 = vst [vmem:[%s6] sm:$0x1] %v2574
  %v2576 = vmul.f32 %v2506, %v2506
  %v2577 = vmul.f32 %v2507, %v2507
  %v2578 = vmul.f32 %v2508, %v2508
  %v2579 = vmul.f32 %v2509, %v2509
  %v2580 = vmul.f32 %v2510, %v2510
  %v2581 = vmul.f32 %v2511, %v2511
  %v2582 = vmul.f32 %v2512, %v2512
  %v2583 = vmul.f32 %v2513, %v2513
  %v2584 = vmul.f32 %v2514, %v2514
  %v2585 = vmul.f32 %v2515, %v2515
  %v2586 = vmul.f32 %v2516, %v2516
  %v2587 = vmul.f32 %v2517, %v2517
  %v2588 = vmul.f32 %v2518, %v2518
  %v2589 = vmul.f32 %v2519, %v2519
  %v2590 = vmul.f32 %v2520, %v2520
  %v2591 = vmul.f32 %v2521, %v2521
  %v2592 = vadd.f32 %v2576, %v2577
  %v2593 = vadd.f32 %v2592, %v2578
  %v2594 = vadd.f32 %v2593, %v2579
  %v2595 = vadd.f32 %v2594, %v2580
  %v2596 = vadd.f32 %v2595, %v2581
  %v2597 = vadd.f32 %v2596, %v2582
  %v2598 = vadd.f32 %v2597, %v2583
  %v2599 = vadd.f32 %v2598, %v2584
  %v2600 = vadd.f32 %v2599, %v2585
  %v2601 = vadd.f32 %v2600, %v2586
  %v2602 = vadd.f32 %v2601, %v2587
  %v2603 = vadd.f32 %v2602, %v2588
  %v2604 = vadd.f32 %v2603, %v2589
  %v2605 = vadd.f32 %v2604, %v2590
  %v2606 = vadd.f32 %v2605, %v2591
  %v2607 = vrot.slane %v2606, 4
  %v2608 = vadd.f32 %v2606, %v2607
  %v2609 = vrot.slane %v2608, 2
  %v2610 = vadd.f32 %v2608, %v2609
  %v2611 = vrot.slane %v2610, 1
  %v2612 = vadd.f32 %v2610, %v2611
  %2613 = vst [vmem:[%s6 + $0x1] sm:$0x1] %v2612
  %v2614 = vld [vmem:[%s3] sm:$0xf]
  %v2615 = vld [vmem:[%s3 + $0x8] sm:$0xf]
  %v2616 = vld [vmem:[%s3 + $0x10] sm:$0xf]
  %v2617 = vld [vmem:[%s3 + $0x18] sm:$0xf]
  %v2618 = vld [vmem:[%s3 + $0x20] sm:$0xf]
  %v2619 = vld [vmem:[%s3 + $0x28] sm:$0xf]
  %v2620 = vld [vmem:[%s3 + $0x30] sm:$0xf]
  %v2621 = vld [vmem:[%s3 + $0x38] sm:$0xf]
  %v2622 = vld [vmem:[%s3 + $0x48] sm:$0xf]
  %v2623 = vld [vmem:[%s3 + $0x50] sm:$0xf]
  %v2624 = vld [vmem:[%s3 + $0x58] sm:$0xf]
  %v2625 = vld [vmem:[%s3 + $0x60] sm:$0xf]
  %v2626 = vld [vmem:[%s3 + $0x68] sm:$0xf]
  %v2627 = vld [vmem:[%s3 + $0x70] sm:$0xf]
  %v2628 = vld [vmem:[%s3 + $0x78] sm:$0xf]
  %v2629 = vld [vmem:[%s3 + $0x80] sm:$0xf]
  %v2630 = vunpack.c.l.bf16 %v2614
  %v2631 = vunpack.c.l.bf16 %v2615
  %v2632 = vunpack.c.l.bf16 %v2616
  %v2633 = vunpack.c.l.bf16 %v2617
  %v2634 = vunpack.c.l.bf16 %v2618
  %v2635 = vunpack.c.l.bf16 %v2619
  %v2636 = vunpack.c.l.bf16 %v2620
  %v2637 = vunpack.c.l.bf16 %v2621
  %v2638 = vunpack.c.l.bf16 %v2622
  %v2639 = vunpack.c.l.bf16 %v2623
  %v2640 = vunpack.c.l.bf16 %v2624
  %v2641 = vunpack.c.l.bf16 %v2625
  %v2642 = vunpack.c.l.bf16 %v2626
  %v2643 = vunpack.c.l.bf16 %v2627
  %v2644 = vunpack.c.l.bf16 %v2628
  %v2645 = vunpack.c.l.bf16 %v2629
  %v2646 = vld [vmem:[%s2] sm:$0xf]
  %v2647 = vld [vmem:[%s2 + $0x4] sm:$0x1]
  %v2648 = vld [vmem:[%s2 + $0x8] sm:$0xf]
  %v2649 = vld [vmem:[%s2 + $0xc] sm:$0x1]
  %v2650 = vld [vmem:[%s2 + $0x10] sm:$0xf]
  %v2651 = vld [vmem:[%s2 + $0x14] sm:$0x1]
  %v2652 = vld [vmem:[%s2 + $0x18] sm:$0xf]
  %v2653 = vld [vmem:[%s2 + $0x1c] sm:$0x1]
  %v2654 = vld [vmem:[%s2 + $0x20] sm:$0xf]
  %v2655 = vld [vmem:[%s2 + $0x24] sm:$0x1]
  %v2656 = vld [vmem:[%s2 + $0x28] sm:$0xf]
  %v2657 = vld [vmem:[%s2 + $0x2c] sm:$0x1]
  %v2658 = vld [vmem:[%s2 + $0x30] sm:$0xf]
  %v2659 = vld [vmem:[%s2 + $0x34] sm:$0x1]
  %v2660 = vld [vmem:[%s2 + $0x38] sm:$0xf]
  %v2661 = vld [vmem:[%s2 + $0x3c] sm:$0x1]
  %v2662 = vld [vmem:[%s2 + $0x48] sm:$0xf]
  %v2663 = vld [vmem:[%s2 + $0x4c] sm:$0x1]
  %v2664 = vld [vmem:[%s2 + $0x50] sm:$0xf]
  %v2665 = vld [vmem:[%s2 + $0x54] sm:$0x1]
  %v2666 = vld [vmem:[%s2 + $0x58] sm:$0xf]
  %v2667 = vld [vmem:[%s2 + $0x5c] sm:$0x1]
  %v2668 = vld [vmem:[%s2 + $0x60] sm:$0xf]
  %v2669 = vld [vmem:[%s2 + $0x64] sm:$0x1]
  %v2670 = vld [vmem:[%s2 + $0x68] sm:$0xf]
  %v2671 = vld [vmem:[%s2 + $0x6c] sm:$0x1]
  %v2672 = vld [vmem:[%s2 + $0x70] sm:$0xf]
  %v2673 = vld [vmem:[%s2 + $0x74] sm:$0x1]
  %v2674 = vld [vmem:[%s2 + $0x78] sm:$0xf]
  %v2675 = vld [vmem:[%s2 + $0x7c] sm:$0x1]
  %v2676 = vld [vmem:[%s2 + $0x80] sm:$0xf]
  %v2677 = vld [vmem:[%s2 + $0x84] sm:$0x1]
  %v2678 = vunpack.c.l.bf16 %v2646
  %v2679 = vunpack.c.l.bf16 %v2647
  %v2680 = vunpack.c.l.bf16 %v2648
  %v2681 = vunpack.c.l.bf16 %v2649
  %v2682 = vunpack.c.l.bf16 %v2650
  %v2683 = vunpack.c.l.bf16 %v2651
  %v2684 = vunpack.c.l.bf16 %v2652
  %v2685 = vunpack.c.l.bf16 %v2653
  %v2686 = vunpack.c.l.bf16 %v2654
  %v2687 = vunpack.c.l.bf16 %v2655
  %v2688 = vunpack.c.l.bf16 %v2656
  %v2689 = vunpack.c.l.bf16 %v2657
  %v2690 = vunpack.c.l.bf16 %v2658
  %v2691 = vunpack.c.l.bf16 %v2659
  %v2692 = vunpack.c.l.bf16 %v2660
  %v2693 = vunpack.c.l.bf16 %v2661
  %v2694 = vunpack.c.l.bf16 %v2662
  %v2695 = vunpack.c.l.bf16 %v2663
  %v2696 = vunpack.c.l.bf16 %v2664
  %v2697 = vunpack.c.l.bf16 %v2665
  %v2698 = vunpack.c.l.bf16 %v2666
  %v2699 = vunpack.c.l.bf16 %v2667
  %v2700 = vunpack.c.l.bf16 %v2668
  %v2701 = vunpack.c.l.bf16 %v2669
  %v2702 = vunpack.c.l.bf16 %v2670
  %v2703 = vunpack.c.l.bf16 %v2671
  %v2704 = vunpack.c.l.bf16 %v2672
  %v2705 = vunpack.c.l.bf16 %v2673
  %v2706 = vunpack.c.l.bf16 %v2674
  %v2707 = vunpack.c.l.bf16 %v2675
  %v2708 = vunpack.c.l.bf16 %v2676
  %v2709 = vunpack.c.l.bf16 %v2677
  %vm2742 = vcmask 1046528
  %v2743 = vrot.slane %v2678, 1
  %v2744 = vrot.slane %v2679, 1
  %v2745 = vsel %vm2742, %v2743, %v2744
  %v2746 = vrot.slane %v2680, 1
  %v2747 = vrot.slane %v2681, 1
  %v2748 = vsel %vm2742, %v2746, %v2747
  %v2749 = vrot.slane %v2682, 1
  %v2750 = vrot.slane %v2683, 1
  %v2751 = vsel %vm2742, %v2749, %v2750
  %v2752 = vrot.slane %v2684, 1
  %v2753 = vrot.slane %v2685, 1
  %v2754 = vsel %vm2742, %v2752, %v2753
  %v2755 = vrot.slane %v2686, 1
  %v2756 = vrot.slane %v2687, 1
  %v2757 = vsel %vm2742, %v2755, %v2756
  %v2758 = vrot.slane %v2688, 1
  %v2759 = vrot.slane %v2689, 1
  %v2760 = vsel %vm2742, %v2758, %v2759
  %v2761 = vrot.slane %v2690, 1
  %v2762 = vrot.slane %v2691, 1
  %v2763 = vsel %vm2742, %v2761, %v2762
  %v2764 = vrot.slane %v2692, 1
  %v2765 = vrot.slane %v2693, 1
  %v2766 = vsel %vm2742, %v2764, %v2765
  %v2767 = vrot.slane %v2694, 1
  %v2768 = vrot.slane %v2695, 1
  %v2769 = vsel %vm2742, %v2767, %v2768
  %v2770 = vrot.slane %v2696, 1
  %v2771 = vrot.slane %v2697, 1
  %v2772 = vsel %vm2742, %v2770, %v2771
  %v2773 = vrot.slane %v2698, 1
  %v2774 = vrot.slane %v2699, 1
  %v2775 = vsel %vm2742, %v2773, %v2774
  %v2776 = vrot.slane %v2700, 1
  %v2777 = vrot.slane %v2701, 1
  %v2778 = vsel %vm2742, %v2776, %v2777
  %v2779 = vrot.slane %v2702, 1
  %v2780 = vrot.slane %v2703, 1
  %v2781 = vsel %vm2742, %v2779, %v2780
  %v2782 = vrot.slane %v2704, 1
  %v2783 = vrot.slane %v2705, 1
  %v2784 = vsel %vm2742, %v2782, %v2783
  %v2785 = vrot.slane %v2706, 1
  %v2786 = vrot.slane %v2707, 1
  %v2787 = vsel %vm2742, %v2785, %v2786
  %v2788 = vrot.slane %v2708, 1
  %v2789 = vrot.slane %v2709, 1
  %v2790 = vsel %vm2742, %v2788, %v2789
  %v2807 = vadd.f32 %v2630, %v2745
  %v2808 = vadd.f32 %v2631, %v2748
  %v2809 = vadd.f32 %v2632, %v2751
  %v2810 = vadd.f32 %v2633, %v2754
  %v2811 = vadd.f32 %v2634, %v2757
  %v2812 = vadd.f32 %v2635, %v2760
  %v2813 = vadd.f32 %v2636, %v2763
  %v2814 = vadd.f32 %v2637, %v2766
  %v2815 = vadd.f32 %v2638, %v2769
  %v2816 = vadd.f32 %v2639, %v2772
  %v2817 = vadd.f32 %v2640, %v2775
  %v2818 = vadd.f32 %v2641, %v2778
  %v2819 = vadd.f32 %v2642, %v2781
  %v2820 = vadd.f32 %v2643, %v2784
  %v2821 = vadd.f32 %v2644, %v2787
  %v2822 = vadd.f32 %v2645, %v2790
  %s2823 = scalar_lea.vmem %s1, 8
  %v2824 = vld [vmem:[%s2823] sm:$0xf]
  %v2825 = vld [vmem:[%s2823 + $0x8] sm:$0xf]
  %v2826 = vld [vmem:[%s2823 + $0x10] sm:$0xf]
  %v2827 = vld [vmem:[%s2823 + $0x18] sm:$0xf]
  %v2828 = vld [vmem:[%s2823 + $0x20] sm:$0xf]
  %v2829 = vld [vmem:[%s2823 + $0x28] sm:$0xf]
  %v2830 = vld [vmem:[%s2823 + $0x30] sm:$0xf]
  %v2831 = vld [vmem:[%s2823 + $0x38] sm:$0xf]
  %v2832 = vld [vmem:[%s2823 + $0x48] sm:$0xf]
  %v2833 = vld [vmem:[%s2823 + $0x50] sm:$0xf]
  %v2834 = vld [vmem:[%s2823 + $0x58] sm:$0xf]
  %v2835 = vld [vmem:[%s2823 + $0x60] sm:$0xf]
  %v2836 = vld [vmem:[%s2823 + $0x68] sm:$0xf]
  %v2837 = vld [vmem:[%s2823 + $0x70] sm:$0xf]
  %v2838 = vld [vmem:[%s2823 + $0x78] sm:$0xf]
  %v2839 = vld [vmem:[%s2823 + $0x80] sm:$0xf]
  %v2840 = vunpack.c.l.bf16 %v2824
  %v2841 = vunpack.c.l.bf16 %v2825
  %v2842 = vunpack.c.l.bf16 %v2826
  %v2843 = vunpack.c.l.bf16 %v2827
  %v2844 = vunpack.c.l.bf16 %v2828
  %v2845 = vunpack.c.l.bf16 %v2829
  %v2846 = vunpack.c.l.bf16 %v2830
  %v2847 = vunpack.c.l.bf16 %v2831
  %v2848 = vunpack.c.l.bf16 %v2832
  %v2849 = vunpack.c.l.bf16 %v2833
  %v2850 = vunpack.c.l.bf16 %v2834
  %v2851 = vunpack.c.l.bf16 %v2835
  %v2852 = vunpack.c.l.bf16 %v2836
  %v2853 = vunpack.c.l.bf16 %v2837
  %v2854 = vunpack.c.l.bf16 %v2838
  %v2855 = vunpack.c.l.bf16 %v2839
  %v2856 = vadd.f32 %v2807, %v2840
  %v2857 = vadd.f32 %v2808, %v2841
  %v2858 = vadd.f32 %v2809, %v2842
  %v2859 = vadd.f32 %v2810, %v2843
  %v2860 = vadd.f32 %v2811, %v2844
  %v2861 = vadd.f32 %v2812, %v2845
  %v2862 = vadd.f32 %v2813, %v2846
  %v2863 = vadd.f32 %v2814, %v2847
  %v2864 = vadd.f32 %v2815, %v2848
  %v2865 = vadd.f32 %v2816, %v2849
  %v2866 = vadd.f32 %v2817, %v2850
  %v2867 = vadd.f32 %v2818, %v2851
  %v2868 = vadd.f32 %v2819, %v2852
  %v2869 = vadd.f32 %v2820, %v2853
  %v2870 = vadd.f32 %v2821, %v2854
  %v2871 = vadd.f32 %v2822, %v2855
  %s2872 = scalar_lea.vmem %s0, 8
  %v2873 = vld [vmem:[%s2872] sm:$0xf]
  %v2874 = vld [vmem:[%s2872 + $0x4] sm:$0x1]
  %v2875 = vld [vmem:[%s2872 + $0x8] sm:$0xf]
  %v2876 = vld [vmem:[%s2872 + $0xc] sm:$0x1]
  %v2877 = vld [vmem:[%s2872 + $0x10] sm:$0xf]
  %v2878 = vld [vmem:[%s2872 + $0x14] sm:$0x1]
  %v2879 = vld [vmem:[%s2872 + $0x18] sm:$0xf]
  %v2880 = vld [vmem:[%s2872 + $0x1c] sm:$0x1]
  %v2881 = vld [vmem:[%s2872 + $0x20] sm:$0xf]
  %v2882 = vld [vmem:[%s2872 + $0x24] sm:$0x1]
  %v2883 = vld [vmem:[%s2872 + $0x28] sm:$0xf]
  %v2884 = vld [vmem:[%s2872 + $0x2c] sm:$0x1]
  %v2885 = vld [vmem:[%s2872 + $0x30] sm:$0xf]
  %v2886 = vld [vmem:[%s2872 + $0x34] sm:$0x1]
  %v2887 = vld [vmem:[%s2872 + $0x38] sm:$0xf]
  %v2888 = vld [vmem:[%s2872 + $0x3c] sm:$0x1]
  %v2889 = vld [vmem:[%s2872 + $0x48] sm:$0xf]
  %v2890 = vld [vmem:[%s2872 + $0x4c] sm:$0x1]
  %v2891 = vld [vmem:[%s2872 + $0x50] sm:$0xf]
  %v2892 = vld [vmem:[%s2872 + $0x54] sm:$0x1]
  %v2893 = vld [vmem:[%s2872 + $0x58] sm:$0xf]
  %v2894 = vld [vmem:[%s2872 + $0x5c] sm:$0x1]
  %v2895 = vld [vmem:[%s2872 + $0x60] sm:$0xf]
  %v2896 = vld [vmem:[%s2872 + $0x64] sm:$0x1]
  %v2897 = vld [vmem:[%s2872 + $0x68] sm:$0xf]
  %v2898 = vld [vmem:[%s2872 + $0x6c] sm:$0x1]
  %v2899 = vld [vmem:[%s2872 + $0x70] sm:$0xf]
  %v2900 = vld [vmem:[%s2872 + $0x74] sm:$0x1]
  %v2901 = vld [vmem:[%s2872 + $0x78] sm:$0xf]
  %v2902 = vld [vmem:[%s2872 + $0x7c] sm:$0x1]
  %v2903 = vld [vmem:[%s2872 + $0x80] sm:$0xf]
  %v2904 = vld [vmem:[%s2872 + $0x84] sm:$0x1]
  %v2905 = vunpack.c.l.bf16 %v2873
  %v2906 = vunpack.c.l.bf16 %v2874
  %v2907 = vunpack.c.l.bf16 %v2875
  %v2908 = vunpack.c.l.bf16 %v2876
  %v2909 = vunpack.c.l.bf16 %v2877
  %v2910 = vunpack.c.l.bf16 %v2878
  %v2911 = vunpack.c.l.bf16 %v2879
  %v2912 = vunpack.c.l.bf16 %v2880
  %v2913 = vunpack.c.l.bf16 %v2881
  %v2914 = vunpack.c.l.bf16 %v2882
  %v2915 = vunpack.c.l.bf16 %v2883
  %v2916 = vunpack.c.l.bf16 %v2884
  %v2917 = vunpack.c.l.bf16 %v2885
  %v2918 = vunpack.c.l.bf16 %v2886
  %v2919 = vunpack.c.l.bf16 %v2887
  %v2920 = vunpack.c.l.bf16 %v2888
  %v2921 = vunpack.c.l.bf16 %v2889
  %v2922 = vunpack.c.l.bf16 %v2890
  %v2923 = vunpack.c.l.bf16 %v2891
  %v2924 = vunpack.c.l.bf16 %v2892
  %v2925 = vunpack.c.l.bf16 %v2893
  %v2926 = vunpack.c.l.bf16 %v2894
  %v2927 = vunpack.c.l.bf16 %v2895
  %v2928 = vunpack.c.l.bf16 %v2896
  %v2929 = vunpack.c.l.bf16 %v2897
  %v2930 = vunpack.c.l.bf16 %v2898
  %v2931 = vunpack.c.l.bf16 %v2899
  %v2932 = vunpack.c.l.bf16 %v2900
  %v2933 = vunpack.c.l.bf16 %v2901
  %v2934 = vunpack.c.l.bf16 %v2902
  %v2935 = vunpack.c.l.bf16 %v2903
  %v2936 = vunpack.c.l.bf16 %v2904
  %v2969 = vrot.slane %v2905, 1
  %v2970 = vrot.slane %v2906, 1
  %v2971 = vsel %vm2742, %v2969, %v2970
  %v2972 = vrot.slane %v2907, 1
  %v2973 = vrot.slane %v2908, 1
  %v2974 = vsel %vm2742, %v2972, %v2973
  %v2975 = vrot.slane %v2909, 1
  %v2976 = vrot.slane %v2910, 1
  %v2977 = vsel %vm2742, %v2975, %v2976
  %v2978 = vrot.slane %v2911, 1
  %v2979 = vrot.slane %v2912, 1
  %v2980 = vsel %vm2742, %v2978, %v2979
  %v2981 = vrot.slane %v2913, 1
  %v2982 = vrot.slane %v2914, 1
  %v2983 = vsel %vm2742, %v2981, %v2982
  %v2984 = vrot.slane %v2915, 1
  %v2985 = vrot.slane %v2916, 1
  %v2986 = vsel %vm2742, %v2984, %v2985
  %v2987 = vrot.slane %v2917, 1
  %v2988 = vrot.slane %v2918, 1
  %v2989 = vsel %vm2742, %v2987, %v2988
  %v2990 = vrot.slane %v2919, 1
  %v2991 = vrot.slane %v2920, 1
  %v2992 = vsel %vm2742, %v2990, %v2991
  %v2993 = vrot.slane %v2921, 1
  %v2994 = vrot.slane %v2922, 1
  %v2995 = vsel %vm2742, %v2993, %v2994
  %v2996 = vrot.slane %v2923, 1
  %v2997 = vrot.slane %v2924, 1
  %v2998 = vsel %vm2742, %v2996, %v2997
  %v2999 = vrot.slane %v2925, 1
  %v3000 = vrot.slane %v2926, 1
  %v3001 = vsel %vm2742, %v2999, %v3000
  %v3002 = vrot.slane %v2927, 1
  %v3003 = vrot.slane %v2928, 1
  %v3004 = vsel %vm2742, %v3002, %v3003
  %v3005 = vrot.slane %v2929, 1
  %v3006 = vrot.slane %v2930, 1
  %v3007 = vsel %vm2742, %v3005, %v3006
  %v3008 = vrot.slane %v2931, 1
  %v3009 = vrot.slane %v2932, 1
  %v3010 = vsel %vm2742, %v3008, %v3009
  %v3011 = vrot.slane %v2933, 1
  %v3012 = vrot.slane %v2934, 1
  %v3013 = vsel %vm2742, %v3011, %v3012
  %v3014 = vrot.slane %v2935, 1
  %v3015 = vrot.slane %v2936, 1
  %v3016 = vsel %vm2742, %v3014, %v3015
  %v3033 = vadd.f32 %v2856, %v2971
  %v3034 = vadd.f32 %v2857, %v2974
  %v3035 = vadd.f32 %v2858, %v2977
  %v3036 = vadd.f32 %v2859, %v2980
  %v3037 = vadd.f32 %v2860, %v2983
  %v3038 = vadd.f32 %v2861, %v2986
  %v3039 = vadd.f32 %v2862, %v2989
  %v3040 = vadd.f32 %v2863, %v2992
  %v3041 = vadd.f32 %v2864, %v2995
  %v3042 = vadd.f32 %v2865, %v2998
  %v3043 = vadd.f32 %v2866, %v3001
  %v3044 = vadd.f32 %v2867, %v3004
  %v3045 = vadd.f32 %v2868, %v3007
  %v3046 = vadd.f32 %v2869, %v3010
  %v3047 = vadd.f32 %v2870, %v3013
  %v3048 = vadd.f32 %v2871, %v3016
  %v3049 = vmul.f32 %v3033, 0.25
  %v3050 = vmul.f32 %v3034, 0.25
  %v3051 = vmul.f32 %v3035, 0.25
  %v3052 = vmul.f32 %v3036, 0.25
  %v3053 = vmul.f32 %v3037, 0.25
  %v3054 = vmul.f32 %v3038, 0.25
  %v3055 = vmul.f32 %v3039, 0.25
  %v3056 = vmul.f32 %v3040, 0.25
  %v3057 = vmul.f32 %v3041, 0.25
  %v3058 = vmul.f32 %v3042, 0.25
  %v3059 = vmul.f32 %v3043, 0.25
  %v3060 = vmul.f32 %v3044, 0.25
  %v3061 = vmul.f32 %v3045, 0.25
  %v3062 = vmul.f32 %v3046, 0.25
  %v3063 = vmul.f32 %v3047, 0.25
  %v3064 = vmul.f32 %v3048, 0.25
  %v3065 = vpack.c.bf16 %v3049, %v3049
  %v3066 = vpack.c.bf16 %v3050, %v3050
  %v3067 = vpack.c.bf16 %v3051, %v3051
  %v3068 = vpack.c.bf16 %v3052, %v3052
  %v3069 = vpack.c.bf16 %v3053, %v3053
  %v3070 = vpack.c.bf16 %v3054, %v3054
  %v3071 = vpack.c.bf16 %v3055, %v3055
  %v3072 = vpack.c.bf16 %v3056, %v3056
  %v3073 = vpack.c.bf16 %v3057, %v3057
  %v3074 = vpack.c.bf16 %v3058, %v3058
  %v3075 = vpack.c.bf16 %v3059, %v3059
  %v3076 = vpack.c.bf16 %v3060, %v3060
  %v3077 = vpack.c.bf16 %v3061, %v3061
  %v3078 = vpack.c.bf16 %v3062, %v3062
  %v3079 = vpack.c.bf16 %v3063, %v3063
  %v3080 = vpack.c.bf16 %v3064, %v3064
  %3081 = vst [vmem:[%s7] sm:$0xf] %v3065
  %3082 = vst [vmem:[%s7 + $0x4] sm:$0xf] %v3066
  %3083 = vst [vmem:[%s7 + $0x8] sm:$0xf] %v3067
  %3084 = vst [vmem:[%s7 + $0xc] sm:$0xf] %v3068
  %3085 = vst [vmem:[%s7 + $0x10] sm:$0xf] %v3069
  %3086 = vst [vmem:[%s7 + $0x14] sm:$0xf] %v3070
  %3087 = vst [vmem:[%s7 + $0x18] sm:$0xf] %v3071
  %3088 = vst [vmem:[%s7 + $0x1c] sm:$0xf] %v3072
  %3089 = vst [vmem:[%s7 + $0x20] sm:$0xf] %v3073
  %3090 = vst [vmem:[%s7 + $0x24] sm:$0xf] %v3074
  %3091 = vst [vmem:[%s7 + $0x28] sm:$0xf] %v3075
  %3092 = vst [vmem:[%s7 + $0x2c] sm:$0xf] %v3076
  %3093 = vst [vmem:[%s7 + $0x30] sm:$0xf] %v3077
  %3094 = vst [vmem:[%s7 + $0x34] sm:$0xf] %v3078
  %3095 = vst [vmem:[%s7 + $0x38] sm:$0xf] %v3079
  %3096 = vst [vmem:[%s7 + $0x3c] sm:$0xf] %v3080
  // Predicated region
  $region22: #{basic_block_forward.3} parent=0 // pred_check
    _
  $region23: #{basic_block_forward.3} parent=0 // pred_check_branch
    %3098 = sbr.rel (0) target = $region25
  $region24: #{basic_block_forward.3} parent=0 // pred_region
    _
  $region25: #{basic_block_forward.3} parent=0 // pred_fallthru
    _
  // Predicated region
  $region26: #{basic_block_forward.3} parent=0 // pred_check
    _
  $region27: #{basic_block_forward.3} parent=0 // pred_check_branch
    %3100 = sbr.rel (0) target = $region29
  $region28: #{basic_block_forward.3} parent=0 // pred_region
    _
  $region29: #{basic_block_forward.3} parent=0 // pred_fallthru
    _
  // Predicated region
  $region30: #{basic_block_forward.3} parent=0 // pred_check
    _
  $region31: #{basic_block_forward.3} parent=0 // pred_check_branch
    %3102 = sbr.rel (0) target = $region33
  $region32: #{basic_block_forward.3} parent=0 // pred_region
    _
  $region33: #{basic_block_forward.3} parent=0 // pred_fallthru
    _
  // Predicated region
  $region34: #{basic_block_forward.3} parent=0 // pred_check
    _
  $region35: #{basic_block_forward.3} parent=0 // pred_check_branch
    %3104 = sbr.rel (0) target = $region37
  $region36: #{basic_block_forward.3} parent=0 // pred_region
    _
  $region37: #{basic_block_forward.3} parent=0 // pred_fallthru
    _
  // Predicated region
  $region38: #{basic_block_forward.3} parent=0 // pred_check
    _
  $region39: #{basic_block_forward.3} parent=0 // pred_check_branch
    %3106 = sbr.rel (0) target = $region41
  $region40: #{basic_block_forward.3} parent=0 // pred_region
    _
  $region41: #{basic_block_forward.3} parent=0 // pred_fallthru
    _
  // Predicated region
  $region42: #{basic_block_forward.3} parent=0 // pred_check
    _
  $region43: #{basic_block_forward.3} parent=0 // pred_check_branch
    %3108 = sbr.rel (0) target = $region45
  $region44: #{basic_block_forward.3} parent=0 // pred_region
    _
  $region45: #{basic_block_forward.3} parent=0 // pred_fallthru
    _

</llo_original>
